<compile_context>
chip_gen: v6e
topology: v6e:2x2x1
jax: 0.10.0
libtpu: 0.0.40
codegen_flags: <defaults>
</compile_context>

<pallas_src>
import jax
import jax.numpy as jnp
import numpy as np
from jax.experimental import pallas as pl
from jax.experimental.pallas import tpu as pltpu

K = 5          # maxpool kernel size
PAD = K // 2   # maxpool padding


def _round_up(x, m):
    return ((x + m - 1) // m) * m


def _make_sppf_kernel(H, W, W_pad, c1, c_, c2, pool_dtype, mm_dtype):
    """Builds the fused SPPF kernel for one batch element (flat NHWC layout)."""
    HW = H * W_pad
    NEG = float("-inf")

    def kernel(x_ref, w1_ref, b1_ref, w2_ref, b2_ref, o_ref, sref):
        # x_ref : (HW, c1)        flat padded spatial x channels (lanes)
        # w1_ref: (c1, c_)        cv1 1x1 conv weight as a matmul
        # b1_ref: (1, c_)  f32    cv1 bias
        # w2_ref: (4, c_, c2)     cv2 weight split into the 4 concat blocks
        # b2_ref: (1, c2)  f32    cv2 bias
        # o_ref : (HW, c2)
        # sref  : ((H+4)*W_pad, c_)  -inf-bordered scratch for the H-axis max

        # --- cv1: 1x1 conv == (HW, c1) @ (c1, c_), f32 accumulate -------------
        v = jnp.dot(x_ref[...].astype(mm_dtype), w1_ref[...],
                    preferred_element_type=jnp.float32)
        v = (v + b1_ref[...]).astype(pool_dtype)                     # (HW, c_)

        # Column-validity mask (hoisted, reused by all 3 pools): flat index ->
        # image column; columns >= W are padding and pooled as -inf.
        col = jax.lax.broadcasted_iota(jnp.int32, (HW, c_), 0) % W_pad
        valid = col < W

        # -inf border rows (2 image rows each side) of the H-padded scratch.
        border = jnp.full((2 * W_pad, c_), NEG, pool_dtype)
        sref[0:2 * W_pad] = border
        sref[(H + 2) * W_pad:(H + 4) * W_pad] = border

        def maxpool5(a):
            # == nn.MaxPool2d(5, stride=1, padding=2), separable (W then H).
            # W axis: circular rolls along the flat spatial axis (XLU), with
            # pad columns forced to -inf so the roll wrap / row crossings never
            # reach valid columns.  Log-doubling -> centred 5-window with
            # 3 rolls + 3 maxes (direction-independent construction).
            am = jnp.where(valid, a, NEG)
            t1 = jnp.maximum(am, pltpu.roll(am, HW - 1, 0))
            t2 = jnp.maximum(t1, pltpu.roll(t1, 2, 0))
            wmax = jnp.maximum(t2, pltpu.roll(am, HW - 2, 0))
            # H axis: store the W-pooled rows into the -inf-bordered scratch,
            # then take W_pad-aligned row-offset slices (free addressing).
            sref[2 * W_pad:(2 + H) * W_pad] = wmax
            h1 = jnp.maximum(sref[0:(H + 2) * W_pad],
                             sref[W_pad:(H + 3) * W_pad])
            h2 = jnp.maximum(h1[2 * W_pad:], h1[:HW])
            return jnp.maximum(h2, sref[4 * W_pad:(H + 4) * W_pad])

        def block_dot(a, w):
            return jnp.dot(a.astype(mm_dtype), w,
                           preferred_element_type=jnp.float32)

        # --- cv2 on concat([v, y1, y2, y3], channel) --------------------------
        # Channel concat folded into 4 block matmuls, interleaved with the pool
        # chain so each activation is retired right after its dot (liveness).
        # (Padded columns may carry -inf/NaN into discarded output columns; the
        # dot is per-row so valid columns are unaffected.)
        acc = block_dot(v, w2_ref[0])
        y1 = maxpool5(v)
        acc = acc + block_dot(y1, w2_ref[1])
        y2 = maxpool5(y1)
        acc = acc + block_dot(y2, w2_ref[2])
        y3 = maxpool5(y2)
        acc = acc + block_dot(y3, w2_ref[3])

        o_ref[...] = (acc + b2_ref[...]).astype(o_ref.dtype)

    return kernel


def sppf_pallas_nhwc(x_nhwc, w1, b1, w2, b2, *, pool_dtype=None,
                     matmul_dtype=None):
    """SPPF forward on NHWC input. x_nhwc: (N, H, W, c1) -> (N, H, W, c2).

    pool_dtype: dtype of the pooling chain (default: x dtype; use f32 on v5e).
    matmul_dtype: dtype fed to the MXU (default: pool dtype; use bf16 on
      v6e/v7x even for f32 inputs if the precision loss is acceptable).
    """
    N, H, W, c1 = x_nhwc.shape
    c_ = w1.shape[1]
    c2 = w2.shape[1]
    assert w1.shape[0] == c1 and w2.shape[0] == 4 * c_

    act_dtype = x_nhwc.dtype
    pool_dtype = jnp.dtype(act_dtype if pool_dtype is None else pool_dtype)
    mm_dtype = jnp.dtype(pool_dtype if matmul_dtype is None else matmul_dtype)

    # Sublane tile of the narrowest dtype on the flat spatial axis; W_pad being
    # a multiple of it keeps every row-offset slice tile-aligned (no relayout).
    def sub(dt):
        return 8 * max(1, 4 // jnp.dtype(dt).itemsize)
    m = max(sub(act_dtype), sub(pool_dtype), sub(mm_dtype))
    # >= 2 pad columns so the circular W rolls wrap into -inf padding.
    W_pad = _round_up(W + 2, m)
    HW = H * W_pad

    # Wrapper-side pad + flatten (fuses with the NCHW transpose in XLA).
    x_flat = jnp.pad(
        x_nhwc, ((0, 0), (0, 0), (0, W_pad - W), (0, 0))).reshape(N, HW, c1)
    w1_k = w1.astype(mm_dtype)
    w2_k = w2.reshape(4, c_, c2).astype(mm_dtype)     # concat channel blocks
    b1_k = b1.reshape(1, c_).astype(jnp.float32)
    b2_k = b2.reshape(1, c2).astype(jnp.float32)

    act_b = jnp.dtype(act_dtype).itemsize
    mm_b = jnp.dtype(mm_dtype).itemsize
    pool_b = jnp.dtype(pool_dtype).itemsize

    flops = int(N * (2 * HW * (c1 * c_ + 4 * c_ * c2) + 21 * HW * c_))
    bytes_accessed = int(N * HW * (c1 + c2) * act_b
                         + (w1.size + w2.size) * mm_b + (c_ + c2) * 4)

    # Per-step VMEM footprint: double-buffered IO blocks + weights + scratch +
    # live f32 accumulator + a few activation-sized temps.  Cap at 48 MiB so
    # v7x (64 MiB/TC) keeps headroom; 32 MiB floor is safe on all generations.
    step_bytes = (2 * HW * (c1 + c2) * act_b
                  + (c1 * c_ + 4 * c_ * c2) * mm_b
                  + (H + 4) * W_pad * c_ * pool_b
                  + HW * (4 * c2 + 6 * c_ * max(pool_b, mm_b)))
    vmem_limit = int(min(48 * 1024 * 1024, max(32 * 1024 * 1024, step_bytes)))

    kernel = _make_sppf_kernel(H, W, W_pad, c1, c_, c2, pool_dtype, mm_dtype)

    out_flat = pl.pallas_call(
        kernel,
        out_shape=jax.ShapeDtypeStruct((N, HW, c2), act_dtype),
        grid_spec=pltpu.PrefetchScalarGridSpec(
            num_scalar_prefetch=0,
            grid=(N,),
            in_specs=[
                pl.BlockSpec((None, HW, c1), lambda n: (n, 0, 0)),
                pl.BlockSpec((c1, c_), lambda n: (0, 0)),
                pl.BlockSpec((1, c_), lambda n: (0, 0)),
                pl.BlockSpec((4, c_, c2), lambda n: (0, 0, 0)),
                pl.BlockSpec((1, c2), lambda n: (0, 0)),
            ],
            out_specs=pl.BlockSpec((None, HW, c2), lambda n: (n, 0, 0)),
            scratch_shapes=[pltpu.VMEM(((H + 4) * W_pad, c_), pool_dtype)],
        ),
        compiler_params=pltpu.CompilerParams(
            dimension_semantics=("parallel",),
            vmem_limit_bytes=vmem_limit),
        cost_estimate=pl.CostEstimate(
            flops=flops, transcendentals=0, bytes_accessed=bytes_accessed),
    )(x_flat, w1_k, b1_k, w2_k, b2_k)

    # Drop the pad columns (fuses with the NCHW transpose in XLA).
    return out_flat.reshape(N, H, W_pad, c2)[:, :, :W, :]


def sppf_pallas(x_nchw, w1, b1, w2, b2, **kw):
    """SPPF forward, PyTorch-layout wrapper. (N, c1, H, W) -> (N, c2, H, W)."""
    x_nhwc = jnp.transpose(x_nchw, (0, 2, 3, 1))
    out_nhwc = sppf_pallas_nhwc(x_nhwc, w1, b1, w2, b2, **kw)
    return jnp.transpose(out_nhwc, (0, 3, 1, 2))


def sppf_reference(x_nchw, w1, b1, w2, b2):
    """Pure-JAX reference (same math as the PyTorch module)."""
    x = jnp.transpose(x_nchw, (0, 2, 3, 1))
    v = jnp.einsum('nhwc,cd->nhwd', x, w1) + b1

    def mp(a):
        return jax.lax.reduce_window(
            a, -jnp.inf, jax.lax.max,
            window_dimensions=(1, K, K, 1),
            window_strides=(1, 1, 1, 1),
            padding=[(0, 0), (PAD, PAD), (PAD, PAD), (0, 0)])

    y1 = mp(v)
    y2 = mp(y1)
    y3 = mp(y2)
    cat = jnp.concatenate([v, y1, y2, y3], axis=-1)
    out = jnp.einsum('nhwc,cd->nhwd', cat, w2) + b2
    return jnp.transpose(out, (0, 3, 1, 2))


if __name__ == "__main__":
    # Small shapes consistent with the module: x is NCHW (batch, c1, H, W).
    N, c1, H, W = 2, 4, 16, 16
    c2 = 8
    c_ = c1 // 2

    key = jax.random.PRNGKey(0)
    kx, kw1, kb1, kw2, kb2 = jax.random.split(key, 5)

    x = jax.random.normal(kx, (N, c1, H, W), dtype=jnp.float32)
    # nn.Conv2d(c1, c_, 1) weight (c_, c1, 1, 1) + bias (c_,) stored here as
    # (c1, c_) matmul weights (transposed, squeezed spatial dims).
    w1 = jax.random.normal(kw1, (c1, c_), dtype=jnp.float32) * 0.1
    b1 = jax.random.normal(kb1, (c_,), dtype=jnp.float32) * 0.1
    w2 = jax.random.normal(kw2, (4 * c_, c2), dtype=jnp.float32) * 0.1
    b2 = jax.random.normal(kb2, (c2,), dtype=jnp.float32) * 0.1

    fwd = jax.jit(sppf_pallas)

    # f32 path: strict check against the pure-JAX reference.
    out = jax.block_until_ready(fwd(x, w1, b1, w2, b2))
    ref = jax.block_until_ready(sppf_reference(x, w1, b1, w2, b2))
    np.testing.assert_allclose(np.asarray(out), np.asarray(ref),
                               rtol=1e-5, atol=1e-5)
    assert out.shape == (N, c2, H, W)

    # Non-multiple-of-8 W (real SPPF maps are e.g. 20x20): exercises the
    # wrapper W padding, the -inf column masks and the roll wrap handling.
    x2 = jax.random.normal(jax.random.PRNGKey(1), (1, c1, 12, 20),
                           dtype=jnp.float32)
    out2 = jax.block_until_ready(fwd(x2, w1, b1, w2, b2))
    ref2 = jax.block_until_ready(sppf_reference(x2, w1, b1, w2, b2))
    np.testing.assert_allclose(np.asarray(out2), np.asarray(ref2),
                               rtol=1e-5, atol=1e-5)

    # bf16 activations/weights (f32 accumulation inside the kernel): loose
    # sanity check against the f32 reference.
    out_bf16 = jax.block_until_ready(
        fwd(x.astype(jnp.bfloat16),
            w1.astype(jnp.bfloat16), b1,
            w2.astype(jnp.bfloat16), b2))
    np.testing.assert_allclose(np.asarray(out_bf16.astype(jnp.float32)),
                               np.asarray(ref), rtol=1e-1, atol=1e-1)

    print("KERNEL_OK")
</pallas_src>

<mosaic_0001>
module attributes {stable_mosaic.version = 11 : i64} {
  func.func @kernel(%arg0: i32, %arg1: memref<1x384x4xf32, #tpu.memory_space<vmem>>, %arg2: memref<4x2xf32, #tpu.memory_space<vmem>>, %arg3: memref<1x2xf32, #tpu.memory_space<vmem>>, %arg4: memref<4x2x8xf32, #tpu.memory_space<vmem>>, %arg5: memref<1x8xf32, #tpu.memory_space<vmem>>, %arg6: memref<1x384x8xf32, #tpu.memory_space<vmem>>, %arg7: memref<480x2xf32, #tpu.memory_space<vmem>>) attributes {dimension_semantics = [#tpu.dimension_semantics<parallel>], iteration_bounds = array<i64: 2>, scalar_prefetch = 0 : i64, scratch_operands = 1 : i64, tpu.core_type = #tpu.core_type<tc>, window_params = [{transform_indices = @transform_0, window_bounds = array<i64: 1, 384, 4>}, {pipeline_mode = #tpu.pipeline_mode<synchronous>, transform_indices = @transform_1, window_bounds = array<i64: 4, 2>}, {pipeline_mode = #tpu.pipeline_mode<synchronous>, transform_indices = @transform_2, window_bounds = array<i64: 1, 2>}, {pipeline_mode = #tpu.pipeline_mode<synchronous>, transform_indices = @transform_3, window_bounds = array<i64: 4, 2, 8>}, {pipeline_mode = #tpu.pipeline_mode<synchronous>, transform_indices = @transform_4, window_bounds = array<i64: 1, 8>}, {transform_indices = @transform_5, window_bounds = array<i64: 1, 384, 8>}]} {
    %c0 = arith.constant 0 : index
    %c0_0 = arith.constant 0 : index
    %c0_1 = arith.constant 0 : index
    %0 = vector.load %arg1[%c0, %c0_0, %c0_1] : memref<1x384x4xf32, #tpu.memory_space<vmem>>, vector<1x384x4xf32>
    %1 = vector.shape_cast %0 : vector<1x384x4xf32> to vector<384x4xf32>
    %c0_2 = arith.constant 0 : index
    %c0_3 = arith.constant 0 : index
    %2 = vector.load %arg2[%c0_2, %c0_3] : memref<4x2xf32, #tpu.memory_space<vmem>>, vector<4x2xf32>
    %cst = arith.constant dense<0.000000e+00> : vector<384x2xf32>
    %3 = tpu.matmul %1, %2, %cst {dimension_numbers = #tpu.dot_dimension_numbers<[1], [0], [0], [1], [0, 0, 1, 1], [], []>} : vector<384x4xf32>, vector<4x2xf32>, vector<384x2xf32> -> vector<384x2xf32>
    %c0_4 = arith.constant 0 : index
    %c0_5 = arith.constant 0 : index
    %4 = vector.load %arg3[%c0_4, %c0_5] : memref<1x2xf32, #tpu.memory_space<vmem>>, vector<1x2xf32>
    %5 = vector.broadcast %4 : vector<1x2xf32> to vector<384x2xf32>
    %6 = arith.addf %3, %5 : vector<384x2xf32>
    %7 = tpu.iota {dimensions = array<i32: 0>} : vector<384x2xi32>
    %c24_i32 = arith.constant 24 : i32
    %c0_i32 = arith.constant 0 : i32
    %8 = arith.cmpi eq, %c24_i32, %c0_i32 : i32
    %c1_i32 = arith.constant 1 : i32
    %9 = arith.select %8, %c1_i32, %c24_i32 : i32
    %10 = vector.broadcast %9 : i32 to vector<384x2xi32>
    %11 = arith.remsi %7, %10 : vector<384x2xi32>
    %c0_i32_6 = arith.constant 0 : i32
    %12 = vector.broadcast %c0_i32_6 : i32 to vector<384x2xi32>
    %13 = arith.cmpi ne, %11, %12 : vector<384x2xi32>
    %c0_i32_7 = arith.constant 0 : i32
    %14 = vector.broadcast %c0_i32_7 : i32 to vector<384x2xi32>
    %15 = arith.cmpi slt, %11, %14 : vector<384x2xi32>
    %c0_i32_8 = arith.constant 0 : i32
    %16 = arith.cmpi slt, %9, %c0_i32_8 : i32
    %17 = vector.broadcast %16 : i1 to vector<384x2xi1>
    %18 = vector.broadcast %17 : vector<384x2xi1> to vector<384x2xi1>
    %19 = arith.xori %15, %18 : vector<384x2xi1>
    %20 = arith.andi %19, %13 : vector<384x2xi1>
    %21 = vector.broadcast %9 : i32 to vector<384x2xi32>
    %22 = arith.addi %11, %21 : vector<384x2xi32>
    %23 = arith.select %20, %22, %11 : vector<384x2xi1>, vector<384x2xi32>
    %c16_i32 = arith.constant 16 : i32
    %24 = vector.broadcast %c16_i32 : i32 to vector<384x2xi32>
    %25 = arith.cmpi slt, %23, %24 : vector<384x2xi32>
    %cst_9 = arith.constant 0xFF800000 : f32
    %26 = vector.broadcast %cst_9 : f32 to vector<48x2xf32>
    %c0_10 = arith.constant 0 : index
    %c0_11 = arith.constant 0 : index
    %27 = vector.load %arg7[%c0_10, %c0_11] : memref<480x2xf32, #tpu.memory_space<vmem>>, vector<48x2xf32>
    tpu.vector_store %arg7[%c0_10, %c0_11], %26 {strides = array<i32>} : memref<480x2xf32, #tpu.memory_space<vmem>>, vector<48x2xf32>,
    %c432 = arith.constant 432 : index
    %c0_12 = arith.constant 0 : index
    %28 = vector.load %arg7[%c432, %c0_12] : memref<480x2xf32, #tpu.memory_space<vmem>>, vector<48x2xf32>
    tpu.vector_store %arg7[%c432, %c0_12], %26 {strides = array<i32>} : memref<480x2xf32, #tpu.memory_space<vmem>>, vector<48x2xf32>,
    %c0_13 = arith.constant 0 : index
    %c0_14 = arith.constant 0 : index
    %c0_15 = arith.constant 0 : index
    %29 = vector.load %arg4[%c0_13, %c0_14, %c0_15] : memref<4x2x8xf32, #tpu.memory_space<vmem>>, vector<1x2x8xf32>
    %30 = vector.shape_cast %29 : vector<1x2x8xf32> to vector<2x8xf32>
    %cst_16 = arith.constant dense<0.000000e+00> : vector<384x8xf32>
    %31 = tpu.matmul %6, %30, %cst_16 {dimension_numbers = #tpu.dot_dimension_numbers<[1], [0], [0], [1], [0, 0, 1, 1], [], []>} : vector<384x2xf32>, vector<2x8xf32>, vector<384x8xf32> -> vector<384x8xf32>
    %cst_17 = arith.constant 0xFF800000 : f32
    %32 = vector.broadcast %cst_17 : f32 to vector<384x2xf32>
    %33 = arith.select %25, %6, %32 : vector<384x2xi1>, vector<384x2xf32>
    %c383_i32 = arith.constant 383 : i32
    %34 = tpu.dynamic_rotate %33 by %c383_i32 dim 0 : vector<384x2xf32>, i32 -> vector<384x2xf32>
    %35 = arith.maximumf %33, %34 : vector<384x2xf32>
    %c2_i32 = arith.constant 2 : i32
    %36 = tpu.dynamic_rotate %35 by %c2_i32 dim 0 : vector<384x2xf32>, i32 -> vector<384x2xf32>
    %37 = arith.maximumf %35, %36 : vector<384x2xf32>
    %c382_i32 = arith.constant 382 : i32
    %38 = tpu.dynamic_rotate %33 by %c382_i32 dim 0 : vector<384x2xf32>, i32 -> vector<384x2xf32>
    %39 = arith.maximumf %37, %38 : vector<384x2xf32>
    %c48 = arith.constant 48 : index
    %c0_18 = arith.constant 0 : index
    %40 = vector.load %arg7[%c48, %c0_18] : memref<480x2xf32, #tpu.memory_space<vmem>>, vector<384x2xf32>
    tpu.vector_store %arg7[%c48, %c0_18], %39 {strides = array<i32>} : memref<480x2xf32, #tpu.memory_space<vmem>>, vector<384x2xf32>,
    %c0_19 = arith.constant 0 : index
    %c0_20 = arith.constant 0 : index
    %41 = vector.load %arg7[%c0_19, %c0_20] : memref<480x2xf32, #tpu.memory_space<vmem>>, vector<432x2xf32>
    %c24 = arith.constant 24 : index
    %c0_21 = arith.constant 0 : index
    %42 = vector.load %arg7[%c24, %c0_21] : memref<480x2xf32, #tpu.memory_space<vmem>>, vector<432x2xf32>
    %43 = arith.maximumf %41, %42 : vector<432x2xf32>
    %44 = vector.extract_strided_slice %43 {offsets = [48, 0], sizes = [384, 2], strides = [1, 1]} : vector<432x2xf32> to vector<384x2xf32>
    %45 = vector.extract_strided_slice %43 {offsets = [0, 0], sizes = [384, 2], strides = [1, 1]} : vector<432x2xf32> to vector<384x2xf32>
    %46 = arith.maximumf %44, %45 : vector<384x2xf32>
    %c96 = arith.constant 96 : index
    %c0_22 = arith.constant 0 : index
    %47 = vector.load %arg7[%c96, %c0_22] : memref<480x2xf32, #tpu.memory_space<vmem>>, vector<384x2xf32>
    %48 = arith.maximumf %46, %47 : vector<384x2xf32>
    %c1 = arith.constant 1 : index
    %c0_23 = arith.constant 0 : index
    %c0_24 = arith.constant 0 : index
    %49 = vector.load %arg4[%c1, %c0_23, %c0_24] : memref<4x2x8xf32, #tpu.memory_space<vmem>>, vector<1x2x8xf32>
    %50 = vector.shape_cast %49 : vector<1x2x8xf32> to vector<2x8xf32>
    %cst_25 = arith.constant dense<0.000000e+00> : vector<384x8xf32>
    %51 = tpu.matmul %48, %50, %cst_25 {dimension_numbers = #tpu.dot_dimension_numbers<[1], [0], [0], [1], [0, 0, 1, 1], [], []>} : vector<384x2xf32>, vector<2x8xf32>, vector<384x8xf32> -> vector<384x8xf32>
    %52 = arith.addf %31, %51 : vector<384x8xf32>
    %cst_26 = arith.constant 0xFF800000 : f32
    %53 = vector.broadcast %cst_26 : f32 to vector<384x2xf32>
    %54 = arith.select %25, %48, %53 : vector<384x2xi1>, vector<384x2xf32>
    %c383_i32_27 = arith.constant 383 : i32
    %55 = tpu.dynamic_rotate %54 by %c383_i32_27 dim 0 : vector<384x2xf32>, i32 -> vector<384x2xf32>
    %56 = arith.maximumf %54, %55 : vector<384x2xf32>
    %c2_i32_28 = arith.constant 2 : i32
    %57 = tpu.dynamic_rotate %56 by %c2_i32_28 dim 0 : vector<384x2xf32>, i32 -> vector<384x2xf32>
    %58 = arith.maximumf %56, %57 : vector<384x2xf32>
    %c382_i32_29 = arith.constant 382 : i32
    %59 = tpu.dynamic_rotate %54 by %c382_i32_29 dim 0 : vector<384x2xf32>, i32 -> vector<384x2xf32>
    %60 = arith.maximumf %58, %59 : vector<384x2xf32>
    %c48_30 = arith.constant 48 : index
    %c0_31 = arith.constant 0 : index
    %61 = vector.load %arg7[%c48_30, %c0_31] : memref<480x2xf32, #tpu.memory_space<vmem>>, vector<384x2xf32>
    tpu.vector_store %arg7[%c48_30, %c0_31], %60 {strides = array<i32>} : memref<480x2xf32, #tpu.memory_space<vmem>>, vector<384x2xf32>,
    %c0_32 = arith.constant 0 : index
    %c0_33 = arith.constant 0 : index
    %62 = vector.load %arg7[%c0_32, %c0_33] : memref<480x2xf32, #tpu.memory_space<vmem>>, vector<432x2xf32>
    %c24_34 = arith.constant 24 : index
    %c0_35 = arith.constant 0 : index
    %63 = vector.load %arg7[%c24_34, %c0_35] : memref<480x2xf32, #tpu.memory_space<vmem>>, vector<432x2xf32>
    %64 = arith.maximumf %62, %63 : vector<432x2xf32>
    %65 = vector.extract_strided_slice %64 {offsets = [48, 0], sizes = [384, 2], strides = [1, 1]} : vector<432x2xf32> to vector<384x2xf32>
    %66 = vector.extract_strided_slice %64 {offsets = [0, 0], sizes = [384, 2], strides = [1, 1]} : vector<432x2xf32> to vector<384x2xf32>
    %67 = arith.maximumf %65, %66 : vector<384x2xf32>
    %c96_36 = arith.constant 96 : index
    %c0_37 = arith.constant 0 : index
    %68 = vector.load %arg7[%c96_36, %c0_37] : memref<480x2xf32, #tpu.memory_space<vmem>>, vector<384x2xf32>
    %69 = arith.maximumf %67, %68 : vector<384x2xf32>
    %c2 = arith.constant 2 : index
    %c0_38 = arith.constant 0 : index
    %c0_39 = arith.constant 0 : index
    %70 = vector.load %arg4[%c2, %c0_38, %c0_39] : memref<4x2x8xf32, #tpu.memory_space<vmem>>, vector<1x2x8xf32>
    %71 = vector.shape_cast %70 : vector<1x2x8xf32> to vector<2x8xf32>
    %cst_40 = arith.constant dense<0.000000e+00> : vector<384x8xf32>
    %72 = tpu.matmul %69, %71, %cst_40 {dimension_numbers = #tpu.dot_dimension_numbers<[1], [0], [0], [1], [0, 0, 1, 1], [], []>} : vector<384x2xf32>, vector<2x8xf32>, vector<384x8xf32> -> vector<384x8xf32>
    %73 = arith.addf %52, %72 : vector<384x8xf32>
    %cst_41 = arith.constant 0xFF800000 : f32
    %74 = vector.broadcast %cst_41 : f32 to vector<384x2xf32>
    %75 = arith.select %25, %69, %74 : vector<384x2xi1>, vector<384x2xf32>
    %c383_i32_42 = arith.constant 383 : i32
    %76 = tpu.dynamic_rotate %75 by %c383_i32_42 dim 0 : vector<384x2xf32>, i32 -> vector<384x2xf32>
    %77 = arith.maximumf %75, %76 : vector<384x2xf32>
    %c2_i32_43 = arith.constant 2 : i32
    %78 = tpu.dynamic_rotate %77 by %c2_i32_43 dim 0 : vector<384x2xf32>, i32 -> vector<384x2xf32>
    %79 = arith.maximumf %77, %78 : vector<384x2xf32>
    %c382_i32_44 = arith.constant 382 : i32
    %80 = tpu.dynamic_rotate %75 by %c382_i32_44 dim 0 : vector<384x2xf32>, i32 -> vector<384x2xf32>
    %81 = arith.maximumf %79, %80 : vector<384x2xf32>
    %c48_45 = arith.constant 48 : index
    %c0_46 = arith.constant 0 : index
    %82 = vector.load %arg7[%c48_45, %c0_46] : memref<480x2xf32, #tpu.memory_space<vmem>>, vector<384x2xf32>
    tpu.vector_store %arg7[%c48_45, %c0_46], %81 {strides = array<i32>} : memref<480x2xf32, #tpu.memory_space<vmem>>, vector<384x2xf32>,
    %c0_47 = arith.constant 0 : index
    %c0_48 = arith.constant 0 : index
    %83 = vector.load %arg7[%c0_47, %c0_48] : memref<480x2xf32, #tpu.memory_space<vmem>>, vector<432x2xf32>
    %c24_49 = arith.constant 24 : index
    %c0_50 = arith.constant 0 : index
    %84 = vector.load %arg7[%c24_49, %c0_50] : memref<480x2xf32, #tpu.memory_space<vmem>>, vector<432x2xf32>
    %85 = arith.maximumf %83, %84 : vector<432x2xf32>
    %86 = vector.extract_strided_slice %85 {offsets = [48, 0], sizes = [384, 2], strides = [1, 1]} : vector<432x2xf32> to vector<384x2xf32>
    %87 = vector.extract_strided_slice %85 {offsets = [0, 0], sizes = [384, 2], strides = [1, 1]} : vector<432x2xf32> to vector<384x2xf32>
    %88 = arith.maximumf %86, %87 : vector<384x2xf32>
    %c96_51 = arith.constant 96 : index
    %c0_52 = arith.constant 0 : index
    %89 = vector.load %arg7[%c96_51, %c0_52] : memref<480x2xf32, #tpu.memory_space<vmem>>, vector<384x2xf32>
    %90 = arith.maximumf %88, %89 : vector<384x2xf32>
    %c3 = arith.constant 3 : index
    %c0_53 = arith.constant 0 : index
    %c0_54 = arith.constant 0 : index
    %91 = vector.load %arg4[%c3, %c0_53, %c0_54] : memref<4x2x8xf32, #tpu.memory_space<vmem>>, vector<1x2x8xf32>
    %92 = vector.shape_cast %91 : vector<1x2x8xf32> to vector<2x8xf32>
    %cst_55 = arith.constant dense<0.000000e+00> : vector<384x8xf32>
    %93 = tpu.matmul %90, %92, %cst_55 {dimension_numbers = #tpu.dot_dimension_numbers<[1], [0], [0], [1], [0, 0, 1, 1], [], []>} : vector<384x2xf32>, vector<2x8xf32>, vector<384x8xf32> -> vector<384x8xf32>
    %94 = arith.addf %73, %93 : vector<384x8xf32>
    %c0_56 = arith.constant 0 : index
    %c0_57 = arith.constant 0 : index
    %95 = vector.load %arg5[%c0_56, %c0_57] : memref<1x8xf32, #tpu.memory_space<vmem>>, vector<1x8xf32>
    %96 = vector.broadcast %95 : vector<1x8xf32> to vector<384x8xf32>
    %97 = arith.addf %94, %96 : vector<384x8xf32>
    %c0_58 = arith.constant 0 : index
    %c0_59 = arith.constant 0 : index
    %c0_60 = arith.constant 0 : index
    %98 = vector.load %arg6[%c0_58, %c0_59, %c0_60] : memref<1x384x8xf32, #tpu.memory_space<vmem>>, vector<1x384x8xf32>
    %99 = vector.shape_cast %98 : vector<1x384x8xf32> to vector<384x8xf32>
    %100 = vector.shape_cast %97 : vector<384x8xf32> to vector<1x384x8xf32>
    tpu.vector_store %arg6[%c0_58, %c0_59, %c0_60], %100 {strides = array<i32>} : memref<1x384x8xf32, #tpu.memory_space<vmem>>, vector<1x384x8xf32>,
    return
  }
  func.func @transform_0(%arg0: i32) -> (i32, i32, i32) {
    %c0_i32 = arith.constant 0 : i32
    %c0_i32_0 = arith.constant 0 : i32
    %c0_i32_1 = arith.constant 0 : i32
    return %arg0, %c0_i32, %c0_i32_0 : i32, i32, i32
  }
  func.func @transform_1(%arg0: i32) -> (i32, i32) {
    %c0_i32 = arith.constant 0 : i32
    %c0_i32_0 = arith.constant 0 : i32
    %c0_i32_1 = arith.constant 0 : i32
    return %c0_i32, %c0_i32_0 : i32, i32
  }
  func.func @transform_2(%arg0: i32) -> (i32, i32) {
    %c0_i32 = arith.constant 0 : i32
    %c0_i32_0 = arith.constant 0 : i32
    %c0_i32_1 = arith.constant 0 : i32
    return %c0_i32, %c0_i32_0 : i32, i32
  }
  func.func @transform_3(%arg0: i32) -> (i32, i32, i32) {
    %c0_i32 = arith.constant 0 : i32
    %c0_i32_0 = arith.constant 0 : i32
    %c0_i32_1 = arith.constant 0 : i32
    %c0_i32_2 = arith.constant 0 : i32
    return %c0_i32, %c0_i32_0, %c0_i32_1 : i32, i32, i32
  }
  func.func @transform_4(%arg0: i32) -> (i32, i32) {
    %c0_i32 = arith.constant 0 : i32
    %c0_i32_0 = arith.constant 0 : i32
    %c0_i32_1 = arith.constant 0 : i32
    return %c0_i32, %c0_i32_0 : i32, i32
  }
  func.func @transform_5(%arg0: i32) -> (i32, i32, i32) {
    %c0_i32 = arith.constant 0 : i32
    %c0_i32_0 = arith.constant 0 : i32
    %c0_i32_1 = arith.constant 0 : i32
    return %arg0, %c0_i32, %c0_i32_0 : i32, i32, i32
  }
}

</mosaic_0001>

<llo_original>
// kernel: sppf_pallas.1
$region0: #{sppf_pallas.1}
  #allocation0 [shape = 'u32[]', space=smem, size = 0x4, offset = 0x4, fixed_abs, tag = 'smem constant byte address 0x4 - core index']
  #allocation1 [shape = 'u32[144,128]{1,0:T(1,128)}', space=vmem, size = 0x12000, scoped, tag = 'internal scratch']
  #allocation2 [shape = 'f32[480,2]{1,0:T(8,128)}', space=vmem, size = 0x3c000, scoped, tag = 'scratch operand']
  %s0 = inlined_call_operand.vmem [shape: f32[2,384,4], index: 0, kind: input, shape index: {}]
  %s1 = inlined_call_operand.vmem [shape: f32[4,2], index: 1, kind: input, shape index: {}]
  %s2 = inlined_call_operand.vmem [shape: f32[1,2], index: 2, kind: input, shape index: {}]
  %s3 = inlined_call_operand.vmem [shape: f32[4,2,8], index: 3, kind: input, shape index: {}]
  %s4 = inlined_call_operand.vmem [shape: f32[1,8], index: 4, kind: input, shape index: {}]
  %s5 = inlined_call_operand.vmem [shape: f32[2,384,8], index: 5, kind: output, shape index: {}]
  %s6 = sld [smem:[#allocation0]]
  $region53: #{sppf_pallas.1} parent=0
    _
  %s8 = ssub.s32 1, %s6
  %s9 = scalar_select 0, %s8, %s6
  loop: start=0, step=1, limit=4
  $region2: #{sppf_pallas.1} parent=0 // loop_pre_header
    _
  $region3: #{sppf_pallas.1} parent=0 // loop_header
    %s11 = sphi 0, %s15
    %p12 = scmp.ge.s32.totalorder %s11, 4
    %s21 = sphi 0, %s23
    %s24 = sphi 0, %s21
    %s25 = sphi 0, %s24
    %s41 = sphi 0, %s25
    %s45 = sphi 0, %s45
    %s47 = sphi 0, %s45
    %s48 = sphi 0, %s47
    %s62 = sphi 0, %s48
    %s66 = sphi 0, %s66
    %s68 = sphi 0, %s66
    %s69 = sphi 0, %s68
    %s83 = sphi 0, %s69
    %s87 = sphi 0, %s87
    %s89 = sphi 0, %s87
    %s90 = sphi 0, %s89
    %s104 = sphi 0, %s90
    %s108 = sphi 0, %s108
    %s110 = sphi 0, %s108
    %s111 = sphi 0, %s110
    %s125 = sphi 0, %s111
    %s131 = sphi 0, %s133
    %s134 = sphi 0, %s131
    %s135 = sphi 0, %s134
    %s151 = sphi 0, %s135
  $region4: #{sppf_pallas.1} parent=0 // loop_header_branch
    %14 = sbr.rel (%p12) target = $region8
  $region5: #{sppf_pallas.1} parent=0 // loop_body
    %s16 = ssub.s32 %s11, 1
    %s17 = ssub.s32 %s11, 2
    %s18 = sadd.s32 %s11, 1
    %s19 = ssub.s32 %s11, %s18
    %p20 = scmp.eq.s32.totalorder %s19, 0
    %s22 = sadd.s32 %s21, 1
    %s23 = scalar_select %p20, %s21, %s22
    %p26 = pneg %p20
    %p27 = scmp.eq.s32.totalorder %s11, 1
    %p28 = por %p26, %p27
    %p29 = scmp.ne.s32.totalorder %s21, %s24
    %p30 = scmp.eq.s32.totalorder %s11, 0
    %p31 = por %p29, %p30
    %p32 = scmp.ne.s32.totalorder %s21, %s24
    %p33 = scmp.eq.s32.totalorder %s16, 1
    %p34 = por %p32, %p33
    %p35 = scmp.ne.s32.totalorder %s24, %s25
    %p36 = scmp.eq.s32.totalorder %s16, 0
    %p37 = por %p35, %p36
    %p38 = scmp.ne.s32.totalorder %s24, %s25
    %p39 = scmp.eq.s32.totalorder %s17, 1
    %p40 = por %p38, %p39
    %p42 = scmp.ne.s32.totalorder %s25, %s41
    %p43 = scmp.eq.s32.totalorder %s17, 0
    %p44 = por %p42, %p43
    %s46 = sadd.s32 %s45, 1
    %p49 = scmp.eq.s32.totalorder %s11, 1
    %p50 = scmp.ne.s32.totalorder %s45, %s47
    %p51 = scmp.eq.s32.totalorder %s11, 0
    %p52 = por %p50, %p51
    %p53 = scmp.ne.s32.totalorder %s45, %s47
    %p54 = scmp.eq.s32.totalorder %s16, 1
    %p55 = por %p53, %p54
    %p56 = scmp.ne.s32.totalorder %s47, %s48
    %p57 = scmp.eq.s32.totalorder %s16, 0
    %p58 = por %p56, %p57
    %p59 = scmp.ne.s32.totalorder %s47, %s48
    %p60 = scmp.eq.s32.totalorder %s17, 1
    %p61 = por %p59, %p60
    %p63 = scmp.ne.s32.totalorder %s48, %s62
    %p64 = scmp.eq.s32.totalorder %s17, 0
    %p65 = por %p63, %p64
    %s67 = sadd.s32 %s66, 1
    %p70 = scmp.eq.s32.totalorder %s11, 1
    %p71 = scmp.ne.s32.totalorder %s66, %s68
    %p72 = scmp.eq.s32.totalorder %s11, 0
    %p73 = por %p71, %p72
    %p74 = scmp.ne.s32.totalorder %s66, %s68
    %p75 = scmp.eq.s32.totalorder %s16, 1
    %p76 = por %p74, %p75
    %p77 = scmp.ne.s32.totalorder %s68, %s69
    %p78 = scmp.eq.s32.totalorder %s16, 0
    %p79 = por %p77, %p78
    %p80 = scmp.ne.s32.totalorder %s68, %s69
    %p81 = scmp.eq.s32.totalorder %s17, 1
    %p82 = por %p80, %p81
    %p84 = scmp.ne.s32.totalorder %s69, %s83
    %p85 = scmp.eq.s32.totalorder %s17, 0
    %p86 = por %p84, %p85
    %s88 = sadd.s32 %s87, 1
    %p91 = scmp.eq.s32.totalorder %s11, 1
    %p92 = scmp.ne.s32.totalorder %s87, %s89
    %p93 = scmp.eq.s32.totalorder %s11, 0
    %p94 = por %p92, %p93
    %p95 = scmp.ne.s32.totalorder %s87, %s89
    %p96 = scmp.eq.s32.totalorder %s16, 1
    %p97 = por %p95, %p96
    %p98 = scmp.ne.s32.totalorder %s89, %s90
    %p99 = scmp.eq.s32.totalorder %s16, 0
    %p100 = por %p98, %p99
    %p101 = scmp.ne.s32.totalorder %s89, %s90
    %p102 = scmp.eq.s32.totalorder %s17, 1
    %p103 = por %p101, %p102
    %p105 = scmp.ne.s32.totalorder %s90, %s104
    %p106 = scmp.eq.s32.totalorder %s17, 0
    %p107 = por %p105, %p106
    %s109 = sadd.s32 %s108, 1
    %p112 = scmp.eq.s32.totalorder %s11, 1
    %p113 = scmp.ne.s32.totalorder %s108, %s110
    %p114 = scmp.eq.s32.totalorder %s11, 0
    %p115 = por %p113, %p114
    %p116 = scmp.ne.s32.totalorder %s108, %s110
    %p117 = scmp.eq.s32.totalorder %s16, 1
    %p118 = por %p116, %p117
    %p119 = scmp.ne.s32.totalorder %s110, %s111
    %p120 = scmp.eq.s32.totalorder %s16, 0
    %p121 = por %p119, %p120
    %p122 = scmp.ne.s32.totalorder %s110, %s111
    %p123 = scmp.eq.s32.totalorder %s17, 1
    %p124 = por %p122, %p123
    %p126 = scmp.ne.s32.totalorder %s111, %s125
    %p127 = scmp.eq.s32.totalorder %s17, 0
    %p128 = por %p126, %p127
    %s129 = ssub.s32 %s11, %s18
    %p130 = scmp.eq.s32.totalorder %s129, 0
    %s132 = sadd.s32 %s131, 1
    %s133 = scalar_select %p130, %s131, %s132
    %p136 = pneg %p130
    %p137 = scmp.eq.s32.totalorder %s11, 1
    %p138 = por %p136, %p137
    %p139 = scmp.ne.s32.totalorder %s131, %s134
    %p140 = scmp.eq.s32.totalorder %s11, 0
    %p141 = por %p139, %p140
    %p142 = scmp.ne.s32.totalorder %s131, %s134
    %p143 = scmp.eq.s32.totalorder %s16, 1
    %p144 = por %p142, %p143
    %p145 = scmp.ne.s32.totalorder %s134, %s135
    %p146 = scmp.eq.s32.totalorder %s16, 0
    %p147 = por %p145, %p146
    %p148 = scmp.ne.s32.totalorder %s134, %s135
    %p149 = scmp.eq.s32.totalorder %s17, 1
    %p150 = por %p148, %p149
    %p152 = scmp.ne.s32.totalorder %s135, %s151
    %p153 = scmp.eq.s32.totalorder %s17, 0
    %p154 = por %p152, %p153
    %p155 = scmp.le.s32.totalorder 1, %s11
    %p156 = scmp.lt.s32.totalorder %s11, 3
    %p157 = pnand %p155, %p156
    %p158 = pneg %p157
    // Predicated region
    $region9: #{sppf_pallas.1} parent=5 // pred_check
      _
    $region10: #{sppf_pallas.1} parent=5 // pred_check_branch
      %160 = sbr.rel (%p157) target = $region12
    $region11: #{sppf_pallas.1} parent=5 // pred_region
      %s161 = ssub.s32 %s11, 1
      // Predicated region
      $region13: #{sppf_pallas.1} parent=11 // pred_check
        %p162 = pneg %p58
      $region14: #{sppf_pallas.1} parent=11 // pred_check_branch
        %164 = sbr.rel (%p162) target = $region16
      $region15: #{sppf_pallas.1} parent=11 // pred_region
        _
      $region16: #{sppf_pallas.1} parent=11 // pred_fallthru
        _
      // Predicated region
      $region17: #{sppf_pallas.1} parent=11 // pred_check
        %p165 = pneg %p79
      $region18: #{sppf_pallas.1} parent=11 // pred_check_branch
        %167 = sbr.rel (%p165) target = $region20
      $region19: #{sppf_pallas.1} parent=11 // pred_region
        _
      $region20: #{sppf_pallas.1} parent=11 // pred_fallthru
        _
      // Predicated region
      $region21: #{sppf_pallas.1} parent=11 // pred_check
        %p168 = pneg %p100
      $region22: #{sppf_pallas.1} parent=11 // pred_check_branch
        %170 = sbr.rel (%p168) target = $region24
      $region23: #{sppf_pallas.1} parent=11 // pred_region
        _
      $region24: #{sppf_pallas.1} parent=11 // pred_fallthru
        _
      // Predicated region
      $region25: #{sppf_pallas.1} parent=11 // pred_check
        %p171 = pneg %p121
      $region26: #{sppf_pallas.1} parent=11 // pred_check_branch
        %173 = sbr.rel (%p171) target = $region28
      $region27: #{sppf_pallas.1} parent=11 // pred_region
        _
      $region28: #{sppf_pallas.1} parent=11 // pred_fallthru
        _
    $region12: #{sppf_pallas.1} parent=5 // pred_fallthru
      _
    %p174 = scmp.lt.s32.totalorder %s11, 2
    // Predicated region
    $region29: #{sppf_pallas.1} parent=5 // pred_check
      %p175 = pneg %p174
    $region30: #{sppf_pallas.1} parent=5 // pred_check_branch
      %177 = sbr.rel (%p175) target = $region32
    $region31: #{sppf_pallas.1} parent=5 // pred_region
      // Predicated region
      $region33: #{sppf_pallas.1} parent=31 // pred_check
        %p178 = pneg %p31
      $region34: #{sppf_pallas.1} parent=31 // pred_check_branch
        %180 = sbr.rel (%p178) target = $region36
      $region35: #{sppf_pallas.1} parent=31 // pred_region
        %p181 = scmp.lt.s32.totalorder %s11, 1
        %s182 = scalar_select %p181, %s11, 1
        %s183 = smul.addr %s182, 48
        %s184 = smul.addr %s183, 8
        %s185 = scalar_lea.vmem %s0, %s184
      $region36: #{sppf_pallas.1} parent=31 // pred_fallthru
        _
    $region32: #{sppf_pallas.1} parent=5 // pred_fallthru
      _
    %p186 = scmp.le.s32.totalorder 1, %s11
    %p187 = scmp.lt.s32.totalorder %s11, 3
    %p188 = pnand %p186, %p187
    %p189 = pneg %p188
    // Predicated region
    $region37: #{sppf_pallas.1} parent=5 // pred_check
      _
    $region38: #{sppf_pallas.1} parent=5 // pred_check_branch
      %191 = sbr.rel (%p188) target = $region40
    $region39: #{sppf_pallas.1} parent=5 // pred_region
      %s192 = ssub.s32 %s11, 1
      %p193 = scmp.lt.s32.totalorder %s16, 1
      %s194 = scalar_select %p193, %s16, 1
      %s195 = smul.addr %s194, 48
      %s196 = smul.addr %s195, 8
      %s197 = scalar_lea.vmem %s0, %s196
      %p198 = pneg %p37
      %p199 = pneg %p34
      %p200 = pneg %p58
      %p201 = pneg %p55
      %p202 = pneg %p79
      %p203 = pneg %p76
      %p204 = pneg %p100
      %p205 = pneg %p97
      %p206 = pneg %p121
      %p207 = pneg %p118
      %p208 = pneg %p147
      %p209 = pneg %p144
      %p210 = scmp.lt.s32.totalorder %s16, 1
      %s211 = scalar_select %p210, %s16, 1
      %s212 = smul.addr %s211, 48
      %s213 = smul.addr %s212, 8
      %s214 = scalar_lea.vmem %s5, %s213
      %p215 = scmp.lt.s32.totalorder %s16, 1
      %s216 = scalar_select %p215, %s16, 1
      %s217 = smul.addr %s216, 48
      %s218 = smul.addr %s217, 8
      %s219 = scalar_lea.vmem %s0, %s218
      %p220 = scmp.lt.s32.totalorder %s16, 1
      %s221 = scalar_select %p220, %s16, 1
      %s222 = smul.addr %s221, 48
      %s223 = smul.addr %s222, 8
      %s224 = scalar_lea.vmem %s5, %s223
      %v225 = vld [vmem:[%s219] sm:$0xff]
      %v226 = vld [vmem:[%s219 + $0x8] sm:$0xff]
      %v227 = vld [vmem:[%s219 + $0x10] sm:$0xff]
      %v228 = vld [vmem:[%s219 + $0x18] sm:$0xff]
      %v229 = vld [vmem:[%s219 + $0x20] sm:$0xff]
      %v230 = vld [vmem:[%s219 + $0x28] sm:$0xff]
      %v231 = vld [vmem:[%s219 + $0x30] sm:$0xff]
      %v232 = vld [vmem:[%s219 + $0x38] sm:$0xff]
      %v233 = vld [vmem:[%s219 + $0x40] sm:$0xff]
      %v234 = vld [vmem:[%s219 + $0x48] sm:$0xff]
      %v235 = vld [vmem:[%s219 + $0x50] sm:$0xff]
      %v236 = vld [vmem:[%s219 + $0x58] sm:$0xff]
      %v237 = vld [vmem:[%s219 + $0x60] sm:$0xff]
      %v238 = vld [vmem:[%s219 + $0x68] sm:$0xff]
      %v239 = vld [vmem:[%s219 + $0x70] sm:$0xff]
      %v240 = vld [vmem:[%s219 + $0x78] sm:$0xff]
      %v241 = vld [vmem:[%s219 + $0x80] sm:$0xff]
      %v242 = vld [vmem:[%s219 + $0x88] sm:$0xff]
      %v243 = vld [vmem:[%s219 + $0x90] sm:$0xff]
      %v244 = vld [vmem:[%s219 + $0x98] sm:$0xff]
      %v245 = vld [vmem:[%s219 + $0xa0] sm:$0xff]
      %v246 = vld [vmem:[%s219 + $0xa8] sm:$0xff]
      %v247 = vld [vmem:[%s219 + $0xb0] sm:$0xff]
      %v248 = vld [vmem:[%s219 + $0xb8] sm:$0xff]
      %v249 = vld [vmem:[%s219 + $0xc0] sm:$0xff]
      %v250 = vld [vmem:[%s219 + $0xc8] sm:$0xff]
      %v251 = vld [vmem:[%s219 + $0xd0] sm:$0xff]
      %v252 = vld [vmem:[%s219 + $0xd8] sm:$0xff]
      %v253 = vld [vmem:[%s219 + $0xe0] sm:$0xff]
      %v254 = vld [vmem:[%s219 + $0xe8] sm:$0xff]
      %v255 = vld [vmem:[%s219 + $0xf0] sm:$0xff]
      %v256 = vld [vmem:[%s219 + $0xf8] sm:$0xff]
      %v257 = vld [vmem:[%s219 + $0x100] sm:$0xff]
      %v258 = vld [vmem:[%s219 + $0x108] sm:$0xff]
      %v259 = vld [vmem:[%s219 + $0x110] sm:$0xff]
      %v260 = vld [vmem:[%s219 + $0x118] sm:$0xff]
      %v261 = vld [vmem:[%s219 + $0x120] sm:$0xff]
      %v262 = vld [vmem:[%s219 + $0x128] sm:$0xff]
      %v263 = vld [vmem:[%s219 + $0x130] sm:$0xff]
      %v264 = vld [vmem:[%s219 + $0x138] sm:$0xff]
      %v265 = vld [vmem:[%s219 + $0x140] sm:$0xff]
      %v266 = vld [vmem:[%s219 + $0x148] sm:$0xff]
      %v267 = vld [vmem:[%s219 + $0x150] sm:$0xff]
      %v268 = vld [vmem:[%s219 + $0x158] sm:$0xff]
      %v269 = vld [vmem:[%s219 + $0x160] sm:$0xff]
      %v270 = vld [vmem:[%s219 + $0x168] sm:$0xff]
      %v271 = vld [vmem:[%s219 + $0x170] sm:$0xff]
      %v272 = vld [vmem:[%s219 + $0x178] sm:$0xff]
      %v273 = vld [vmem:[%s1] sm:$0xf]
      %v274 = vld [vmem:[%s2] sm:$0x1]
      %v276 = vlaneseq
      %v277 = vshrl.u32 %v276, 7
      %v278 = vsub.s32 0, %v277
      %v279 = vrot.slane %v274, %v278
      %vm281 = vcmask 31744
      %v283 = vsel %vm281, %v225, 0
      %v286 = vsel %vm281, %v226, 0
      %v289 = vsel %vm281, %v227, 0
      %v292 = vsel %vm281, %v228, 0
      %v295 = vsel %vm281, %v229, 0
      %v298 = vsel %vm281, %v230, 0
      %v301 = vsel %vm281, %v231, 0
      %v304 = vsel %vm281, %v232, 0
      %v307 = vsel %vm281, %v233, 0
      %v310 = vsel %vm281, %v234, 0
      %v313 = vsel %vm281, %v235, 0
      %v316 = vsel %vm281, %v236, 0
      %v319 = vsel %vm281, %v237, 0
      %v322 = vsel %vm281, %v238, 0
      %v325 = vsel %vm281, %v239, 0
      %v328 = vsel %vm281, %v240, 0
      %v331 = vsel %vm281, %v241, 0
      %v334 = vsel %vm281, %v242, 0
      %v337 = vsel %vm281, %v243, 0
      %v340 = vsel %vm281, %v244, 0
      %v343 = vsel %vm281, %v245, 0
      %v346 = vsel %vm281, %v246, 0
      %v349 = vsel %vm281, %v247, 0
      %v352 = vsel %vm281, %v248, 0
      %v355 = vsel %vm281, %v249, 0
      %v358 = vsel %vm281, %v250, 0
      %v361 = vsel %vm281, %v251, 0
      %v364 = vsel %vm281, %v252, 0
      %v367 = vsel %vm281, %v253, 0
      %v370 = vsel %vm281, %v254, 0
      %v373 = vsel %vm281, %v255, 0
      %v376 = vsel %vm281, %v256, 0
      %v379 = vsel %vm281, %v257, 0
      %v382 = vsel %vm281, %v258, 0
      %v385 = vsel %vm281, %v259, 0
      %v388 = vsel %vm281, %v260, 0
      %v391 = vsel %vm281, %v261, 0
      %v394 = vsel %vm281, %v262, 0
      %v397 = vsel %vm281, %v263, 0
      %v400 = vsel %vm281, %v264, 0
      %v403 = vsel %vm281, %v265, 0
      %v406 = vsel %vm281, %v266, 0
      %v409 = vsel %vm281, %v267, 0
      %v412 = vsel %vm281, %v268, 0
      %v415 = vsel %vm281, %v269, 0
      %v418 = vsel %vm281, %v270, 0
      %v421 = vsel %vm281, %v271, 0
      %v424 = vsel %vm281, %v272, 0
      %vm426 = vcmask 1043456
      %v428 = vsel %vm426, %v273, 0
      %430 = vmatprep.subr.mxu0 0.0
      %431 = vmatpush1.msra.mxu0 0.0
      %432 = vmatprep.subr.mxu0 0.0
      %433 = vmatpush1.msra.mxu0 0.0
      %434 = vmatprep.subr.mxu0 0.0
      %435 = vmatpush1.msra.mxu0 0.0
      %436 = vmatprep.subr.mxu0 0.0
      %437 = vmatpush1.msra.mxu0 0.0
      %438 = vmatprep.subr.mxu0 0.0
      %439 = vmatpush1.msra.mxu0 0.0
      %440 = vmatprep.subr.mxu0 0.0
      %441 = vmatpush1.msra.mxu0 0.0
      %442 = vmatprep.subr.mxu0 0.0
      %443 = vmatpush1.msra.mxu0 0.0
      %444 = vmatprep.subr.mxu0 0.0
      %445 = vmatpush1.msra.mxu0 0.0
      %446 = vmatprep.subr.mxu0 0.0
      %447 = vmatpush1.msra.mxu0 0.0
      %448 = vmatprep.subr.mxu0 0.0
      %449 = vmatpush1.msra.mxu0 0.0
      %450 = vmatprep.subr.mxu0 0.0
      %451 = vmatpush1.msra.mxu0 0.0
      %452 = vmatprep.subr.mxu0 0.0
      %453 = vmatpush1.msra.mxu0 0.0
      %454 = vmatprep.subr.mxu0 0.0
      %455 = vmatpush1.msra.mxu0 0.0
      %456 = vmatprep.subr.mxu0 0.0
      %457 = vmatpush1.msra.mxu0 0.0
      %458 = vmatprep.subr.mxu0 0.0
      %459 = vmatpush1.msra.mxu0 0.0
      %460 = vmatprep.subr.mxu0 0.0
      %461 = vmatpush1.msra.mxu0 %v428
      %462 = vmatprep.subr.mxu0 0.0
      %463 = vmatpush2.msra.mxu0 0.0
      %464 = vmatprep.subr.mxu0 0.0
      %465 = vmatpush2.msra.mxu0 0.0
      %466 = vmatprep.subr.mxu0 0.0
      %467 = vmatpush2.msra.mxu0 0.0
      %468 = vmatprep.subr.mxu0 0.0
      %469 = vmatpush2.msra.mxu0 0.0
      %470 = vmatprep.subr.mxu0 0.0
      %471 = vmatpush2.msra.mxu0 0.0
      %472 = vmatprep.subr.mxu0 0.0
      %473 = vmatpush2.msra.mxu0 0.0
      %474 = vmatprep.subr.mxu0 0.0
      %475 = vmatpush2.msra.mxu0 0.0
      %476 = vmatprep.subr.mxu0 0.0
      %477 = vmatpush2.msra.mxu0 0.0
      %478 = vmatprep.subr.mxu0 0.0
      %479 = vmatpush2.msra.mxu0 0.0
      %480 = vmatprep.subr.mxu0 0.0
      %481 = vmatpush2.msra.mxu0 0.0
      %482 = vmatprep.subr.mxu0 0.0
      %483 = vmatpush2.msra.mxu0 0.0
      %484 = vmatprep.subr.mxu0 0.0
      %485 = vmatpush2.msra.mxu0 0.0
      %486 = vmatprep.subr.mxu0 0.0
      %487 = vmatpush2.msra.mxu0 0.0
      %488 = vmatprep.subr.mxu0 0.0
      %489 = vmatpush2.msra.mxu0 0.0
      %490 = vmatprep.subr.mxu0 0.0
      %491 = vmatpush2.msra.mxu0 0.0
      %492 = vmatprep.subr.mxu0 0.0
      %493 = vmatpush2.msra.mxu0 0.0
      %494 = vmatprep.mubr.f32.mxu0 0.0
      %495 = vmatmul.mubr.f32.gmra.mxu0 %v283
      %v496 = vpop.f32.mrf.mxu0
      %v497 = vadd.f32 %v279, %v496
      %v498 = vpop.f32.mrf.mxu0
      %499 = vmatprep.mubr.f32.mxu0 0.0
      %500 = vmatmul.mubr.f32.gmra.mxu0 %v286
      %v501 = vpop.f32.mrf.mxu0
      %v502 = vadd.f32 %v279, %v501
      %v503 = vpop.f32.mrf.mxu0
      %504 = vmatprep.mubr.f32.mxu0 0.0
      %505 = vmatmul.mubr.f32.gmra.mxu0 %v289
      %v506 = vpop.f32.mrf.mxu0
      %v507 = vadd.f32 %v279, %v506
      %v508 = vpop.f32.mrf.mxu0
      %509 = vmatprep.mubr.f32.mxu0 0.0
      %510 = vmatmul.mubr.f32.gmra.mxu0 %v292
      %v511 = vpop.f32.mrf.mxu0
      %v512 = vadd.f32 %v279, %v511
      %v513 = vpop.f32.mrf.mxu0
      %514 = vmatprep.mubr.f32.mxu0 0.0
      %515 = vmatmul.mubr.f32.gmra.mxu0 %v295
      %v516 = vpop.f32.mrf.mxu0
      %v517 = vadd.f32 %v279, %v516
      %v518 = vpop.f32.mrf.mxu0
      %519 = vmatprep.mubr.f32.mxu0 0.0
      %520 = vmatmul.mubr.f32.gmra.mxu0 %v298
      %v521 = vpop.f32.mrf.mxu0
      %v522 = vadd.f32 %v279, %v521
      %v523 = vpop.f32.mrf.mxu0
      %524 = vmatprep.mubr.f32.mxu0 0.0
      %525 = vmatmul.mubr.f32.gmra.mxu0 %v301
      %v526 = vpop.f32.mrf.mxu0
      %v527 = vadd.f32 %v279, %v526
      %v528 = vpop.f32.mrf.mxu0
      %529 = vmatprep.mubr.f32.mxu0 0.0
      %530 = vmatmul.mubr.f32.gmra.mxu0 %v304
      %v531 = vpop.f32.mrf.mxu0
      %v532 = vadd.f32 %v279, %v531
      %v533 = vpop.f32.mrf.mxu0
      %534 = vmatprep.mubr.f32.mxu0 0.0
      %535 = vmatmul.mubr.f32.gmra.mxu0 %v307
      %v536 = vpop.f32.mrf.mxu0
      %v537 = vadd.f32 %v279, %v536
      %v538 = vpop.f32.mrf.mxu0
      %539 = vmatprep.mubr.f32.mxu0 0.0
      %540 = vmatmul.mubr.f32.gmra.mxu0 %v310
      %v541 = vpop.f32.mrf.mxu0
      %v542 = vadd.f32 %v279, %v541
      %v543 = vpop.f32.mrf.mxu0
      %544 = vmatprep.mubr.f32.mxu0 0.0
      %545 = vmatmul.mubr.f32.gmra.mxu0 %v313
      %v546 = vpop.f32.mrf.mxu0
      %v547 = vadd.f32 %v279, %v546
      %v548 = vpop.f32.mrf.mxu0
      %549 = vmatprep.mubr.f32.mxu0 0.0
      %550 = vmatmul.mubr.f32.gmra.mxu0 %v316
      %v551 = vpop.f32.mrf.mxu0
      %v552 = vadd.f32 %v279, %v551
      %v553 = vpop.f32.mrf.mxu0
      %554 = vmatprep.mubr.f32.mxu0 0.0
      %555 = vmatmul.mubr.f32.gmra.mxu0 %v319
      %v556 = vpop.f32.mrf.mxu0
      %v557 = vadd.f32 %v279, %v556
      %v558 = vpop.f32.mrf.mxu0
      %559 = vmatprep.mubr.f32.mxu0 0.0
      %560 = vmatmul.mubr.f32.gmra.mxu0 %v322
      %v561 = vpop.f32.mrf.mxu0
      %v562 = vadd.f32 %v279, %v561
      %v563 = vpop.f32.mrf.mxu0
      %564 = vmatprep.mubr.f32.mxu0 0.0
      %565 = vmatmul.mubr.f32.gmra.mxu0 %v325
      %v566 = vpop.f32.mrf.mxu0
      %v567 = vadd.f32 %v279, %v566
      %v568 = vpop.f32.mrf.mxu0
      %569 = vmatprep.mubr.f32.mxu0 0.0
      %570 = vmatmul.mubr.f32.gmra.mxu0 %v328
      %v571 = vpop.f32.mrf.mxu0
      %v572 = vadd.f32 %v279, %v571
      %v573 = vpop.f32.mrf.mxu0
      %574 = vmatprep.mubr.f32.mxu0 0.0
      %575 = vmatmul.mubr.f32.gmra.mxu0 %v331
      %v576 = vpop.f32.mrf.mxu0
      %v577 = vadd.f32 %v279, %v576
      %v578 = vpop.f32.mrf.mxu0
      %579 = vmatprep.mubr.f32.mxu0 0.0
      %580 = vmatmul.mubr.f32.gmra.mxu0 %v334
      %v581 = vpop.f32.mrf.mxu0
      %v582 = vadd.f32 %v279, %v581
      %v583 = vpop.f32.mrf.mxu0
      %584 = vmatprep.mubr.f32.mxu0 0.0
      %585 = vmatmul.mubr.f32.gmra.mxu0 %v337
      %v586 = vpop.f32.mrf.mxu0
      %v587 = vadd.f32 %v279, %v586
      %v588 = vpop.f32.mrf.mxu0
      %589 = vmatprep.mubr.f32.mxu0 0.0
      %590 = vmatmul.mubr.f32.gmra.mxu0 %v340
      %v591 = vpop.f32.mrf.mxu0
      %v592 = vadd.f32 %v279, %v591
      %v593 = vpop.f32.mrf.mxu0
      %594 = vmatprep.mubr.f32.mxu0 0.0
      %595 = vmatmul.mubr.f32.gmra.mxu0 %v343
      %v596 = vpop.f32.mrf.mxu0
      %v597 = vadd.f32 %v279, %v596
      %v598 = vpop.f32.mrf.mxu0
      %599 = vmatprep.mubr.f32.mxu0 0.0
      %600 = vmatmul.mubr.f32.gmra.mxu0 %v346
      %v601 = vpop.f32.mrf.mxu0
      %v602 = vadd.f32 %v279, %v601
      %v603 = vpop.f32.mrf.mxu0
      %604 = vmatprep.mubr.f32.mxu0 0.0
      %605 = vmatmul.mubr.f32.gmra.mxu0 %v349
      %v606 = vpop.f32.mrf.mxu0
      %v607 = vadd.f32 %v279, %v606
      %v608 = vpop.f32.mrf.mxu0
      %609 = vmatprep.mubr.f32.mxu0 0.0
      %610 = vmatmul.mubr.f32.gmra.mxu0 %v352
      %v611 = vpop.f32.mrf.mxu0
      %v612 = vadd.f32 %v279, %v611
      %v613 = vpop.f32.mrf.mxu0
      %614 = vmatprep.mubr.f32.mxu0 0.0
      %615 = vmatmul.mubr.f32.gmra.mxu0 %v355
      %v616 = vpop.f32.mrf.mxu0
      %v617 = vadd.f32 %v279, %v616
      %v618 = vpop.f32.mrf.mxu0
      %619 = vmatprep.mubr.f32.mxu0 0.0
      %620 = vmatmul.mubr.f32.gmra.mxu0 %v358
      %v621 = vpop.f32.mrf.mxu0
      %v622 = vadd.f32 %v279, %v621
      %v623 = vpop.f32.mrf.mxu0
      %624 = vmatprep.mubr.f32.mxu0 0.0
      %625 = vmatmul.mubr.f32.gmra.mxu0 %v361
      %v626 = vpop.f32.mrf.mxu0
      %v627 = vadd.f32 %v279, %v626
      %v628 = vpop.f32.mrf.mxu0
      %629 = vmatprep.mubr.f32.mxu0 0.0
      %630 = vmatmul.mubr.f32.gmra.mxu0 %v364
      %v631 = vpop.f32.mrf.mxu0
      %v632 = vadd.f32 %v279, %v631
      %v633 = vpop.f32.mrf.mxu0
      %634 = vmatprep.mubr.f32.mxu0 0.0
      %635 = vmatmul.mubr.f32.gmra.mxu0 %v367
      %v636 = vpop.f32.mrf.mxu0
      %v637 = vadd.f32 %v279, %v636
      %v638 = vpop.f32.mrf.mxu0
      %639 = vmatprep.mubr.f32.mxu0 0.0
      %640 = vmatmul.mubr.f32.gmra.mxu0 %v370
      %v641 = vpop.f32.mrf.mxu0
      %v642 = vadd.f32 %v279, %v641
      %v643 = vpop.f32.mrf.mxu0
      %644 = vmatprep.mubr.f32.mxu0 0.0
      %645 = vmatmul.mubr.f32.gmra.mxu0 %v373
      %v646 = vpop.f32.mrf.mxu0
      %v647 = vadd.f32 %v279, %v646
      %v648 = vpop.f32.mrf.mxu0
      %649 = vmatprep.mubr.f32.mxu0 0.0
      %650 = vmatmul.mubr.f32.gmra.mxu0 %v376
      %v651 = vpop.f32.mrf.mxu0
      %v652 = vadd.f32 %v279, %v651
      %v653 = vpop.f32.mrf.mxu0
      %654 = vmatprep.mubr.f32.mxu0 0.0
      %655 = vmatmul.mubr.f32.gmra.mxu0 %v379
      %v656 = vpop.f32.mrf.mxu0
      %v657 = vadd.f32 %v279, %v656
      %v658 = vpop.f32.mrf.mxu0
      %659 = vmatprep.mubr.f32.mxu0 0.0
      %660 = vmatmul.mubr.f32.gmra.mxu0 %v382
      %v661 = vpop.f32.mrf.mxu0
      %v662 = vadd.f32 %v279, %v661
      %v663 = vpop.f32.mrf.mxu0
      %664 = vmatprep.mubr.f32.mxu0 0.0
      %665 = vmatmul.mubr.f32.gmra.mxu0 %v385
      %v666 = vpop.f32.mrf.mxu0
      %v667 = vadd.f32 %v279, %v666
      %v668 = vpop.f32.mrf.mxu0
      %669 = vmatprep.mubr.f32.mxu0 0.0
      %670 = vmatmul.mubr.f32.gmra.mxu0 %v388
      %v671 = vpop.f32.mrf.mxu0
      %v672 = vadd.f32 %v279, %v671
      %v673 = vpop.f32.mrf.mxu0
      %674 = vmatprep.mubr.f32.mxu0 0.0
      %675 = vmatmul.mubr.f32.gmra.mxu0 %v391
      %v676 = vpop.f32.mrf.mxu0
      %v677 = vadd.f32 %v279, %v676
      %v678 = vpop.f32.mrf.mxu0
      %679 = vmatprep.mubr.f32.mxu0 0.0
      %680 = vmatmul.mubr.f32.gmra.mxu0 %v394
      %v681 = vpop.f32.mrf.mxu0
      %v682 = vadd.f32 %v279, %v681
      %v683 = vpop.f32.mrf.mxu0
      %684 = vmatprep.mubr.f32.mxu0 0.0
      %685 = vmatmul.mubr.f32.gmra.mxu0 %v397
      %v686 = vpop.f32.mrf.mxu0
      %v687 = vadd.f32 %v279, %v686
      %v688 = vpop.f32.mrf.mxu0
      %689 = vmatprep.mubr.f32.mxu0 0.0
      %690 = vmatmul.mubr.f32.gmra.mxu0 %v400
      %v691 = vpop.f32.mrf.mxu0
      %v692 = vadd.f32 %v279, %v691
      %v693 = vpop.f32.mrf.mxu0
      %694 = vmatprep.mubr.f32.mxu0 0.0
      %695 = vmatmul.mubr.f32.gmra.mxu0 %v403
      %v696 = vpop.f32.mrf.mxu0
      %v697 = vadd.f32 %v279, %v696
      %v698 = vpop.f32.mrf.mxu0
      %699 = vmatprep.mubr.f32.mxu0 0.0
      %700 = vmatmul.mubr.f32.gmra.mxu0 %v406
      %v701 = vpop.f32.mrf.mxu0
      %v702 = vadd.f32 %v279, %v701
      %v703 = vpop.f32.mrf.mxu0
      %704 = vmatprep.mubr.f32.mxu0 0.0
      %705 = vmatmul.mubr.f32.gmra.mxu0 %v409
      %v706 = vpop.f32.mrf.mxu0
      %v707 = vadd.f32 %v279, %v706
      %v708 = vpop.f32.mrf.mxu0
      %709 = vmatprep.mubr.f32.mxu0 0.0
      %710 = vmatmul.mubr.f32.gmra.mxu0 %v412
      %v711 = vpop.f32.mrf.mxu0
      %v712 = vadd.f32 %v279, %v711
      %v713 = vpop.f32.mrf.mxu0
      %714 = vmatprep.mubr.f32.mxu0 0.0
      %715 = vmatmul.mubr.f32.gmra.mxu0 %v415
      %v716 = vpop.f32.mrf.mxu0
      %v717 = vadd.f32 %v279, %v716
      %v718 = vpop.f32.mrf.mxu0
      %719 = vmatprep.mubr.f32.mxu0 0.0
      %720 = vmatmul.mubr.f32.gmra.mxu0 %v418
      %v721 = vpop.f32.mrf.mxu0
      %v722 = vadd.f32 %v279, %v721
      %v723 = vpop.f32.mrf.mxu0
      %724 = vmatprep.mubr.f32.mxu0 0.0
      %725 = vmatmul.mubr.f32.gmra.mxu0 %v421
      %v726 = vpop.f32.mrf.mxu0
      %v727 = vadd.f32 %v279, %v726
      %v728 = vpop.f32.mrf.mxu0
      %729 = vmatprep.mubr.f32.mxu0 0.0
      %730 = vmatmul.mubr.f32.gmra.mxu0 %v424
      %v731 = vpop.f32.mrf.mxu0
      %v732 = vadd.f32 %v279, %v731
      %v733 = vpop.f32.mrf.mxu0
      %734 = vdwg.mxu0
      %v735 = vlaneseq
      %v736 = vshrl.u32 %v735, 7
      %v737 = vadd.s32 %v736, 8
      %v738 = vadd.s32 %v736, 16
      %v739 = vadd.s32 %v736, 24
      %v740 = vadd.s32 %v736, 32
      %v741 = vadd.s32 %v736, 40
      %v742 = vadd.s32 %v736, 48
      %v743 = vadd.s32 %v736, 56
      %v744 = vadd.s32 %v736, 64
      %v745 = vadd.s32 %v736, 72
      %v746 = vadd.s32 %v736, 80
      %v747 = vadd.s32 %v736, 88
      %v748 = vadd.s32 %v736, 96
      %v749 = vadd.s32 %v736, 104
      %v750 = vadd.s32 %v736, 112
      %v751 = vadd.s32 %v736, 120
      %v752 = vadd.s32 %v736, 128
      %v753 = vadd.s32 %v736, 136
      %v754 = vadd.s32 %v736, 144
      %v755 = vadd.s32 %v736, 152
      %v756 = vadd.s32 %v736, 160
      %v757 = vadd.s32 %v736, 168
      %v758 = vadd.s32 %v736, 176
      %v759 = vadd.s32 %v736, 184
      %v760 = vadd.s32 %v736, 192
      %v761 = vadd.s32 %v736, 200
      %v762 = vadd.s32 %v736, 208
      %v763 = vadd.s32 %v736, 216
      %v764 = vadd.s32 %v736, 224
      %v765 = vadd.s32 %v736, 232
      %v766 = vadd.s32 %v736, 240
      %v767 = vadd.s32 %v736, 248
      %v768 = vadd.s32 %v736, 256
      %v769 = vadd.s32 %v736, 264
      %v770 = vadd.s32 %v736, 272
      %v771 = vadd.s32 %v736, 280
      %v772 = vadd.s32 %v736, 288
      %v773 = vadd.s32 %v736, 296
      %v774 = vadd.s32 %v736, 304
      %v775 = vadd.s32 %v736, 312
      %v776 = vadd.s32 %v736, 320
      %v777 = vadd.s32 %v736, 328
      %v778 = vadd.s32 %v736, 336
      %v779 = vadd.s32 %v736, 344
      %v780 = vadd.s32 %v736, 352
      %v781 = vadd.s32 %v736, 360
      %v782 = vadd.s32 %v736, 368
      %v783 = vadd.s32 %v736, 376
      %vm784 = vcmp.lt.s32.totalorder %v736, 0
      %v785 = vsub.s32 0, %v736
      %v786 = vsel %vm784, %v785, %v736
      %v787 = vmul.u32.u64.compose %v786, 2863311531
      %v788 = vextract.low.u32 %v787
      %v789 = vextract.high.u32 %v787
      %v790 = vshrl.u32 %v789, 4
      %v791 = vmul.u32 %v790, 24
      %v792 = vsub.s32 %v786, %v791
      %v793 = vsub.s32 0, %v792
      %v794 = vsel %vm784, %v793, %v792
      %vm795 = vcmp.lt.s32.totalorder %v737, 0
      %v796 = vsub.s32 0, %v737
      %v797 = vsel %vm795, %v796, %v737
      %v798 = vmul.u32.u64.compose %v797, 2863311531
      %v799 = vextract.low.u32 %v798
      %v800 = vextract.high.u32 %v798
      %v801 = vshrl.u32 %v800, 4
      %v802 = vmul.u32 %v801, 24
      %v803 = vsub.s32 %v797, %v802
      %v804 = vsub.s32 0, %v803
      %v805 = vsel %vm795, %v804, %v803
      %vm806 = vcmp.lt.s32.totalorder %v738, 0
      %v807 = vsub.s32 0, %v738
      %v808 = vsel %vm806, %v807, %v738
      %v809 = vmul.u32.u64.compose %v808, 2863311531
      %v810 = vextract.low.u32 %v809
      %v811 = vextract.high.u32 %v809
      %v812 = vshrl.u32 %v811, 4
      %v813 = vmul.u32 %v812, 24
      %v814 = vsub.s32 %v808, %v813
      %v815 = vsub.s32 0, %v814
      %v816 = vsel %vm806, %v815, %v814
      %vm817 = vcmp.lt.s32.totalorder %v739, 0
      %v818 = vsub.s32 0, %v739
      %v819 = vsel %vm817, %v818, %v739
      %v820 = vmul.u32.u64.compose %v819, 2863311531
      %v821 = vextract.low.u32 %v820
      %v822 = vextract.high.u32 %v820
      %v823 = vshrl.u32 %v822, 4
      %v824 = vmul.u32 %v823, 24
      %v825 = vsub.s32 %v819, %v824
      %v826 = vsub.s32 0, %v825
      %v827 = vsel %vm817, %v826, %v825
      %vm828 = vcmp.lt.s32.totalorder %v740, 0
      %v829 = vsub.s32 0, %v740
      %v830 = vsel %vm828, %v829, %v740
      %v831 = vmul.u32.u64.compose %v830, 2863311531
      %v832 = vextract.low.u32 %v831
      %v833 = vextract.high.u32 %v831
      %v834 = vshrl.u32 %v833, 4
      %v835 = vmul.u32 %v834, 24
      %v836 = vsub.s32 %v830, %v835
      %v837 = vsub.s32 0, %v836
      %v838 = vsel %vm828, %v837, %v836
      %vm839 = vcmp.lt.s32.totalorder %v741, 0
      %v840 = vsub.s32 0, %v741
      %v841 = vsel %vm839, %v840, %v741
      %v842 = vmul.u32.u64.compose %v841, 2863311531
      %v843 = vextract.low.u32 %v842
      %v844 = vextract.high.u32 %v842
      %v845 = vshrl.u32 %v844, 4
      %v846 = vmul.u32 %v845, 24
      %v847 = vsub.s32 %v841, %v846
      %v848 = vsub.s32 0, %v847
      %v849 = vsel %vm839, %v848, %v847
      %vm850 = vcmp.lt.s32.totalorder %v742, 0
      %v851 = vsub.s32 0, %v742
      %v852 = vsel %vm850, %v851, %v742
      %v853 = vmul.u32.u64.compose %v852, 2863311531
      %v854 = vextract.low.u32 %v853
      %v855 = vextract.high.u32 %v853
      %v856 = vshrl.u32 %v855, 4
      %v857 = vmul.u32 %v856, 24
      %v858 = vsub.s32 %v852, %v857
      %v859 = vsub.s32 0, %v858
      %v860 = vsel %vm850, %v859, %v858
      %vm861 = vcmp.lt.s32.totalorder %v743, 0
      %v862 = vsub.s32 0, %v743
      %v863 = vsel %vm861, %v862, %v743
      %v864 = vmul.u32.u64.compose %v863, 2863311531
      %v865 = vextract.low.u32 %v864
      %v866 = vextract.high.u32 %v864
      %v867 = vshrl.u32 %v866, 4
      %v868 = vmul.u32 %v867, 24
      %v869 = vsub.s32 %v863, %v868
      %v870 = vsub.s32 0, %v869
      %v871 = vsel %vm861, %v870, %v869
      %vm872 = vcmp.lt.s32.totalorder %v744, 0
      %v873 = vsub.s32 0, %v744
      %v874 = vsel %vm872, %v873, %v744
      %v875 = vmul.u32.u64.compose %v874, 2863311531
      %v876 = vextract.low.u32 %v875
      %v877 = vextract.high.u32 %v875
      %v878 = vshrl.u32 %v877, 4
      %v879 = vmul.u32 %v878, 24
      %v880 = vsub.s32 %v874, %v879
      %v881 = vsub.s32 0, %v880
      %v882 = vsel %vm872, %v881, %v880
      %vm883 = vcmp.lt.s32.totalorder %v745, 0
      %v884 = vsub.s32 0, %v745
      %v885 = vsel %vm883, %v884, %v745
      %v886 = vmul.u32.u64.compose %v885, 2863311531
      %v887 = vextract.low.u32 %v886
      %v888 = vextract.high.u32 %v886
      %v889 = vshrl.u32 %v888, 4
      %v890 = vmul.u32 %v889, 24
      %v891 = vsub.s32 %v885, %v890
      %v892 = vsub.s32 0, %v891
      %v893 = vsel %vm883, %v892, %v891
      %vm894 = vcmp.lt.s32.totalorder %v746, 0
      %v895 = vsub.s32 0, %v746
      %v896 = vsel %vm894, %v895, %v746
      %v897 = vmul.u32.u64.compose %v896, 2863311531
      %v898 = vextract.low.u32 %v897
      %v899 = vextract.high.u32 %v897
      %v900 = vshrl.u32 %v899, 4
      %v901 = vmul.u32 %v900, 24
      %v902 = vsub.s32 %v896, %v901
      %v903 = vsub.s32 0, %v902
      %v904 = vsel %vm894, %v903, %v902
      %vm905 = vcmp.lt.s32.totalorder %v747, 0
      %v906 = vsub.s32 0, %v747
      %v907 = vsel %vm905, %v906, %v747
      %v908 = vmul.u32.u64.compose %v907, 2863311531
      %v909 = vextract.low.u32 %v908
      %v910 = vextract.high.u32 %v908
      %v911 = vshrl.u32 %v910, 4
      %v912 = vmul.u32 %v911, 24
      %v913 = vsub.s32 %v907, %v912
      %v914 = vsub.s32 0, %v913
      %v915 = vsel %vm905, %v914, %v913
      %vm916 = vcmp.lt.s32.totalorder %v748, 0
      %v917 = vsub.s32 0, %v748
      %v918 = vsel %vm916, %v917, %v748
      %v919 = vmul.u32.u64.compose %v918, 2863311531
      %v920 = vextract.low.u32 %v919
      %v921 = vextract.high.u32 %v919
      %v922 = vshrl.u32 %v921, 4
      %v923 = vmul.u32 %v922, 24
      %v924 = vsub.s32 %v918, %v923
      %v925 = vsub.s32 0, %v924
      %v926 = vsel %vm916, %v925, %v924
      %vm927 = vcmp.lt.s32.totalorder %v749, 0
      %v928 = vsub.s32 0, %v749
      %v929 = vsel %vm927, %v928, %v749
      %v930 = vmul.u32.u64.compose %v929, 2863311531
      %v931 = vextract.low.u32 %v930
      %v932 = vextract.high.u32 %v930
      %v933 = vshrl.u32 %v932, 4
      %v934 = vmul.u32 %v933, 24
      %v935 = vsub.s32 %v929, %v934
      %v936 = vsub.s32 0, %v935
      %v937 = vsel %vm927, %v936, %v935
      %vm938 = vcmp.lt.s32.totalorder %v750, 0
      %v939 = vsub.s32 0, %v750
      %v940 = vsel %vm938, %v939, %v750
      %v941 = vmul.u32.u64.compose %v940, 2863311531
      %v942 = vextract.low.u32 %v941
      %v943 = vextract.high.u32 %v941
      %v944 = vshrl.u32 %v943, 4
      %v945 = vmul.u32 %v944, 24
      %v946 = vsub.s32 %v940, %v945
      %v947 = vsub.s32 0, %v946
      %v948 = vsel %vm938, %v947, %v946
      %vm949 = vcmp.lt.s32.totalorder %v751, 0
      %v950 = vsub.s32 0, %v751
      %v951 = vsel %vm949, %v950, %v751
      %v952 = vmul.u32.u64.compose %v951, 2863311531
      %v953 = vextract.low.u32 %v952
      %v954 = vextract.high.u32 %v952
      %v955 = vshrl.u32 %v954, 4
      %v956 = vmul.u32 %v955, 24
      %v957 = vsub.s32 %v951, %v956
      %v958 = vsub.s32 0, %v957
      %v959 = vsel %vm949, %v958, %v957
      %vm960 = vcmp.lt.s32.totalorder %v752, 0
      %v961 = vsub.s32 0, %v752
      %v962 = vsel %vm960, %v961, %v752
      %v963 = vmul.u32.u64.compose %v962, 2863311531
      %v964 = vextract.low.u32 %v963
      %v965 = vextract.high.u32 %v963
      %v966 = vshrl.u32 %v965, 4
      %v967 = vmul.u32 %v966, 24
      %v968 = vsub.s32 %v962, %v967
      %v969 = vsub.s32 0, %v968
      %v970 = vsel %vm960, %v969, %v968
      %vm971 = vcmp.lt.s32.totalorder %v753, 0
      %v972 = vsub.s32 0, %v753
      %v973 = vsel %vm971, %v972, %v753
      %v974 = vmul.u32.u64.compose %v973, 2863311531
      %v975 = vextract.low.u32 %v974
      %v976 = vextract.high.u32 %v974
      %v977 = vshrl.u32 %v976, 4
      %v978 = vmul.u32 %v977, 24
      %v979 = vsub.s32 %v973, %v978
      %v980 = vsub.s32 0, %v979
      %v981 = vsel %vm971, %v980, %v979
      %vm982 = vcmp.lt.s32.totalorder %v754, 0
      %v983 = vsub.s32 0, %v754
      %v984 = vsel %vm982, %v983, %v754
      %v985 = vmul.u32.u64.compose %v984, 2863311531
      %v986 = vextract.low.u32 %v985
      %v987 = vextract.high.u32 %v985
      %v988 = vshrl.u32 %v987, 4
      %v989 = vmul.u32 %v988, 24
      %v990 = vsub.s32 %v984, %v989
      %v991 = vsub.s32 0, %v990
      %v992 = vsel %vm982, %v991, %v990
      %vm993 = vcmp.lt.s32.totalorder %v755, 0
      %v994 = vsub.s32 0, %v755
      %v995 = vsel %vm993, %v994, %v755
      %v996 = vmul.u32.u64.compose %v995, 2863311531
      %v997 = vextract.low.u32 %v996
      %v998 = vextract.high.u32 %v996
      %v999 = vshrl.u32 %v998, 4
      %v1000 = vmul.u32 %v999, 24
      %v1001 = vsub.s32 %v995, %v1000
      %v1002 = vsub.s32 0, %v1001
      %v1003 = vsel %vm993, %v1002, %v1001
      %vm1004 = vcmp.lt.s32.totalorder %v756, 0
      %v1005 = vsub.s32 0, %v756
      %v1006 = vsel %vm1004, %v1005, %v756
      %v1007 = vmul.u32.u64.compose %v1006, 2863311531
      %v1008 = vextract.low.u32 %v1007
      %v1009 = vextract.high.u32 %v1007
      %v1010 = vshrl.u32 %v1009, 4
      %v1011 = vmul.u32 %v1010, 24
      %v1012 = vsub.s32 %v1006, %v1011
      %v1013 = vsub.s32 0, %v1012
      %v1014 = vsel %vm1004, %v1013, %v1012
      %vm1015 = vcmp.lt.s32.totalorder %v757, 0
      %v1016 = vsub.s32 0, %v757
      %v1017 = vsel %vm1015, %v1016, %v757
      %v1018 = vmul.u32.u64.compose %v1017, 2863311531
      %v1019 = vextract.low.u32 %v1018
      %v1020 = vextract.high.u32 %v1018
      %v1021 = vshrl.u32 %v1020, 4
      %v1022 = vmul.u32 %v1021, 24
      %v1023 = vsub.s32 %v1017, %v1022
      %v1024 = vsub.s32 0, %v1023
      %v1025 = vsel %vm1015, %v1024, %v1023
      %vm1026 = vcmp.lt.s32.totalorder %v758, 0
      %v1027 = vsub.s32 0, %v758
      %v1028 = vsel %vm1026, %v1027, %v758
      %v1029 = vmul.u32.u64.compose %v1028, 2863311531
      %v1030 = vextract.low.u32 %v1029
      %v1031 = vextract.high.u32 %v1029
      %v1032 = vshrl.u32 %v1031, 4
      %v1033 = vmul.u32 %v1032, 24
      %v1034 = vsub.s32 %v1028, %v1033
      %v1035 = vsub.s32 0, %v1034
      %v1036 = vsel %vm1026, %v1035, %v1034
      %vm1037 = vcmp.lt.s32.totalorder %v759, 0
      %v1038 = vsub.s32 0, %v759
      %v1039 = vsel %vm1037, %v1038, %v759
      %v1040 = vmul.u32.u64.compose %v1039, 2863311531
      %v1041 = vextract.low.u32 %v1040
      %v1042 = vextract.high.u32 %v1040
      %v1043 = vshrl.u32 %v1042, 4
      %v1044 = vmul.u32 %v1043, 24
      %v1045 = vsub.s32 %v1039, %v1044
      %v1046 = vsub.s32 0, %v1045
      %v1047 = vsel %vm1037, %v1046, %v1045
      %vm1048 = vcmp.lt.s32.totalorder %v760, 0
      %v1049 = vsub.s32 0, %v760
      %v1050 = vsel %vm1048, %v1049, %v760
      %v1051 = vmul.u32.u64.compose %v1050, 2863311531
      %v1052 = vextract.low.u32 %v1051
      %v1053 = vextract.high.u32 %v1051
      %v1054 = vshrl.u32 %v1053, 4
      %v1055 = vmul.u32 %v1054, 24
      %v1056 = vsub.s32 %v1050, %v1055
      %v1057 = vsub.s32 0, %v1056
      %v1058 = vsel %vm1048, %v1057, %v1056
      %vm1059 = vcmp.lt.s32.totalorder %v761, 0
      %v1060 = vsub.s32 0, %v761
      %v1061 = vsel %vm1059, %v1060, %v761
      %v1062 = vmul.u32.u64.compose %v1061, 2863311531
      %v1063 = vextract.low.u32 %v1062
      %v1064 = vextract.high.u32 %v1062
      %v1065 = vshrl.u32 %v1064, 4
      %v1066 = vmul.u32 %v1065, 24
      %v1067 = vsub.s32 %v1061, %v1066
      %v1068 = vsub.s32 0, %v1067
      %v1069 = vsel %vm1059, %v1068, %v1067
      %vm1070 = vcmp.lt.s32.totalorder %v762, 0
      %v1071 = vsub.s32 0, %v762
      %v1072 = vsel %vm1070, %v1071, %v762
      %v1073 = vmul.u32.u64.compose %v1072, 2863311531
      %v1074 = vextract.low.u32 %v1073
      %v1075 = vextract.high.u32 %v1073
      %v1076 = vshrl.u32 %v1075, 4
      %v1077 = vmul.u32 %v1076, 24
      %v1078 = vsub.s32 %v1072, %v1077
      %v1079 = vsub.s32 0, %v1078
      %v1080 = vsel %vm1070, %v1079, %v1078
      %vm1081 = vcmp.lt.s32.totalorder %v763, 0
      %v1082 = vsub.s32 0, %v763
      %v1083 = vsel %vm1081, %v1082, %v763
      %v1084 = vmul.u32.u64.compose %v1083, 2863311531
      %v1085 = vextract.low.u32 %v1084
      %v1086 = vextract.high.u32 %v1084
      %v1087 = vshrl.u32 %v1086, 4
      %v1088 = vmul.u32 %v1087, 24
      %v1089 = vsub.s32 %v1083, %v1088
      %v1090 = vsub.s32 0, %v1089
      %v1091 = vsel %vm1081, %v1090, %v1089
      %vm1092 = vcmp.lt.s32.totalorder %v764, 0
      %v1093 = vsub.s32 0, %v764
      %v1094 = vsel %vm1092, %v1093, %v764
      %v1095 = vmul.u32.u64.compose %v1094, 2863311531
      %v1096 = vextract.low.u32 %v1095
      %v1097 = vextract.high.u32 %v1095
      %v1098 = vshrl.u32 %v1097, 4
      %v1099 = vmul.u32 %v1098, 24
      %v1100 = vsub.s32 %v1094, %v1099
      %v1101 = vsub.s32 0, %v1100
      %v1102 = vsel %vm1092, %v1101, %v1100
      %vm1103 = vcmp.lt.s32.totalorder %v765, 0
      %v1104 = vsub.s32 0, %v765
      %v1105 = vsel %vm1103, %v1104, %v765
      %v1106 = vmul.u32.u64.compose %v1105, 2863311531
      %v1107 = vextract.low.u32 %v1106
      %v1108 = vextract.high.u32 %v1106
      %v1109 = vshrl.u32 %v1108, 4
      %v1110 = vmul.u32 %v1109, 24
      %v1111 = vsub.s32 %v1105, %v1110
      %v1112 = vsub.s32 0, %v1111
      %v1113 = vsel %vm1103, %v1112, %v1111
      %vm1114 = vcmp.lt.s32.totalorder %v766, 0
      %v1115 = vsub.s32 0, %v766
      %v1116 = vsel %vm1114, %v1115, %v766
      %v1117 = vmul.u32.u64.compose %v1116, 2863311531
      %v1118 = vextract.low.u32 %v1117
      %v1119 = vextract.high.u32 %v1117
      %v1120 = vshrl.u32 %v1119, 4
      %v1121 = vmul.u32 %v1120, 24
      %v1122 = vsub.s32 %v1116, %v1121
      %v1123 = vsub.s32 0, %v1122
      %v1124 = vsel %vm1114, %v1123, %v1122
      %vm1125 = vcmp.lt.s32.totalorder %v767, 0
      %v1126 = vsub.s32 0, %v767
      %v1127 = vsel %vm1125, %v1126, %v767
      %v1128 = vmul.u32.u64.compose %v1127, 2863311531
      %v1129 = vextract.low.u32 %v1128
      %v1130 = vextract.high.u32 %v1128
      %v1131 = vshrl.u32 %v1130, 4
      %v1132 = vmul.u32 %v1131, 24
      %v1133 = vsub.s32 %v1127, %v1132
      %v1134 = vsub.s32 0, %v1133
      %v1135 = vsel %vm1125, %v1134, %v1133
      %vm1136 = vcmp.lt.s32.totalorder %v768, 0
      %v1137 = vsub.s32 0, %v768
      %v1138 = vsel %vm1136, %v1137, %v768
      %v1139 = vmul.u32.u64.compose %v1138, 2863311531
      %v1140 = vextract.low.u32 %v1139
      %v1141 = vextract.high.u32 %v1139
      %v1142 = vshrl.u32 %v1141, 4
      %v1143 = vmul.u32 %v1142, 24
      %v1144 = vsub.s32 %v1138, %v1143
      %v1145 = vsub.s32 0, %v1144
      %v1146 = vsel %vm1136, %v1145, %v1144
      %vm1147 = vcmp.lt.s32.totalorder %v769, 0
      %v1148 = vsub.s32 0, %v769
      %v1149 = vsel %vm1147, %v1148, %v769
      %v1150 = vmul.u32.u64.compose %v1149, 2863311531
      %v1151 = vextract.low.u32 %v1150
      %v1152 = vextract.high.u32 %v1150
      %v1153 = vshrl.u32 %v1152, 4
      %v1154 = vmul.u32 %v1153, 24
      %v1155 = vsub.s32 %v1149, %v1154
      %v1156 = vsub.s32 0, %v1155
      %v1157 = vsel %vm1147, %v1156, %v1155
      %vm1158 = vcmp.lt.s32.totalorder %v770, 0
      %v1159 = vsub.s32 0, %v770
      %v1160 = vsel %vm1158, %v1159, %v770
      %v1161 = vmul.u32.u64.compose %v1160, 2863311531
      %v1162 = vextract.low.u32 %v1161
      %v1163 = vextract.high.u32 %v1161
      %v1164 = vshrl.u32 %v1163, 4
      %v1165 = vmul.u32 %v1164, 24
      %v1166 = vsub.s32 %v1160, %v1165
      %v1167 = vsub.s32 0, %v1166
      %v1168 = vsel %vm1158, %v1167, %v1166
      %vm1169 = vcmp.lt.s32.totalorder %v771, 0
      %v1170 = vsub.s32 0, %v771
      %v1171 = vsel %vm1169, %v1170, %v771
      %v1172 = vmul.u32.u64.compose %v1171, 2863311531
      %v1173 = vextract.low.u32 %v1172
      %v1174 = vextract.high.u32 %v1172
      %v1175 = vshrl.u32 %v1174, 4
      %v1176 = vmul.u32 %v1175, 24
      %v1177 = vsub.s32 %v1171, %v1176
      %v1178 = vsub.s32 0, %v1177
      %v1179 = vsel %vm1169, %v1178, %v1177
      %vm1180 = vcmp.lt.s32.totalorder %v772, 0
      %v1181 = vsub.s32 0, %v772
      %v1182 = vsel %vm1180, %v1181, %v772
      %v1183 = vmul.u32.u64.compose %v1182, 2863311531
      %v1184 = vextract.low.u32 %v1183
      %v1185 = vextract.high.u32 %v1183
      %v1186 = vshrl.u32 %v1185, 4
      %v1187 = vmul.u32 %v1186, 24
      %v1188 = vsub.s32 %v1182, %v1187
      %v1189 = vsub.s32 0, %v1188
      %v1190 = vsel %vm1180, %v1189, %v1188
      %vm1191 = vcmp.lt.s32.totalorder %v773, 0
      %v1192 = vsub.s32 0, %v773
      %v1193 = vsel %vm1191, %v1192, %v773
      %v1194 = vmul.u32.u64.compose %v1193, 2863311531
      %v1195 = vextract.low.u32 %v1194
      %v1196 = vextract.high.u32 %v1194
      %v1197 = vshrl.u32 %v1196, 4
      %v1198 = vmul.u32 %v1197, 24
      %v1199 = vsub.s32 %v1193, %v1198
      %v1200 = vsub.s32 0, %v1199
      %v1201 = vsel %vm1191, %v1200, %v1199
      %vm1202 = vcmp.lt.s32.totalorder %v774, 0
      %v1203 = vsub.s32 0, %v774
      %v1204 = vsel %vm1202, %v1203, %v774
      %v1205 = vmul.u32.u64.compose %v1204, 2863311531
      %v1206 = vextract.low.u32 %v1205
      %v1207 = vextract.high.u32 %v1205
      %v1208 = vshrl.u32 %v1207, 4
      %v1209 = vmul.u32 %v1208, 24
      %v1210 = vsub.s32 %v1204, %v1209
      %v1211 = vsub.s32 0, %v1210
      %v1212 = vsel %vm1202, %v1211, %v1210
      %vm1213 = vcmp.lt.s32.totalorder %v775, 0
      %v1214 = vsub.s32 0, %v775
      %v1215 = vsel %vm1213, %v1214, %v775
      %v1216 = vmul.u32.u64.compose %v1215, 2863311531
      %v1217 = vextract.low.u32 %v1216
      %v1218 = vextract.high.u32 %v1216
      %v1219 = vshrl.u32 %v1218, 4
      %v1220 = vmul.u32 %v1219, 24
      %v1221 = vsub.s32 %v1215, %v1220
      %v1222 = vsub.s32 0, %v1221
      %v1223 = vsel %vm1213, %v1222, %v1221
      %vm1224 = vcmp.lt.s32.totalorder %v776, 0
      %v1225 = vsub.s32 0, %v776
      %v1226 = vsel %vm1224, %v1225, %v776
      %v1227 = vmul.u32.u64.compose %v1226, 2863311531
      %v1228 = vextract.low.u32 %v1227
      %v1229 = vextract.high.u32 %v1227
      %v1230 = vshrl.u32 %v1229, 4
      %v1231 = vmul.u32 %v1230, 24
      %v1232 = vsub.s32 %v1226, %v1231
      %v1233 = vsub.s32 0, %v1232
      %v1234 = vsel %vm1224, %v1233, %v1232
      %vm1235 = vcmp.lt.s32.totalorder %v777, 0
      %v1236 = vsub.s32 0, %v777
      %v1237 = vsel %vm1235, %v1236, %v777
      %v1238 = vmul.u32.u64.compose %v1237, 2863311531
      %v1239 = vextract.low.u32 %v1238
      %v1240 = vextract.high.u32 %v1238
      %v1241 = vshrl.u32 %v1240, 4
      %v1242 = vmul.u32 %v1241, 24
      %v1243 = vsub.s32 %v1237, %v1242
      %v1244 = vsub.s32 0, %v1243
      %v1245 = vsel %vm1235, %v1244, %v1243
      %vm1246 = vcmp.lt.s32.totalorder %v778, 0
      %v1247 = vsub.s32 0, %v778
      %v1248 = vsel %vm1246, %v1247, %v778
      %v1249 = vmul.u32.u64.compose %v1248, 2863311531
      %v1250 = vextract.low.u32 %v1249
      %v1251 = vextract.high.u32 %v1249
      %v1252 = vshrl.u32 %v1251, 4
      %v1253 = vmul.u32 %v1252, 24
      %v1254 = vsub.s32 %v1248, %v1253
      %v1255 = vsub.s32 0, %v1254
      %v1256 = vsel %vm1246, %v1255, %v1254
      %vm1257 = vcmp.lt.s32.totalorder %v779, 0
      %v1258 = vsub.s32 0, %v779
      %v1259 = vsel %vm1257, %v1258, %v779
      %v1260 = vmul.u32.u64.compose %v1259, 2863311531
      %v1261 = vextract.low.u32 %v1260
      %v1262 = vextract.high.u32 %v1260
      %v1263 = vshrl.u32 %v1262, 4
      %v1264 = vmul.u32 %v1263, 24
      %v1265 = vsub.s32 %v1259, %v1264
      %v1266 = vsub.s32 0, %v1265
      %v1267 = vsel %vm1257, %v1266, %v1265
      %vm1268 = vcmp.lt.s32.totalorder %v780, 0
      %v1269 = vsub.s32 0, %v780
      %v1270 = vsel %vm1268, %v1269, %v780
      %v1271 = vmul.u32.u64.compose %v1270, 2863311531
      %v1272 = vextract.low.u32 %v1271
      %v1273 = vextract.high.u32 %v1271
      %v1274 = vshrl.u32 %v1273, 4
      %v1275 = vmul.u32 %v1274, 24
      %v1276 = vsub.s32 %v1270, %v1275
      %v1277 = vsub.s32 0, %v1276
      %v1278 = vsel %vm1268, %v1277, %v1276
      %vm1279 = vcmp.lt.s32.totalorder %v781, 0
      %v1280 = vsub.s32 0, %v781
      %v1281 = vsel %vm1279, %v1280, %v781
      %v1282 = vmul.u32.u64.compose %v1281, 2863311531
      %v1283 = vextract.low.u32 %v1282
      %v1284 = vextract.high.u32 %v1282
      %v1285 = vshrl.u32 %v1284, 4
      %v1286 = vmul.u32 %v1285, 24
      %v1287 = vsub.s32 %v1281, %v1286
      %v1288 = vsub.s32 0, %v1287
      %v1289 = vsel %vm1279, %v1288, %v1287
      %vm1290 = vcmp.lt.s32.totalorder %v782, 0
      %v1291 = vsub.s32 0, %v782
      %v1292 = vsel %vm1290, %v1291, %v782
      %v1293 = vmul.u32.u64.compose %v1292, 2863311531
      %v1294 = vextract.low.u32 %v1293
      %v1295 = vextract.high.u32 %v1293
      %v1296 = vshrl.u32 %v1295, 4
      %v1297 = vmul.u32 %v1296, 24
      %v1298 = vsub.s32 %v1292, %v1297
      %v1299 = vsub.s32 0, %v1298
      %v1300 = vsel %vm1290, %v1299, %v1298
      %vm1301 = vcmp.lt.s32.totalorder %v783, 0
      %v1302 = vsub.s32 0, %v783
      %v1303 = vsel %vm1301, %v1302, %v783
      %v1304 = vmul.u32.u64.compose %v1303, 2863311531
      %v1305 = vextract.low.u32 %v1304
      %v1306 = vextract.high.u32 %v1304
      %v1307 = vshrl.u32 %v1306, 4
      %v1308 = vmul.u32 %v1307, 24
      %v1309 = vsub.s32 %v1303, %v1308
      %v1310 = vsub.s32 0, %v1309
      %v1311 = vsel %vm1301, %v1310, %v1309
      %vm1312 = vcmp.ne.s32.totalorder %v794, 0
      %vm1313 = vcmp.ne.s32.totalorder %v805, 0
      %vm1314 = vcmp.ne.s32.totalorder %v816, 0
      %vm1315 = vcmp.ne.s32.totalorder %v827, 0
      %vm1316 = vcmp.ne.s32.totalorder %v838, 0
      %vm1317 = vcmp.ne.s32.totalorder %v849, 0
      %vm1318 = vcmp.ne.s32.totalorder %v860, 0
      %vm1319 = vcmp.ne.s32.totalorder %v871, 0
      %vm1320 = vcmp.ne.s32.totalorder %v882, 0
      %vm1321 = vcmp.ne.s32.totalorder %v893, 0
      %vm1322 = vcmp.ne.s32.totalorder %v904, 0
      %vm1323 = vcmp.ne.s32.totalorder %v915, 0
      %vm1324 = vcmp.ne.s32.totalorder %v926, 0
      %vm1325 = vcmp.ne.s32.totalorder %v937, 0
      %vm1326 = vcmp.ne.s32.totalorder %v948, 0
      %vm1327 = vcmp.ne.s32.totalorder %v959, 0
      %vm1328 = vcmp.ne.s32.totalorder %v970, 0
      %vm1329 = vcmp.ne.s32.totalorder %v981, 0
      %vm1330 = vcmp.ne.s32.totalorder %v992, 0
      %vm1331 = vcmp.ne.s32.totalorder %v1003, 0
      %vm1332 = vcmp.ne.s32.totalorder %v1014, 0
      %vm1333 = vcmp.ne.s32.totalorder %v1025, 0
      %vm1334 = vcmp.ne.s32.totalorder %v1036, 0
      %vm1335 = vcmp.ne.s32.totalorder %v1047, 0
      %vm1336 = vcmp.ne.s32.totalorder %v1058, 0
      %vm1337 = vcmp.ne.s32.totalorder %v1069, 0
      %vm1338 = vcmp.ne.s32.totalorder %v1080, 0
      %vm1339 = vcmp.ne.s32.totalorder %v1091, 0
      %vm1340 = vcmp.ne.s32.totalorder %v1102, 0
      %vm1341 = vcmp.ne.s32.totalorder %v1113, 0
      %vm1342 = vcmp.ne.s32.totalorder %v1124, 0
      %vm1343 = vcmp.ne.s32.totalorder %v1135, 0
      %vm1344 = vcmp.ne.s32.totalorder %v1146, 0
      %vm1345 = vcmp.ne.s32.totalorder %v1157, 0
      %vm1346 = vcmp.ne.s32.totalorder %v1168, 0
      %vm1347 = vcmp.ne.s32.totalorder %v1179, 0
      %vm1348 = vcmp.ne.s32.totalorder %v1190, 0
      %vm1349 = vcmp.ne.s32.totalorder %v1201, 0
      %vm1350 = vcmp.ne.s32.totalorder %v1212, 0
      %vm1351 = vcmp.ne.s32.totalorder %v1223, 0
      %vm1352 = vcmp.ne.s32.totalorder %v1234, 0
      %vm1353 = vcmp.ne.s32.totalorder %v1245, 0
      %vm1354 = vcmp.ne.s32.totalorder %v1256, 0
      %vm1355 = vcmp.ne.s32.totalorder %v1267, 0
      %vm1356 = vcmp.ne.s32.totalorder %v1278, 0
      %vm1357 = vcmp.ne.s32.totalorder %v1289, 0
      %vm1358 = vcmp.ne.s32.totalorder %v1300, 0
      %vm1359 = vcmp.ne.s32.totalorder %v1311, 0
      %vm1360 = vcmp.lt.s32.totalorder %v794, 0
      %vm1361 = vcmp.lt.s32.totalorder %v805, 0
      %vm1362 = vcmp.lt.s32.totalorder %v816, 0
      %vm1363 = vcmp.lt.s32.totalorder %v827, 0
      %vm1364 = vcmp.lt.s32.totalorder %v838, 0
      %vm1365 = vcmp.lt.s32.totalorder %v849, 0
      %vm1366 = vcmp.lt.s32.totalorder %v860, 0
      %vm1367 = vcmp.lt.s32.totalorder %v871, 0
      %vm1368 = vcmp.lt.s32.totalorder %v882, 0
      %vm1369 = vcmp.lt.s32.totalorder %v893, 0
      %vm1370 = vcmp.lt.s32.totalorder %v904, 0
      %vm1371 = vcmp.lt.s32.totalorder %v915, 0
      %vm1372 = vcmp.lt.s32.totalorder %v926, 0
      %vm1373 = vcmp.lt.s32.totalorder %v937, 0
      %vm1374 = vcmp.lt.s32.totalorder %v948, 0
      %vm1375 = vcmp.lt.s32.totalorder %v959, 0
      %vm1376 = vcmp.lt.s32.totalorder %v970, 0
      %vm1377 = vcmp.lt.s32.totalorder %v981, 0
      %vm1378 = vcmp.lt.s32.totalorder %v992, 0
      %vm1379 = vcmp.lt.s32.totalorder %v1003, 0
      %vm1380 = vcmp.lt.s32.totalorder %v1014, 0
      %vm1381 = vcmp.lt.s32.totalorder %v1025, 0
      %vm1382 = vcmp.lt.s32.totalorder %v1036, 0
      %vm1383 = vcmp.lt.s32.totalorder %v1047, 0
      %vm1384 = vcmp.lt.s32.totalorder %v1058, 0
      %vm1385 = vcmp.lt.s32.totalorder %v1069, 0
      %vm1386 = vcmp.lt.s32.totalorder %v1080, 0
      %vm1387 = vcmp.lt.s32.totalorder %v1091, 0
      %vm1388 = vcmp.lt.s32.totalorder %v1102, 0
      %vm1389 = vcmp.lt.s32.totalorder %v1113, 0
      %vm1390 = vcmp.lt.s32.totalorder %v1124, 0
      %vm1391 = vcmp.lt.s32.totalorder %v1135, 0
      %vm1392 = vcmp.lt.s32.totalorder %v1146, 0
      %vm1393 = vcmp.lt.s32.totalorder %v1157, 0
      %vm1394 = vcmp.lt.s32.totalorder %v1168, 0
      %vm1395 = vcmp.lt.s32.totalorder %v1179, 0
      %vm1396 = vcmp.lt.s32.totalorder %v1190, 0
      %vm1397 = vcmp.lt.s32.totalorder %v1201, 0
      %vm1398 = vcmp.lt.s32.totalorder %v1212, 0
      %vm1399 = vcmp.lt.s32.totalorder %v1223, 0
      %vm1400 = vcmp.lt.s32.totalorder %v1234, 0
      %vm1401 = vcmp.lt.s32.totalorder %v1245, 0
      %vm1402 = vcmp.lt.s32.totalorder %v1256, 0
      %vm1403 = vcmp.lt.s32.totalorder %v1267, 0
      %vm1404 = vcmp.lt.s32.totalorder %v1278, 0
      %vm1405 = vcmp.lt.s32.totalorder %v1289, 0
      %vm1406 = vcmp.lt.s32.totalorder %v1300, 0
      %vm1407 = vcmp.lt.s32.totalorder %v1311, 0
      %vm1408 = vmand %vm1360, %vm1312
      %vm1409 = vmand %vm1361, %vm1313
      %vm1410 = vmand %vm1362, %vm1314
      %vm1411 = vmand %vm1363, %vm1315
      %vm1412 = vmand %vm1364, %vm1316
      %vm1413 = vmand %vm1365, %vm1317
      %vm1414 = vmand %vm1366, %vm1318
      %vm1415 = vmand %vm1367, %vm1319
      %vm1416 = vmand %vm1368, %vm1320
      %vm1417 = vmand %vm1369, %vm1321
      %vm1418 = vmand %vm1370, %vm1322
      %vm1419 = vmand %vm1371, %vm1323
      %vm1420 = vmand %vm1372, %vm1324
      %vm1421 = vmand %vm1373, %vm1325
      %vm1422 = vmand %vm1374, %vm1326
      %vm1423 = vmand %vm1375, %vm1327
      %vm1424 = vmand %vm1376, %vm1328
      %vm1425 = vmand %vm1377, %vm1329
      %vm1426 = vmand %vm1378, %vm1330
      %vm1427 = vmand %vm1379, %vm1331
      %vm1428 = vmand %vm1380, %vm1332
      %vm1429 = vmand %vm1381, %vm1333
      %vm1430 = vmand %vm1382, %vm1334
      %vm1431 = vmand %vm1383, %vm1335
      %vm1432 = vmand %vm1384, %vm1336
      %vm1433 = vmand %vm1385, %vm1337
      %vm1434 = vmand %vm1386, %vm1338
      %vm1435 = vmand %vm1387, %vm1339
      %vm1436 = vmand %vm1388, %vm1340
      %vm1437 = vmand %vm1389, %vm1341
      %vm1438 = vmand %vm1390, %vm1342
      %vm1439 = vmand %vm1391, %vm1343
      %vm1440 = vmand %vm1392, %vm1344
      %vm1441 = vmand %vm1393, %vm1345
      %vm1442 = vmand %vm1394, %vm1346
      %vm1443 = vmand %vm1395, %vm1347
      %vm1444 = vmand %vm1396, %vm1348
      %vm1445 = vmand %vm1397, %vm1349
      %vm1446 = vmand %vm1398, %vm1350
      %vm1447 = vmand %vm1399, %vm1351
      %vm1448 = vmand %vm1400, %vm1352
      %vm1449 = vmand %vm1401, %vm1353
      %vm1450 = vmand %vm1402, %vm1354
      %vm1451 = vmand %vm1403, %vm1355
      %vm1452 = vmand %vm1404, %vm1356
      %vm1453 = vmand %vm1405, %vm1357
      %vm1454 = vmand %vm1406, %vm1358
      %vm1455 = vmand %vm1407, %vm1359
      %v1456 = vadd.s32 %v794, 24
      %v1457 = vadd.s32 %v805, 24
      %v1458 = vadd.s32 %v816, 24
      %v1459 = vadd.s32 %v827, 24
      %v1460 = vadd.s32 %v838, 24
      %v1461 = vadd.s32 %v849, 24
      %v1462 = vadd.s32 %v860, 24
      %v1463 = vadd.s32 %v871, 24
      %v1464 = vadd.s32 %v882, 24
      %v1465 = vadd.s32 %v893, 24
      %v1466 = vadd.s32 %v904, 24
      %v1467 = vadd.s32 %v915, 24
      %v1468 = vadd.s32 %v926, 24
      %v1469 = vadd.s32 %v937, 24
      %v1470 = vadd.s32 %v948, 24
      %v1471 = vadd.s32 %v959, 24
      %v1472 = vadd.s32 %v970, 24
      %v1473 = vadd.s32 %v981, 24
      %v1474 = vadd.s32 %v992, 24
      %v1475 = vadd.s32 %v1003, 24
      %v1476 = vadd.s32 %v1014, 24
      %v1477 = vadd.s32 %v1025, 24
      %v1478 = vadd.s32 %v1036, 24
      %v1479 = vadd.s32 %v1047, 24
      %v1480 = vadd.s32 %v1058, 24
      %v1481 = vadd.s32 %v1069, 24
      %v1482 = vadd.s32 %v1080, 24
      %v1483 = vadd.s32 %v1091, 24
      %v1484 = vadd.s32 %v1102, 24
      %v1485 = vadd.s32 %v1113, 24
      %v1486 = vadd.s32 %v1124, 24
      %v1487 = vadd.s32 %v1135, 24
      %v1488 = vadd.s32 %v1146, 24
      %v1489 = vadd.s32 %v1157, 24
      %v1490 = vadd.s32 %v1168, 24
      %v1491 = vadd.s32 %v1179, 24
      %v1492 = vadd.s32 %v1190, 24
      %v1493 = vadd.s32 %v1201, 24
      %v1494 = vadd.s32 %v1212, 24
      %v1495 = vadd.s32 %v1223, 24
      %v1496 = vadd.s32 %v1234, 24
      %v1497 = vadd.s32 %v1245, 24
      %v1498 = vadd.s32 %v1256, 24
      %v1499 = vadd.s32 %v1267, 24
      %v1500 = vadd.s32 %v1278, 24
      %v1501 = vadd.s32 %v1289, 24
      %v1502 = vadd.s32 %v1300, 24
      %v1503 = vadd.s32 %v1311, 24
      %v1504 = vsel %vm1408, %v1456, %v794
      %v1505 = vsel %vm1409, %v1457, %v805
      %v1506 = vsel %vm1410, %v1458, %v816
      %v1507 = vsel %vm1411, %v1459, %v827
      %v1508 = vsel %vm1412, %v1460, %v838
      %v1509 = vsel %vm1413, %v1461, %v849
      %v1510 = vsel %vm1414, %v1462, %v860
      %v1511 = vsel %vm1415, %v1463, %v871
      %v1512 = vsel %vm1416, %v1464, %v882
      %v1513 = vsel %vm1417, %v1465, %v893
      %v1514 = vsel %vm1418, %v1466, %v904
      %v1515 = vsel %vm1419, %v1467, %v915
      %v1516 = vsel %vm1420, %v1468, %v926
      %v1517 = vsel %vm1421, %v1469, %v937
      %v1518 = vsel %vm1422, %v1470, %v948
      %v1519 = vsel %vm1423, %v1471, %v959
      %v1520 = vsel %vm1424, %v1472, %v970
      %v1521 = vsel %vm1425, %v1473, %v981
      %v1522 = vsel %vm1426, %v1474, %v992
      %v1523 = vsel %vm1427, %v1475, %v1003
      %v1524 = vsel %vm1428, %v1476, %v1014
      %v1525 = vsel %vm1429, %v1477, %v1025
      %v1526 = vsel %vm1430, %v1478, %v1036
      %v1527 = vsel %vm1431, %v1479, %v1047
      %v1528 = vsel %vm1432, %v1480, %v1058
      %v1529 = vsel %vm1433, %v1481, %v1069
      %v1530 = vsel %vm1434, %v1482, %v1080
      %v1531 = vsel %vm1435, %v1483, %v1091
      %v1532 = vsel %vm1436, %v1484, %v1102
      %v1533 = vsel %vm1437, %v1485, %v1113
      %v1534 = vsel %vm1438, %v1486, %v1124
      %v1535 = vsel %vm1439, %v1487, %v1135
      %v1536 = vsel %vm1440, %v1488, %v1146
      %v1537 = vsel %vm1441, %v1489, %v1157
      %v1538 = vsel %vm1442, %v1490, %v1168
      %v1539 = vsel %vm1443, %v1491, %v1179
      %v1540 = vsel %vm1444, %v1492, %v1190
      %v1541 = vsel %vm1445, %v1493, %v1201
      %v1542 = vsel %vm1446, %v1494, %v1212
      %v1543 = vsel %vm1447, %v1495, %v1223
      %v1544 = vsel %vm1448, %v1496, %v1234
      %v1545 = vsel %vm1449, %v1497, %v1245
      %v1546 = vsel %vm1450, %v1498, %v1256
      %v1547 = vsel %vm1451, %v1499, %v1267
      %v1548 = vsel %vm1452, %v1500, %v1278
      %v1549 = vsel %vm1453, %v1501, %v1289
      %v1550 = vsel %vm1454, %v1502, %v1300
      %v1551 = vsel %vm1455, %v1503, %v1311
      %vm1552 = vcmp.lt.s32.totalorder %v1504, 16
      %vm1553 = vcmp.lt.s32.totalorder %v1505, 16
      %vm1554 = vcmp.lt.s32.totalorder %v1506, 16
      %vm1555 = vcmp.lt.s32.totalorder %v1507, 16
      %vm1556 = vcmp.lt.s32.totalorder %v1508, 16
      %vm1557 = vcmp.lt.s32.totalorder %v1509, 16
      %vm1558 = vcmp.lt.s32.totalorder %v1510, 16
      %vm1559 = vcmp.lt.s32.totalorder %v1511, 16
      %vm1560 = vcmp.lt.s32.totalorder %v1512, 16
      %vm1561 = vcmp.lt.s32.totalorder %v1513, 16
      %vm1562 = vcmp.lt.s32.totalorder %v1514, 16
      %vm1563 = vcmp.lt.s32.totalorder %v1515, 16
      %vm1564 = vcmp.lt.s32.totalorder %v1516, 16
      %vm1565 = vcmp.lt.s32.totalorder %v1517, 16
      %vm1566 = vcmp.lt.s32.totalorder %v1518, 16
      %vm1567 = vcmp.lt.s32.totalorder %v1519, 16
      %vm1568 = vcmp.lt.s32.totalorder %v1520, 16
      %vm1569 = vcmp.lt.s32.totalorder %v1521, 16
      %vm1570 = vcmp.lt.s32.totalorder %v1522, 16
      %vm1571 = vcmp.lt.s32.totalorder %v1523, 16
      %vm1572 = vcmp.lt.s32.totalorder %v1524, 16
      %vm1573 = vcmp.lt.s32.totalorder %v1525, 16
      %vm1574 = vcmp.lt.s32.totalorder %v1526, 16
      %vm1575 = vcmp.lt.s32.totalorder %v1527, 16
      %vm1576 = vcmp.lt.s32.totalorder %v1528, 16
      %vm1577 = vcmp.lt.s32.totalorder %v1529, 16
      %vm1578 = vcmp.lt.s32.totalorder %v1530, 16
      %vm1579 = vcmp.lt.s32.totalorder %v1531, 16
      %vm1580 = vcmp.lt.s32.totalorder %v1532, 16
      %vm1581 = vcmp.lt.s32.totalorder %v1533, 16
      %vm1582 = vcmp.lt.s32.totalorder %v1534, 16
      %vm1583 = vcmp.lt.s32.totalorder %v1535, 16
      %vm1584 = vcmp.lt.s32.totalorder %v1536, 16
      %vm1585 = vcmp.lt.s32.totalorder %v1537, 16
      %vm1586 = vcmp.lt.s32.totalorder %v1538, 16
      %vm1587 = vcmp.lt.s32.totalorder %v1539, 16
      %vm1588 = vcmp.lt.s32.totalorder %v1540, 16
      %vm1589 = vcmp.lt.s32.totalorder %v1541, 16
      %vm1590 = vcmp.lt.s32.totalorder %v1542, 16
      %vm1591 = vcmp.lt.s32.totalorder %v1543, 16
      %vm1592 = vcmp.lt.s32.totalorder %v1544, 16
      %vm1593 = vcmp.lt.s32.totalorder %v1545, 16
      %vm1594 = vcmp.lt.s32.totalorder %v1546, 16
      %vm1595 = vcmp.lt.s32.totalorder %v1547, 16
      %vm1596 = vcmp.lt.s32.totalorder %v1548, 16
      %vm1597 = vcmp.lt.s32.totalorder %v1549, 16
      %vm1598 = vcmp.lt.s32.totalorder %v1550, 16
      %vm1599 = vcmp.lt.s32.totalorder %v1551, 16
      %vm1600 = vcmask 15360
      %1601 = vst.msk [vmem:[#allocation2] sm:$0xff] %vm1600, -inf
      %1602 = vst.msk [vmem:[#allocation2 + $0x8] sm:$0xff] %vm1600, -inf
      %1603 = vst.msk [vmem:[#allocation2 + $0x10] sm:$0xff] %vm1600, -inf
      %1604 = vst.msk [vmem:[#allocation2 + $0x18] sm:$0xff] %vm1600, -inf
      %1605 = vst.msk [vmem:[#allocation2 + $0x20] sm:$0xff] %vm1600, -inf
      %1606 = vst.msk [vmem:[#allocation2 + $0x28] sm:$0xff] %vm1600, -inf
      %1607 = vst.msk [vmem:[#allocation2 + $0x1b0] sm:$0xff] %vm1600, -inf
      %1608 = vst.msk [vmem:[#allocation2 + $0x1b8] sm:$0xff] %vm1600, -inf
      %1609 = vst.msk [vmem:[#allocation2 + $0x1c0] sm:$0xff] %vm1600, -inf
      %1610 = vst.msk [vmem:[#allocation2 + $0x1c8] sm:$0xff] %vm1600, -inf
      %1611 = vst.msk [vmem:[#allocation2 + $0x1d0] sm:$0xff] %vm1600, -inf
      %1612 = vst.msk [vmem:[#allocation2 + $0x1d8] sm:$0xff] %vm1600, -inf
      %v1613 = vld [vmem:[%s3] sm:$0x3]
      %v1614 = vsel %vm1552, %v497, -inf
      %v1615 = vsel %vm1553, %v502, -inf
      %v1616 = vsel %vm1554, %v507, -inf
      %v1617 = vsel %vm1555, %v512, -inf
      %v1618 = vsel %vm1556, %v517, -inf
      %v1619 = vsel %vm1557, %v522, -inf
      %v1620 = vsel %vm1558, %v527, -inf
      %v1621 = vsel %vm1559, %v532, -inf
      %v1622 = vsel %vm1560, %v537, -inf
      %v1623 = vsel %vm1561, %v542, -inf
      %v1624 = vsel %vm1562, %v547, -inf
      %v1625 = vsel %vm1563, %v552, -inf
      %v1626 = vsel %vm1564, %v557, -inf
      %v1627 = vsel %vm1565, %v562, -inf
      %v1628 = vsel %vm1566, %v567, -inf
      %v1629 = vsel %vm1567, %v572, -inf
      %v1630 = vsel %vm1568, %v577, -inf
      %v1631 = vsel %vm1569, %v582, -inf
      %v1632 = vsel %vm1570, %v587, -inf
      %v1633 = vsel %vm1571, %v592, -inf
      %v1634 = vsel %vm1572, %v597, -inf
      %v1635 = vsel %vm1573, %v602, -inf
      %v1636 = vsel %vm1574, %v607, -inf
      %v1637 = vsel %vm1575, %v612, -inf
      %v1638 = vsel %vm1576, %v617, -inf
      %v1639 = vsel %vm1577, %v622, -inf
      %v1640 = vsel %vm1578, %v627, -inf
      %v1641 = vsel %vm1579, %v632, -inf
      %v1642 = vsel %vm1580, %v637, -inf
      %v1643 = vsel %vm1581, %v642, -inf
      %v1644 = vsel %vm1582, %v647, -inf
      %v1645 = vsel %vm1583, %v652, -inf
      %v1646 = vsel %vm1584, %v657, -inf
      %v1647 = vsel %vm1585, %v662, -inf
      %v1648 = vsel %vm1586, %v667, -inf
      %v1649 = vsel %vm1587, %v672, -inf
      %v1650 = vsel %vm1588, %v677, -inf
      %v1651 = vsel %vm1589, %v682, -inf
      %v1652 = vsel %vm1590, %v687, -inf
      %v1653 = vsel %vm1591, %v692, -inf
      %v1654 = vsel %vm1592, %v697, -inf
      %v1655 = vsel %vm1593, %v702, -inf
      %v1656 = vsel %vm1594, %v707, -inf
      %v1657 = vsel %vm1595, %v712, -inf
      %v1658 = vsel %vm1596, %v717, -inf
      %v1659 = vsel %vm1597, %v722, -inf
      %v1660 = vsel %vm1598, %v727, -inf
      %v1661 = vsel %vm1599, %v732, -inf
      %v1662 = vrot.slane %v1614, 1
      %v1663 = vrot.slane %v1615, 1
      %v1664 = vrot.slane %v1616, 1
      %v1665 = vrot.slane %v1617, 1
      %v1666 = vrot.slane %v1618, 1
      %v1667 = vrot.slane %v1619, 1
      %v1668 = vrot.slane %v1620, 1
      %v1669 = vrot.slane %v1621, 1
      %v1670 = vrot.slane %v1622, 1
      %v1671 = vrot.slane %v1623, 1
      %v1672 = vrot.slane %v1624, 1
      %v1673 = vrot.slane %v1625, 1
      %v1674 = vrot.slane %v1626, 1
      %v1675 = vrot.slane %v1627, 1
      %v1676 = vrot.slane %v1628, 1
      %v1677 = vrot.slane %v1629, 1
      %v1678 = vrot.slane %v1630, 1
      %v1679 = vrot.slane %v1631, 1
      %v1680 = vrot.slane %v1632, 1
      %v1681 = vrot.slane %v1633, 1
      %v1682 = vrot.slane %v1634, 1
      %v1683 = vrot.slane %v1635, 1
      %v1684 = vrot.slane %v1636, 1
      %v1685 = vrot.slane %v1637, 1
      %v1686 = vrot.slane %v1638, 1
      %v1687 = vrot.slane %v1639, 1
      %v1688 = vrot.slane %v1640, 1
      %v1689 = vrot.slane %v1641, 1
      %v1690 = vrot.slane %v1642, 1
      %v1691 = vrot.slane %v1643, 1
      %v1692 = vrot.slane %v1644, 1
      %v1693 = vrot.slane %v1645, 1
      %v1694 = vrot.slane %v1646, 1
      %v1695 = vrot.slane %v1647, 1
      %v1696 = vrot.slane %v1648, 1
      %v1697 = vrot.slane %v1649, 1
      %v1698 = vrot.slane %v1650, 1
      %v1699 = vrot.slane %v1651, 1
      %v1700 = vrot.slane %v1652, 1
      %v1701 = vrot.slane %v1653, 1
      %v1702 = vrot.slane %v1654, 1
      %v1703 = vrot.slane %v1655, 1
      %v1704 = vrot.slane %v1656, 1
      %v1705 = vrot.slane %v1657, 1
      %v1706 = vrot.slane %v1658, 1
      %v1707 = vrot.slane %v1659, 1
      %v1708 = vrot.slane %v1660, 1
      %v1709 = vrot.slane %v1661, 1
      %vm1710 = vcmp.lt.s32.totalorder %v736, 7
      %v1711 = vsel %vm1710, %v1708, %v1709
      %v1712 = vsel %vm1710, %v1707, %v1708
      %v1713 = vsel %vm1710, %v1706, %v1707
      %v1714 = vsel %vm1710, %v1705, %v1706
      %v1715 = vsel %vm1710, %v1704, %v1705
      %v1716 = vsel %vm1710, %v1703, %v1704
      %v1717 = vsel %vm1710, %v1702, %v1703
      %v1718 = vsel %vm1710, %v1701, %v1702
      %v1719 = vsel %vm1710, %v1700, %v1701
      %v1720 = vsel %vm1710, %v1699, %v1700
      %v1721 = vsel %vm1710, %v1698, %v1699
      %v1722 = vsel %vm1710, %v1697, %v1698
      %v1723 = vsel %vm1710, %v1696, %v1697
      %v1724 = vsel %vm1710, %v1695, %v1696
      %v1725 = vsel %vm1710, %v1694, %v1695
      %v1726 = vsel %vm1710, %v1693, %v1694
      %v1727 = vsel %vm1710, %v1692, %v1693
      %v1728 = vsel %vm1710, %v1691, %v1692
      %v1729 = vsel %vm1710, %v1690, %v1691
      %v1730 = vsel %vm1710, %v1689, %v1690
      %v1731 = vsel %vm1710, %v1688, %v1689
      %v1732 = vsel %vm1710, %v1687, %v1688
      %v1733 = vsel %vm1710, %v1686, %v1687
      %v1734 = vsel %vm1710, %v1685, %v1686
      %v1735 = vsel %vm1710, %v1684, %v1685
      %v1736 = vsel %vm1710, %v1683, %v1684
      %v1737 = vsel %vm1710, %v1682, %v1683
      %v1738 = vsel %vm1710, %v1681, %v1682
      %v1739 = vsel %vm1710, %v1680, %v1681
      %v1740 = vsel %vm1710, %v1679, %v1680
      %v1741 = vsel %vm1710, %v1678, %v1679
      %v1742 = vsel %vm1710, %v1677, %v1678
      %v1743 = vsel %vm1710, %v1676, %v1677
      %v1744 = vsel %vm1710, %v1675, %v1676
      %v1745 = vsel %vm1710, %v1674, %v1675
      %v1746 = vsel %vm1710, %v1673, %v1674
      %v1747 = vsel %vm1710, %v1672, %v1673
      %v1748 = vsel %vm1710, %v1671, %v1672
      %v1749 = vsel %vm1710, %v1670, %v1671
      %v1750 = vsel %vm1710, %v1669, %v1670
      %v1751 = vsel %vm1710, %v1668, %v1669
      %v1752 = vsel %vm1710, %v1667, %v1668
      %v1753 = vsel %vm1710, %v1666, %v1667
      %v1754 = vsel %vm1710, %v1665, %v1666
      %v1755 = vsel %vm1710, %v1664, %v1665
      %v1756 = vsel %vm1710, %v1663, %v1664
      %v1757 = vsel %vm1710, %v1662, %v1663
      %v1758 = vsel %vm1710, %v1709, %v1662
      %v1759 = vmax.f32 %v1614, %v1757
      %v1760 = vmax.f32 %v1615, %v1756
      %v1761 = vmax.f32 %v1616, %v1755
      %v1762 = vmax.f32 %v1617, %v1754
      %v1763 = vmax.f32 %v1618, %v1753
      %v1764 = vmax.f32 %v1619, %v1752
      %v1765 = vmax.f32 %v1620, %v1751
      %v1766 = vmax.f32 %v1621, %v1750
      %v1767 = vmax.f32 %v1622, %v1749
      %v1768 = vmax.f32 %v1623, %v1748
      %v1769 = vmax.f32 %v1624, %v1747
      %v1770 = vmax.f32 %v1625, %v1746
      %v1771 = vmax.f32 %v1626, %v1745
      %v1772 = vmax.f32 %v1627, %v1744
      %v1773 = vmax.f32 %v1628, %v1743
      %v1774 = vmax.f32 %v1629, %v1742
      %v1775 = vmax.f32 %v1630, %v1741
      %v1776 = vmax.f32 %v1631, %v1740
      %v1777 = vmax.f32 %v1632, %v1739
      %v1778 = vmax.f32 %v1633, %v1738
      %v1779 = vmax.f32 %v1634, %v1737
      %v1780 = vmax.f32 %v1635, %v1736
      %v1781 = vmax.f32 %v1636, %v1735
      %v1782 = vmax.f32 %v1637, %v1734
      %v1783 = vmax.f32 %v1638, %v1733
      %v1784 = vmax.f32 %v1639, %v1732
      %v1785 = vmax.f32 %v1640, %v1731
      %v1786 = vmax.f32 %v1641, %v1730
      %v1787 = vmax.f32 %v1642, %v1729
      %v1788 = vmax.f32 %v1643, %v1728
      %v1789 = vmax.f32 %v1644, %v1727
      %v1790 = vmax.f32 %v1645, %v1726
      %v1791 = vmax.f32 %v1646, %v1725
      %v1792 = vmax.f32 %v1647, %v1724
      %v1793 = vmax.f32 %v1648, %v1723
      %v1794 = vmax.f32 %v1649, %v1722
      %v1795 = vmax.f32 %v1650, %v1721
      %v1796 = vmax.f32 %v1651, %v1720
      %v1797 = vmax.f32 %v1652, %v1719
      %v1798 = vmax.f32 %v1653, %v1718
      %v1799 = vmax.f32 %v1654, %v1717
      %v1800 = vmax.f32 %v1655, %v1716
      %v1801 = vmax.f32 %v1656, %v1715
      %v1802 = vmax.f32 %v1657, %v1714
      %v1803 = vmax.f32 %v1658, %v1713
      %v1804 = vmax.f32 %v1659, %v1712
      %v1805 = vmax.f32 %v1660, %v1711
      %v1806 = vmax.f32 %v1661, %v1758
      %v1807 = vrot.slane %v1759, 6
      %v1808 = vrot.slane %v1760, 6
      %v1809 = vrot.slane %v1761, 6
      %v1810 = vrot.slane %v1762, 6
      %v1811 = vrot.slane %v1763, 6
      %v1812 = vrot.slane %v1764, 6
      %v1813 = vrot.slane %v1765, 6
      %v1814 = vrot.slane %v1766, 6
      %v1815 = vrot.slane %v1767, 6
      %v1816 = vrot.slane %v1768, 6
      %v1817 = vrot.slane %v1769, 6
      %v1818 = vrot.slane %v1770, 6
      %v1819 = vrot.slane %v1771, 6
      %v1820 = vrot.slane %v1772, 6
      %v1821 = vrot.slane %v1773, 6
      %v1822 = vrot.slane %v1774, 6
      %v1823 = vrot.slane %v1775, 6
      %v1824 = vrot.slane %v1776, 6
      %v1825 = vrot.slane %v1777, 6
      %v1826 = vrot.slane %v1778, 6
      %v1827 = vrot.slane %v1779, 6
      %v1828 = vrot.slane %v1780, 6
      %v1829 = vrot.slane %v1781, 6
      %v1830 = vrot.slane %v1782, 6
      %v1831 = vrot.slane %v1783, 6
      %v1832 = vrot.slane %v1784, 6
      %v1833 = vrot.slane %v1785, 6
      %v1834 = vrot.slane %v1786, 6
      %v1835 = vrot.slane %v1787, 6
      %v1836 = vrot.slane %v1788, 6
      %v1837 = vrot.slane %v1789, 6
      %v1838 = vrot.slane %v1790, 6
      %v1839 = vrot.slane %v1791, 6
      %v1840 = vrot.slane %v1792, 6
      %v1841 = vrot.slane %v1793, 6
      %v1842 = vrot.slane %v1794, 6
      %v1843 = vrot.slane %v1795, 6
      %v1844 = vrot.slane %v1796, 6
      %v1845 = vrot.slane %v1797, 6
      %v1846 = vrot.slane %v1798, 6
      %v1847 = vrot.slane %v1799, 6
      %v1848 = vrot.slane %v1800, 6
      %v1849 = vrot.slane %v1801, 6
      %v1850 = vrot.slane %v1802, 6
      %v1851 = vrot.slane %v1803, 6
      %v1852 = vrot.slane %v1804, 6
      %v1853 = vrot.slane %v1805, 6
      %v1854 = vrot.slane %v1806, 6
      %vm1855 = vcmp.lt.s32.totalorder %v736, 2
      %v1856 = vsel %vm1855, %v1853, %v1854
      %v1857 = vsel %vm1855, %v1852, %v1853
      %v1858 = vsel %vm1855, %v1851, %v1852
      %v1859 = vsel %vm1855, %v1850, %v1851
      %v1860 = vsel %vm1855, %v1849, %v1850
      %v1861 = vsel %vm1855, %v1848, %v1849
      %v1862 = vsel %vm1855, %v1847, %v1848
      %v1863 = vsel %vm1855, %v1846, %v1847
      %v1864 = vsel %vm1855, %v1845, %v1846
      %v1865 = vsel %vm1855, %v1844, %v1845
      %v1866 = vsel %vm1855, %v1843, %v1844
      %v1867 = vsel %vm1855, %v1842, %v1843
      %v1868 = vsel %vm1855, %v1841, %v1842
      %v1869 = vsel %vm1855, %v1840, %v1841
      %v1870 = vsel %vm1855, %v1839, %v1840
      %v1871 = vsel %vm1855, %v1838, %v1839
      %v1872 = vsel %vm1855, %v1837, %v1838
      %v1873 = vsel %vm1855, %v1836, %v1837
      %v1874 = vsel %vm1855, %v1835, %v1836
      %v1875 = vsel %vm1855, %v1834, %v1835
      %v1876 = vsel %vm1855, %v1833, %v1834
      %v1877 = vsel %vm1855, %v1832, %v1833
      %v1878 = vsel %vm1855, %v1831, %v1832
      %v1879 = vsel %vm1855, %v1830, %v1831
      %v1880 = vsel %vm1855, %v1829, %v1830
      %v1881 = vsel %vm1855, %v1828, %v1829
      %v1882 = vsel %vm1855, %v1827, %v1828
      %v1883 = vsel %vm1855, %v1826, %v1827
      %v1884 = vsel %vm1855, %v1825, %v1826
      %v1885 = vsel %vm1855, %v1824, %v1825
      %v1886 = vsel %vm1855, %v1823, %v1824
      %v1887 = vsel %vm1855, %v1822, %v1823
      %v1888 = vsel %vm1855, %v1821, %v1822
      %v1889 = vsel %vm1855, %v1820, %v1821
      %v1890 = vsel %vm1855, %v1819, %v1820
      %v1891 = vsel %vm1855, %v1818, %v1819
      %v1892 = vsel %vm1855, %v1817, %v1818
      %v1893 = vsel %vm1855, %v1816, %v1817
      %v1894 = vsel %vm1855, %v1815, %v1816
      %v1895 = vsel %vm1855, %v1814, %v1815
      %v1896 = vsel %vm1855, %v1813, %v1814
      %v1897 = vsel %vm1855, %v1812, %v1813
      %v1898 = vsel %vm1855, %v1811, %v1812
      %v1899 = vsel %vm1855, %v1810, %v1811
      %v1900 = vsel %vm1855, %v1809, %v1810
      %v1901 = vsel %vm1855, %v1808, %v1809
      %v1902 = vsel %vm1855, %v1807, %v1808
      %v1903 = vsel %vm1855, %v1854, %v1807
      %v1904 = vmax.f32 %v1759, %v1903
      %v1905 = vmax.f32 %v1760, %v1902
      %v1906 = vmax.f32 %v1761, %v1901
      %v1907 = vmax.f32 %v1762, %v1900
      %v1908 = vmax.f32 %v1763, %v1899
      %v1909 = vmax.f32 %v1764, %v1898
      %v1910 = vmax.f32 %v1765, %v1897
      %v1911 = vmax.f32 %v1766, %v1896
      %v1912 = vmax.f32 %v1767, %v1895
      %v1913 = vmax.f32 %v1768, %v1894
      %v1914 = vmax.f32 %v1769, %v1893
      %v1915 = vmax.f32 %v1770, %v1892
      %v1916 = vmax.f32 %v1771, %v1891
      %v1917 = vmax.f32 %v1772, %v1890
      %v1918 = vmax.f32 %v1773, %v1889
      %v1919 = vmax.f32 %v1774, %v1888
      %v1920 = vmax.f32 %v1775, %v1887
      %v1921 = vmax.f32 %v1776, %v1886
      %v1922 = vmax.f32 %v1777, %v1885
      %v1923 = vmax.f32 %v1778, %v1884
      %v1924 = vmax.f32 %v1779, %v1883
      %v1925 = vmax.f32 %v1780, %v1882
      %v1926 = vmax.f32 %v1781, %v1881
      %v1927 = vmax.f32 %v1782, %v1880
      %v1928 = vmax.f32 %v1783, %v1879
      %v1929 = vmax.f32 %v1784, %v1878
      %v1930 = vmax.f32 %v1785, %v1877
      %v1931 = vmax.f32 %v1786, %v1876
      %v1932 = vmax.f32 %v1787, %v1875
      %v1933 = vmax.f32 %v1788, %v1874
      %v1934 = vmax.f32 %v1789, %v1873
      %v1935 = vmax.f32 %v1790, %v1872
      %v1936 = vmax.f32 %v1791, %v1871
      %v1937 = vmax.f32 %v1792, %v1870
      %v1938 = vmax.f32 %v1793, %v1869
      %v1939 = vmax.f32 %v1794, %v1868
      %v1940 = vmax.f32 %v1795, %v1867
      %v1941 = vmax.f32 %v1796, %v1866
      %v1942 = vmax.f32 %v1797, %v1865
      %v1943 = vmax.f32 %v1798, %v1864
      %v1944 = vmax.f32 %v1799, %v1863
      %v1945 = vmax.f32 %v1800, %v1862
      %v1946 = vmax.f32 %v1801, %v1861
      %v1947 = vmax.f32 %v1802, %v1860
      %v1948 = vmax.f32 %v1803, %v1859
      %v1949 = vmax.f32 %v1804, %v1858
      %v1950 = vmax.f32 %v1805, %v1857
      %v1951 = vmax.f32 %v1806, %v1856
      %v1952 = vrot.slane %v1614, 2
      %v1953 = vrot.slane %v1615, 2
      %v1954 = vrot.slane %v1616, 2
      %v1955 = vrot.slane %v1617, 2
      %v1956 = vrot.slane %v1618, 2
      %v1957 = vrot.slane %v1619, 2
      %v1958 = vrot.slane %v1620, 2
      %v1959 = vrot.slane %v1621, 2
      %v1960 = vrot.slane %v1622, 2
      %v1961 = vrot.slane %v1623, 2
      %v1962 = vrot.slane %v1624, 2
      %v1963 = vrot.slane %v1625, 2
      %v1964 = vrot.slane %v1626, 2
      %v1965 = vrot.slane %v1627, 2
      %v1966 = vrot.slane %v1628, 2
      %v1967 = vrot.slane %v1629, 2
      %v1968 = vrot.slane %v1630, 2
      %v1969 = vrot.slane %v1631, 2
      %v1970 = vrot.slane %v1632, 2
      %v1971 = vrot.slane %v1633, 2
      %v1972 = vrot.slane %v1634, 2
      %v1973 = vrot.slane %v1635, 2
      %v1974 = vrot.slane %v1636, 2
      %v1975 = vrot.slane %v1637, 2
      %v1976 = vrot.slane %v1638, 2
      %v1977 = vrot.slane %v1639, 2
      %v1978 = vrot.slane %v1640, 2
      %v1979 = vrot.slane %v1641, 2
      %v1980 = vrot.slane %v1642, 2
      %v1981 = vrot.slane %v1643, 2
      %v1982 = vrot.slane %v1644, 2
      %v1983 = vrot.slane %v1645, 2
      %v1984 = vrot.slane %v1646, 2
      %v1985 = vrot.slane %v1647, 2
      %v1986 = vrot.slane %v1648, 2
      %v1987 = vrot.slane %v1649, 2
      %v1988 = vrot.slane %v1650, 2
      %v1989 = vrot.slane %v1651, 2
      %v1990 = vrot.slane %v1652, 2
      %v1991 = vrot.slane %v1653, 2
      %v1992 = vrot.slane %v1654, 2
      %v1993 = vrot.slane %v1655, 2
      %v1994 = vrot.slane %v1656, 2
      %v1995 = vrot.slane %v1657, 2
      %v1996 = vrot.slane %v1658, 2
      %v1997 = vrot.slane %v1659, 2
      %v1998 = vrot.slane %v1660, 2
      %v1999 = vrot.slane %v1661, 2
      %vm2000 = vcmp.lt.s32.totalorder %v736, 6
      %v2001 = vsel %vm2000, %v1998, %v1999
      %v2002 = vsel %vm2000, %v1997, %v1998
      %v2003 = vsel %vm2000, %v1996, %v1997
      %v2004 = vsel %vm2000, %v1995, %v1996
      %v2005 = vsel %vm2000, %v1994, %v1995
      %v2006 = vsel %vm2000, %v1993, %v1994
      %v2007 = vsel %vm2000, %v1992, %v1993
      %v2008 = vsel %vm2000, %v1991, %v1992
      %v2009 = vsel %vm2000, %v1990, %v1991
      %v2010 = vsel %vm2000, %v1989, %v1990
      %v2011 = vsel %vm2000, %v1988, %v1989
      %v2012 = vsel %vm2000, %v1987, %v1988
      %v2013 = vsel %vm2000, %v1986, %v1987
      %v2014 = vsel %vm2000, %v1985, %v1986
      %v2015 = vsel %vm2000, %v1984, %v1985
      %v2016 = vsel %vm2000, %v1983, %v1984
      %v2017 = vsel %vm2000, %v1982, %v1983
      %v2018 = vsel %vm2000, %v1981, %v1982
      %v2019 = vsel %vm2000, %v1980, %v1981
      %v2020 = vsel %vm2000, %v1979, %v1980
      %v2021 = vsel %vm2000, %v1978, %v1979
      %v2022 = vsel %vm2000, %v1977, %v1978
      %v2023 = vsel %vm2000, %v1976, %v1977
      %v2024 = vsel %vm2000, %v1975, %v1976
      %v2025 = vsel %vm2000, %v1974, %v1975
      %v2026 = vsel %vm2000, %v1973, %v1974
      %v2027 = vsel %vm2000, %v1972, %v1973
      %v2028 = vsel %vm2000, %v1971, %v1972
      %v2029 = vsel %vm2000, %v1970, %v1971
      %v2030 = vsel %vm2000, %v1969, %v1970
      %v2031 = vsel %vm2000, %v1968, %v1969
      %v2032 = vsel %vm2000, %v1967, %v1968
      %v2033 = vsel %vm2000, %v1966, %v1967
      %v2034 = vsel %vm2000, %v1965, %v1966
      %v2035 = vsel %vm2000, %v1964, %v1965
      %v2036 = vsel %vm2000, %v1963, %v1964
      %v2037 = vsel %vm2000, %v1962, %v1963
      %v2038 = vsel %vm2000, %v1961, %v1962
      %v2039 = vsel %vm2000, %v1960, %v1961
      %v2040 = vsel %vm2000, %v1959, %v1960
      %v2041 = vsel %vm2000, %v1958, %v1959
      %v2042 = vsel %vm2000, %v1957, %v1958
      %v2043 = vsel %vm2000, %v1956, %v1957
      %v2044 = vsel %vm2000, %v1955, %v1956
      %v2045 = vsel %vm2000, %v1954, %v1955
      %v2046 = vsel %vm2000, %v1953, %v1954
      %v2047 = vsel %vm2000, %v1952, %v1953
      %v2048 = vsel %vm2000, %v1999, %v1952
      %v2049 = vmax.f32 %v1904, %v2047
      %v2050 = vmax.f32 %v1905, %v2046
      %v2051 = vmax.f32 %v1906, %v2045
      %v2052 = vmax.f32 %v1907, %v2044
      %v2053 = vmax.f32 %v1908, %v2043
      %v2054 = vmax.f32 %v1909, %v2042
      %v2055 = vmax.f32 %v1910, %v2041
      %v2056 = vmax.f32 %v1911, %v2040
      %v2057 = vmax.f32 %v1912, %v2039
      %v2058 = vmax.f32 %v1913, %v2038
      %v2059 = vmax.f32 %v1914, %v2037
      %v2060 = vmax.f32 %v1915, %v2036
      %v2061 = vmax.f32 %v1916, %v2035
      %v2062 = vmax.f32 %v1917, %v2034
      %v2063 = vmax.f32 %v1918, %v2033
      %v2064 = vmax.f32 %v1919, %v2032
      %v2065 = vmax.f32 %v1920, %v2031
      %v2066 = vmax.f32 %v1921, %v2030
      %v2067 = vmax.f32 %v1922, %v2029
      %v2068 = vmax.f32 %v1923, %v2028
      %v2069 = vmax.f32 %v1924, %v2027
      %v2070 = vmax.f32 %v1925, %v2026
      %v2071 = vmax.f32 %v1926, %v2025
      %v2072 = vmax.f32 %v1927, %v2024
      %v2073 = vmax.f32 %v1928, %v2023
      %v2074 = vmax.f32 %v1929, %v2022
      %v2075 = vmax.f32 %v1930, %v2021
      %v2076 = vmax.f32 %v1931, %v2020
      %v2077 = vmax.f32 %v1932, %v2019
      %v2078 = vmax.f32 %v1933, %v2018
      %v2079 = vmax.f32 %v1934, %v2017
      %v2080 = vmax.f32 %v1935, %v2016
      %v2081 = vmax.f32 %v1936, %v2015
      %v2082 = vmax.f32 %v1937, %v2014
      %v2083 = vmax.f32 %v1938, %v2013
      %v2084 = vmax.f32 %v1939, %v2012
      %v2085 = vmax.f32 %v1940, %v2011
      %v2086 = vmax.f32 %v1941, %v2010
      %v2087 = vmax.f32 %v1942, %v2009
      %v2088 = vmax.f32 %v1943, %v2008
      %v2089 = vmax.f32 %v1944, %v2007
      %v2090 = vmax.f32 %v1945, %v2006
      %v2091 = vmax.f32 %v1946, %v2005
      %v2092 = vmax.f32 %v1947, %v2004
      %v2093 = vmax.f32 %v1948, %v2003
      %v2094 = vmax.f32 %v1949, %v2002
      %v2095 = vmax.f32 %v1950, %v2001
      %v2096 = vmax.f32 %v1951, %v2048
      %2097 = vst.msk [vmem:[#allocation2 + $0x30] sm:$0xff] %vm1600, %v2049
      %2098 = vst.msk [vmem:[#allocation2 + $0x38] sm:$0xff] %vm1600, %v2050
      %2099 = vst.msk [vmem:[#allocation2 + $0x40] sm:$0xff] %vm1600, %v2051
      %2100 = vst.msk [vmem:[#allocation2 + $0x48] sm:$0xff] %vm1600, %v2052
      %2101 = vst.msk [vmem:[#allocation2 + $0x50] sm:$0xff] %vm1600, %v2053
      %2102 = vst.msk [vmem:[#allocation2 + $0x58] sm:$0xff] %vm1600, %v2054
      %2103 = vst.msk [vmem:[#allocation2 + $0x60] sm:$0xff] %vm1600, %v2055
      %2104 = vst.msk [vmem:[#allocation2 + $0x68] sm:$0xff] %vm1600, %v2056
      %2105 = vst.msk [vmem:[#allocation2 + $0x70] sm:$0xff] %vm1600, %v2057
      %2106 = vst.msk [vmem:[#allocation2 + $0x78] sm:$0xff] %vm1600, %v2058
      %2107 = vst.msk [vmem:[#allocation2 + $0x80] sm:$0xff] %vm1600, %v2059
      %2108 = vst.msk [vmem:[#allocation2 + $0x88] sm:$0xff] %vm1600, %v2060
      %2109 = vst.msk [vmem:[#allocation2 + $0x90] sm:$0xff] %vm1600, %v2061
      %2110 = vst.msk [vmem:[#allocation2 + $0x98] sm:$0xff] %vm1600, %v2062
      %2111 = vst.msk [vmem:[#allocation2 + $0xa0] sm:$0xff] %vm1600, %v2063
      %2112 = vst.msk [vmem:[#allocation2 + $0xa8] sm:$0xff] %vm1600, %v2064
      %2113 = vst.msk [vmem:[#allocation2 + $0xb0] sm:$0xff] %vm1600, %v2065
      %2114 = vst.msk [vmem:[#allocation2 + $0xb8] sm:$0xff] %vm1600, %v2066
      %2115 = vst.msk [vmem:[#allocation2 + $0xc0] sm:$0xff] %vm1600, %v2067
      %2116 = vst.msk [vmem:[#allocation2 + $0xc8] sm:$0xff] %vm1600, %v2068
      %2117 = vst.msk [vmem:[#allocation2 + $0xd0] sm:$0xff] %vm1600, %v2069
      %2118 = vst.msk [vmem:[#allocation2 + $0xd8] sm:$0xff] %vm1600, %v2070
      %2119 = vst.msk [vmem:[#allocation2 + $0xe0] sm:$0xff] %vm1600, %v2071
      %2120 = vst.msk [vmem:[#allocation2 + $0xe8] sm:$0xff] %vm1600, %v2072
      %2121 = vst.msk [vmem:[#allocation2 + $0xf0] sm:$0xff] %vm1600, %v2073
      %2122 = vst.msk [vmem:[#allocation2 + $0xf8] sm:$0xff] %vm1600, %v2074
      %2123 = vst.msk [vmem:[#allocation2 + $0x100] sm:$0xff] %vm1600, %v2075
      %2124 = vst.msk [vmem:[#allocation2 + $0x108] sm:$0xff] %vm1600, %v2076
      %2125 = vst.msk [vmem:[#allocation2 + $0x110] sm:$0xff] %vm1600, %v2077
      %2126 = vst.msk [vmem:[#allocation2 + $0x118] sm:$0xff] %vm1600, %v2078
      %2127 = vst.msk [vmem:[#allocation2 + $0x120] sm:$0xff] %vm1600, %v2079
      %2128 = vst.msk [vmem:[#allocation2 + $0x128] sm:$0xff] %vm1600, %v2080
      %2129 = vst.msk [vmem:[#allocation2 + $0x130] sm:$0xff] %vm1600, %v2081
      %2130 = vst.msk [vmem:[#allocation2 + $0x138] sm:$0xff] %vm1600, %v2082
      %2131 = vst.msk [vmem:[#allocation2 + $0x140] sm:$0xff] %vm1600, %v2083
      %2132 = vst.msk [vmem:[#allocation2 + $0x148] sm:$0xff] %vm1600, %v2084
      %2133 = vst.msk [vmem:[#allocation2 + $0x150] sm:$0xff] %vm1600, %v2085
      %2134 = vst.msk [vmem:[#allocation2 + $0x158] sm:$0xff] %vm1600, %v2086
      %2135 = vst.msk [vmem:[#allocation2 + $0x160] sm:$0xff] %vm1600, %v2087
      %2136 = vst.msk [vmem:[#allocation2 + $0x168] sm:$0xff] %vm1600, %v2088
      %2137 = vst.msk [vmem:[#allocation2 + $0x170] sm:$0xff] %vm1600, %v2089
      %2138 = vst.msk [vmem:[#allocation2 + $0x178] sm:$0xff] %vm1600, %v2090
      %2139 = vst.msk [vmem:[#allocation2 + $0x180] sm:$0xff] %vm1600, %v2091
      %2140 = vst.msk [vmem:[#allocation2 + $0x188] sm:$0xff] %vm1600, %v2092
      %2141 = vst.msk [vmem:[#allocation2 + $0x190] sm:$0xff] %vm1600, %v2093
      %2142 = vst.msk [vmem:[#allocation2 + $0x198] sm:$0xff] %vm1600, %v2094
      %2143 = vst.msk [vmem:[#allocation2 + $0x1a0] sm:$0xff] %vm1600, %v2095
      %2144 = vst.msk [vmem:[#allocation2 + $0x1a8] sm:$0xff] %vm1600, %v2096
      %v2145 = vld [vmem:[#allocation2] sm:$0xff]
      %v2146 = vld [vmem:[#allocation2 + $0x8] sm:$0xff]
      %v2147 = vld [vmem:[#allocation2 + $0x10] sm:$0xff]
      %v2148 = vld [vmem:[#allocation2 + $0x18] sm:$0xff]
      %v2149 = vld [vmem:[#allocation2 + $0x20] sm:$0xff]
      %v2150 = vld [vmem:[#allocation2 + $0x28] sm:$0xff]
      %v2151 = vld [vmem:[#allocation2 + $0x30] sm:$0xff]
      %v2152 = vld [vmem:[#allocation2 + $0x38] sm:$0xff]
      %v2153 = vld [vmem:[#allocation2 + $0x40] sm:$0xff]
      %v2154 = vld [vmem:[#allocation2 + $0x48] sm:$0xff]
      %v2155 = vld [vmem:[#allocation2 + $0x50] sm:$0xff]
      %v2156 = vld [vmem:[#allocation2 + $0x58] sm:$0xff]
      %v2157 = vld [vmem:[#allocation2 + $0x60] sm:$0xff]
      %v2158 = vld [vmem:[#allocation2 + $0x68] sm:$0xff]
      %v2159 = vld [vmem:[#allocation2 + $0x70] sm:$0xff]
      %v2160 = vld [vmem:[#allocation2 + $0x78] sm:$0xff]
      %v2161 = vld [vmem:[#allocation2 + $0x80] sm:$0xff]
      %v2162 = vld [vmem:[#allocation2 + $0x88] sm:$0xff]
      %v2163 = vld [vmem:[#allocation2 + $0x90] sm:$0xff]
      %v2164 = vld [vmem:[#allocation2 + $0x98] sm:$0xff]
      %v2165 = vld [vmem:[#allocation2 + $0xa0] sm:$0xff]
      %v2166 = vld [vmem:[#allocation2 + $0xa8] sm:$0xff]
      %v2167 = vld [vmem:[#allocation2 + $0xb0] sm:$0xff]
      %v2168 = vld [vmem:[#allocation2 + $0xb8] sm:$0xff]
      %v2169 = vld [vmem:[#allocation2 + $0xc0] sm:$0xff]
      %v2170 = vld [vmem:[#allocation2 + $0xc8] sm:$0xff]
      %v2171 = vld [vmem:[#allocation2 + $0xd0] sm:$0xff]
      %v2172 = vld [vmem:[#allocation2 + $0xd8] sm:$0xff]
      %v2173 = vld [vmem:[#allocation2 + $0xe0] sm:$0xff]
      %v2174 = vld [vmem:[#allocation2 + $0xe8] sm:$0xff]
      %v2175 = vld [vmem:[#allocation2 + $0xf0] sm:$0xff]
      %v2176 = vld [vmem:[#allocation2 + $0xf8] sm:$0xff]
      %v2177 = vld [vmem:[#allocation2 + $0x100] sm:$0xff]
      %v2178 = vld [vmem:[#allocation2 + $0x108] sm:$0xff]
      %v2179 = vld [vmem:[#allocation2 + $0x110] sm:$0xff]
      %v2180 = vld [vmem:[#allocation2 + $0x118] sm:$0xff]
      %v2181 = vld [vmem:[#allocation2 + $0x120] sm:$0xff]
      %v2182 = vld [vmem:[#allocation2 + $0x128] sm:$0xff]
      %v2183 = vld [vmem:[#allocation2 + $0x130] sm:$0xff]
      %v2184 = vld [vmem:[#allocation2 + $0x138] sm:$0xff]
      %v2185 = vld [vmem:[#allocation2 + $0x140] sm:$0xff]
      %v2186 = vld [vmem:[#allocation2 + $0x148] sm:$0xff]
      %v2187 = vld [vmem:[#allocation2 + $0x150] sm:$0xff]
      %v2188 = vld [vmem:[#allocation2 + $0x158] sm:$0xff]
      %v2189 = vld [vmem:[#allocation2 + $0x160] sm:$0xff]
      %v2190 = vld [vmem:[#allocation2 + $0x168] sm:$0xff]
      %v2191 = vld [vmem:[#allocation2 + $0x170] sm:$0xff]
      %v2192 = vld [vmem:[#allocation2 + $0x178] sm:$0xff]
      %v2193 = vld [vmem:[#allocation2 + $0x180] sm:$0xff]
      %v2194 = vld [vmem:[#allocation2 + $0x188] sm:$0xff]
      %v2195 = vld [vmem:[#allocation2 + $0x190] sm:$0xff]
      %v2196 = vld [vmem:[#allocation2 + $0x198] sm:$0xff]
      %v2197 = vld [vmem:[#allocation2 + $0x1a0] sm:$0xff]
      %v2198 = vld [vmem:[#allocation2 + $0x1a8] sm:$0xff]
      %v2199 = vld [vmem:[#allocation2 + $0x1b0] sm:$0xff]
      %v2200 = vld [vmem:[#allocation2 + $0x1b8] sm:$0xff]
      %v2201 = vld [vmem:[#allocation2 + $0x1c0] sm:$0xff]
      %v2202 = vmax.f32 %v2145, %v2148
      %v2203 = vmax.f32 %v2146, %v2149
      %v2204 = vmax.f32 %v2147, %v2150
      %v2205 = vmax.f32 %v2148, %v2151
      %v2206 = vmax.f32 %v2149, %v2152
      %v2207 = vmax.f32 %v2150, %v2153
      %v2208 = vmax.f32 %v2151, %v2154
      %v2209 = vmax.f32 %v2152, %v2155
      %v2210 = vmax.f32 %v2153, %v2156
      %v2211 = vmax.f32 %v2154, %v2157
      %v2212 = vmax.f32 %v2155, %v2158
      %v2213 = vmax.f32 %v2156, %v2159
      %v2214 = vmax.f32 %v2157, %v2160
      %v2215 = vmax.f32 %v2158, %v2161
      %v2216 = vmax.f32 %v2159, %v2162
      %v2217 = vmax.f32 %v2160, %v2163
      %v2218 = vmax.f32 %v2161, %v2164
      %v2219 = vmax.f32 %v2162, %v2165
      %v2220 = vmax.f32 %v2163, %v2166
      %v2221 = vmax.f32 %v2164, %v2167
      %v2222 = vmax.f32 %v2165, %v2168
      %v2223 = vmax.f32 %v2166, %v2169
      %v2224 = vmax.f32 %v2167, %v2170
      %v2225 = vmax.f32 %v2168, %v2171
      %v2226 = vmax.f32 %v2169, %v2172
      %v2227 = vmax.f32 %v2170, %v2173
      %v2228 = vmax.f32 %v2171, %v2174
      %v2229 = vmax.f32 %v2172, %v2175
      %v2230 = vmax.f32 %v2173, %v2176
      %v2231 = vmax.f32 %v2174, %v2177
      %v2232 = vmax.f32 %v2175, %v2178
      %v2233 = vmax.f32 %v2176, %v2179
      %v2234 = vmax.f32 %v2177, %v2180
      %v2235 = vmax.f32 %v2178, %v2181
      %v2236 = vmax.f32 %v2179, %v2182
      %v2237 = vmax.f32 %v2180, %v2183
      %v2238 = vmax.f32 %v2181, %v2184
      %v2239 = vmax.f32 %v2182, %v2185
      %v2240 = vmax.f32 %v2183, %v2186
      %v2241 = vmax.f32 %v2184, %v2187
      %v2242 = vmax.f32 %v2185, %v2188
      %v2243 = vmax.f32 %v2186, %v2189
      %v2244 = vmax.f32 %v2187, %v2190
      %v2245 = vmax.f32 %v2188, %v2191
      %v2246 = vmax.f32 %v2189, %v2192
      %v2247 = vmax.f32 %v2190, %v2193
      %v2248 = vmax.f32 %v2191, %v2194
      %v2249 = vmax.f32 %v2192, %v2195
      %v2250 = vmax.f32 %v2193, %v2196
      %v2251 = vmax.f32 %v2194, %v2197
      %v2252 = vmax.f32 %v2195, %v2198
      %v2253 = vmax.f32 %v2196, %v2199
      %v2254 = vmax.f32 %v2197, %v2200
      %v2255 = vmax.f32 %v2198, %v2201
      %v2256 = vmax.f32 %v2208, %v2202
      %v2257 = vmax.f32 %v2209, %v2203
      %v2258 = vmax.f32 %v2210, %v2204
      %v2259 = vmax.f32 %v2211, %v2205
      %v2260 = vmax.f32 %v2212, %v2206
      %v2261 = vmax.f32 %v2213, %v2207
      %v2262 = vmax.f32 %v2214, %v2208
      %v2263 = vmax.f32 %v2215, %v2209
      %v2264 = vmax.f32 %v2216, %v2210
      %v2265 = vmax.f32 %v2217, %v2211
      %v2266 = vmax.f32 %v2218, %v2212
      %v2267 = vmax.f32 %v2219, %v2213
      %v2268 = vmax.f32 %v2220, %v2214
      %v2269 = vmax.f32 %v2221, %v2215
      %v2270 = vmax.f32 %v2222, %v2216
      %v2271 = vmax.f32 %v2223, %v2217
      %v2272 = vmax.f32 %v2224, %v2218
      %v2273 = vmax.f32 %v2225, %v2219
      %v2274 = vmax.f32 %v2226, %v2220
      %v2275 = vmax.f32 %v2227, %v2221
      %v2276 = vmax.f32 %v2228, %v2222
      %v2277 = vmax.f32 %v2229, %v2223
      %v2278 = vmax.f32 %v2230, %v2224
      %v2279 = vmax.f32 %v2231, %v2225
      %v2280 = vmax.f32 %v2232, %v2226
      %v2281 = vmax.f32 %v2233, %v2227
      %v2282 = vmax.f32 %v2234, %v2228
      %v2283 = vmax.f32 %v2235, %v2229
      %v2284 = vmax.f32 %v2236, %v2230
      %v2285 = vmax.f32 %v2237, %v2231
      %v2286 = vmax.f32 %v2238, %v2232
      %v2287 = vmax.f32 %v2239, %v2233
      %v2288 = vmax.f32 %v2240, %v2234
      %v2289 = vmax.f32 %v2241, %v2235
      %v2290 = vmax.f32 %v2242, %v2236
      %v2291 = vmax.f32 %v2243, %v2237
      %v2292 = vmax.f32 %v2244, %v2238
      %v2293 = vmax.f32 %v2245, %v2239
      %v2294 = vmax.f32 %v2246, %v2240
      %v2295 = vmax.f32 %v2247, %v2241
      %v2296 = vmax.f32 %v2248, %v2242
      %v2297 = vmax.f32 %v2249, %v2243
      %v2298 = vmax.f32 %v2250, %v2244
      %v2299 = vmax.f32 %v2251, %v2245
      %v2300 = vmax.f32 %v2252, %v2246
      %v2301 = vmax.f32 %v2253, %v2247
      %v2302 = vmax.f32 %v2254, %v2248
      %v2303 = vmax.f32 %v2255, %v2249
      %v2304 = vld [vmem:[#allocation2 + $0x1c8] sm:$0xff]
      %v2305 = vld [vmem:[#allocation2 + $0x1d0] sm:$0xff]
      %v2306 = vld [vmem:[#allocation2 + $0x1d8] sm:$0xff]
      %v2307 = vmax.f32 %v2256, %v2157
      %v2308 = vmax.f32 %v2257, %v2158
      %v2309 = vmax.f32 %v2258, %v2159
      %v2310 = vmax.f32 %v2259, %v2160
      %v2311 = vmax.f32 %v2260, %v2161
      %v2312 = vmax.f32 %v2261, %v2162
      %v2313 = vmax.f32 %v2262, %v2163
      %v2314 = vmax.f32 %v2263, %v2164
      %v2315 = vmax.f32 %v2264, %v2165
      %v2316 = vmax.f32 %v2265, %v2166
      %v2317 = vmax.f32 %v2266, %v2167
      %v2318 = vmax.f32 %v2267, %v2168
      %v2319 = vmax.f32 %v2268, %v2169
      %v2320 = vmax.f32 %v2269, %v2170
      %v2321 = vmax.f32 %v2270, %v2171
      %v2322 = vmax.f32 %v2271, %v2172
      %v2323 = vmax.f32 %v2272, %v2173
      %v2324 = vmax.f32 %v2273, %v2174
      %v2325 = vmax.f32 %v2274, %v2175
      %v2326 = vmax.f32 %v2275, %v2176
      %v2327 = vmax.f32 %v2276, %v2177
      %v2328 = vmax.f32 %v2277, %v2178
      %v2329 = vmax.f32 %v2278, %v2179
      %v2330 = vmax.f32 %v2279, %v2180
      %v2331 = vmax.f32 %v2280, %v2181
      %v2332 = vmax.f32 %v2281, %v2182
      %v2333 = vmax.f32 %v2282, %v2183
      %v2334 = vmax.f32 %v2283, %v2184
      %v2335 = vmax.f32 %v2284, %v2185
      %v2336 = vmax.f32 %v2285, %v2186
      %v2337 = vmax.f32 %v2286, %v2187
      %v2338 = vmax.f32 %v2287, %v2188
      %v2339 = vmax.f32 %v2288, %v2189
      %v2340 = vmax.f32 %v2289, %v2190
      %v2341 = vmax.f32 %v2290, %v2191
      %v2342 = vmax.f32 %v2291, %v2192
      %v2343 = vmax.f32 %v2292, %v2193
      %v2344 = vmax.f32 %v2293, %v2194
      %v2345 = vmax.f32 %v2294, %v2195
      %v2346 = vmax.f32 %v2295, %v2196
      %v2347 = vmax.f32 %v2296, %v2197
      %v2348 = vmax.f32 %v2297, %v2198
      %v2349 = vmax.f32 %v2298, %v2199
      %v2350 = vmax.f32 %v2299, %v2200
      %v2351 = vmax.f32 %v2300, %v2201
      %v2352 = vmax.f32 %v2301, %v2304
      %v2353 = vmax.f32 %v2302, %v2305
      %v2354 = vmax.f32 %v2303, %v2306
      %s2355 = scalar_lea.vmem %s3, 2
      %v2356 = vld [vmem:[%s2355] sm:$0x3]
      %v2358 = vsel %vm1600, %v2307, 0
      %v2361 = vsel %vm1600, %v2308, 0
      %v2364 = vsel %vm1600, %v2309, 0
      %v2367 = vsel %vm1600, %v2310, 0
      %v2370 = vsel %vm1600, %v2311, 0
      %v2373 = vsel %vm1600, %v2312, 0
      %v2376 = vsel %vm1600, %v2313, 0
      %v2379 = vsel %vm1600, %v2314, 0
      %v2382 = vsel %vm1600, %v2315, 0
      %v2385 = vsel %vm1600, %v2316, 0
      %v2388 = vsel %vm1600, %v2317, 0
      %v2391 = vsel %vm1600, %v2318, 0
      %v2394 = vsel %vm1600, %v2319, 0
      %v2397 = vsel %vm1600, %v2320, 0
      %v2400 = vsel %vm1600, %v2321, 0
      %v2403 = vsel %vm1600, %v2322, 0
      %v2406 = vsel %vm1600, %v2323, 0
      %v2409 = vsel %vm1600, %v2324, 0
      %v2412 = vsel %vm1600, %v2325, 0
      %v2415 = vsel %vm1600, %v2326, 0
      %v2418 = vsel %vm1600, %v2327, 0
      %v2421 = vsel %vm1600, %v2328, 0
      %v2424 = vsel %vm1600, %v2329, 0
      %v2427 = vsel %vm1600, %v2330, 0
      %v2430 = vsel %vm1600, %v2331, 0
      %v2433 = vsel %vm1600, %v2332, 0
      %v2436 = vsel %vm1600, %v2333, 0
      %v2439 = vsel %vm1600, %v2334, 0
      %v2442 = vsel %vm1600, %v2335, 0
      %v2445 = vsel %vm1600, %v2336, 0
      %v2448 = vsel %vm1600, %v2337, 0
      %v2451 = vsel %vm1600, %v2338, 0
      %v2454 = vsel %vm1600, %v2339, 0
      %v2457 = vsel %vm1600, %v2340, 0
      %v2460 = vsel %vm1600, %v2341, 0
      %v2463 = vsel %vm1600, %v2342, 0
      %v2466 = vsel %vm1600, %v2343, 0
      %v2469 = vsel %vm1600, %v2344, 0
      %v2472 = vsel %vm1600, %v2345, 0
      %v2475 = vsel %vm1600, %v2346, 0
      %v2478 = vsel %vm1600, %v2347, 0
      %v2481 = vsel %vm1600, %v2348, 0
      %v2484 = vsel %vm1600, %v2349, 0
      %v2487 = vsel %vm1600, %v2350, 0
      %v2490 = vsel %vm1600, %v2351, 0
      %v2493 = vsel %vm1600, %v2352, 0
      %v2496 = vsel %vm1600, %v2353, 0
      %v2499 = vsel %vm1600, %v2354, 0
      %vm2501 = vcmask 1041408
      %v2503 = vsel %vm2501, %v2356, 0
      %2505 = vmatprep.subr.mxu0 0.0
      %2506 = vmatpush1.msra.mxu0 0.0
      %2507 = vmatprep.subr.mxu0 0.0
      %2508 = vmatpush1.msra.mxu0 0.0
      %2509 = vmatprep.subr.mxu0 0.0
      %2510 = vmatpush1.msra.mxu0 0.0
      %2511 = vmatprep.subr.mxu0 0.0
      %2512 = vmatpush1.msra.mxu0 0.0
      %2513 = vmatprep.subr.mxu0 0.0
      %2514 = vmatpush1.msra.mxu0 0.0
      %2515 = vmatprep.subr.mxu0 0.0
      %2516 = vmatpush1.msra.mxu0 0.0
      %2517 = vmatprep.subr.mxu0 0.0
      %2518 = vmatpush1.msra.mxu0 0.0
      %2519 = vmatprep.subr.mxu0 0.0
      %2520 = vmatpush1.msra.mxu0 0.0
      %2521 = vmatprep.subr.mxu0 0.0
      %2522 = vmatpush1.msra.mxu0 0.0
      %2523 = vmatprep.subr.mxu0 0.0
      %2524 = vmatpush1.msra.mxu0 0.0
      %2525 = vmatprep.subr.mxu0 0.0
      %2526 = vmatpush1.msra.mxu0 0.0
      %2527 = vmatprep.subr.mxu0 0.0
      %2528 = vmatpush1.msra.mxu0 0.0
      %2529 = vmatprep.subr.mxu0 0.0
      %2530 = vmatpush1.msra.mxu0 0.0
      %2531 = vmatprep.subr.mxu0 0.0
      %2532 = vmatpush1.msra.mxu0 0.0
      %2533 = vmatprep.subr.mxu0 0.0
      %2534 = vmatpush1.msra.mxu0 0.0
      %2535 = vmatprep.subr.mxu0 0.0
      %2536 = vmatpush1.msra.mxu0 %v2503
      %2537 = vmatprep.subr.mxu0 0.0
      %2538 = vmatpush2.msra.mxu0 0.0
      %2539 = vmatprep.subr.mxu0 0.0
      %2540 = vmatpush2.msra.mxu0 0.0
      %2541 = vmatprep.subr.mxu0 0.0
      %2542 = vmatpush2.msra.mxu0 0.0
      %2543 = vmatprep.subr.mxu0 0.0
      %2544 = vmatpush2.msra.mxu0 0.0
      %2545 = vmatprep.subr.mxu0 0.0
      %2546 = vmatpush2.msra.mxu0 0.0
      %2547 = vmatprep.subr.mxu0 0.0
      %2548 = vmatpush2.msra.mxu0 0.0
      %2549 = vmatprep.subr.mxu0 0.0
      %2550 = vmatpush2.msra.mxu0 0.0
      %2551 = vmatprep.subr.mxu0 0.0
      %2552 = vmatpush2.msra.mxu0 0.0
      %2553 = vmatprep.subr.mxu0 0.0
      %2554 = vmatpush2.msra.mxu0 0.0
      %2555 = vmatprep.subr.mxu0 0.0
      %2556 = vmatpush2.msra.mxu0 0.0
      %2557 = vmatprep.subr.mxu0 0.0
      %2558 = vmatpush2.msra.mxu0 0.0
      %2559 = vmatprep.subr.mxu0 0.0
      %2560 = vmatpush2.msra.mxu0 0.0
      %2561 = vmatprep.subr.mxu0 0.0
      %2562 = vmatpush2.msra.mxu0 0.0
      %2563 = vmatprep.subr.mxu0 0.0
      %2564 = vmatpush2.msra.mxu0 0.0
      %2565 = vmatprep.subr.mxu0 0.0
      %2566 = vmatpush2.msra.mxu0 0.0
      %2567 = vmatprep.subr.mxu0 0.0
      %2568 = vmatpush2.msra.mxu0 0.0
      %2569 = vmatprep.mubr.f32.mxu0 0.0
      %2570 = vmatmul.mubr.f32.gmra.mxu0 %v2358
      %v2571 = vpop.f32.mrf.mxu0
      %v2572 = vadd.f32 0.0, %v2571
      %v2573 = vpop.f32.mrf.mxu0
      %2574 = vmatprep.mubr.f32.mxu0 0.0
      %2575 = vmatmul.mubr.f32.gmra.mxu0 %v2361
      %v2576 = vpop.f32.mrf.mxu0
      %v2577 = vadd.f32 0.0, %v2576
      %v2578 = vpop.f32.mrf.mxu0
      %2579 = vmatprep.mubr.f32.mxu0 0.0
      %2580 = vmatmul.mubr.f32.gmra.mxu0 %v2364
      %v2581 = vpop.f32.mrf.mxu0
      %v2582 = vadd.f32 0.0, %v2581
      %v2583 = vpop.f32.mrf.mxu0
      %2584 = vmatprep.mubr.f32.mxu0 0.0
      %2585 = vmatmul.mubr.f32.gmra.mxu0 %v2367
      %v2586 = vpop.f32.mrf.mxu0
      %v2587 = vadd.f32 0.0, %v2586
      %v2588 = vpop.f32.mrf.mxu0
      %2589 = vmatprep.mubr.f32.mxu0 0.0
      %2590 = vmatmul.mubr.f32.gmra.mxu0 %v2370
      %v2591 = vpop.f32.mrf.mxu0
      %v2592 = vadd.f32 0.0, %v2591
      %v2593 = vpop.f32.mrf.mxu0
      %2594 = vmatprep.mubr.f32.mxu0 0.0
      %2595 = vmatmul.mubr.f32.gmra.mxu0 %v2373
      %v2596 = vpop.f32.mrf.mxu0
      %v2597 = vadd.f32 0.0, %v2596
      %v2598 = vpop.f32.mrf.mxu0
      %2599 = vmatprep.mubr.f32.mxu0 0.0
      %2600 = vmatmul.mubr.f32.gmra.mxu0 %v2376
      %v2601 = vpop.f32.mrf.mxu0
      %v2602 = vadd.f32 0.0, %v2601
      %v2603 = vpop.f32.mrf.mxu0
      %2604 = vmatprep.mubr.f32.mxu0 0.0
      %2605 = vmatmul.mubr.f32.gmra.mxu0 %v2379
      %v2606 = vpop.f32.mrf.mxu0
      %v2607 = vadd.f32 0.0, %v2606
      %v2608 = vpop.f32.mrf.mxu0
      %2609 = vmatprep.mubr.f32.mxu0 0.0
      %2610 = vmatmul.mubr.f32.gmra.mxu0 %v2382
      %v2611 = vpop.f32.mrf.mxu0
      %v2612 = vadd.f32 0.0, %v2611
      %v2613 = vpop.f32.mrf.mxu0
      %2614 = vmatprep.mubr.f32.mxu0 0.0
      %2615 = vmatmul.mubr.f32.gmra.mxu0 %v2385
      %v2616 = vpop.f32.mrf.mxu0
      %v2617 = vadd.f32 0.0, %v2616
      %v2618 = vpop.f32.mrf.mxu0
      %2619 = vmatprep.mubr.f32.mxu0 0.0
      %2620 = vmatmul.mubr.f32.gmra.mxu0 %v2388
      %v2621 = vpop.f32.mrf.mxu0
      %v2622 = vadd.f32 0.0, %v2621
      %v2623 = vpop.f32.mrf.mxu0
      %2624 = vmatprep.mubr.f32.mxu0 0.0
      %2625 = vmatmul.mubr.f32.gmra.mxu0 %v2391
      %v2626 = vpop.f32.mrf.mxu0
      %v2627 = vadd.f32 0.0, %v2626
      %v2628 = vpop.f32.mrf.mxu0
      %2629 = vmatprep.mubr.f32.mxu0 0.0
      %2630 = vmatmul.mubr.f32.gmra.mxu0 %v2394
      %v2631 = vpop.f32.mrf.mxu0
      %v2632 = vadd.f32 0.0, %v2631
      %v2633 = vpop.f32.mrf.mxu0
      %2634 = vmatprep.mubr.f32.mxu0 0.0
      %2635 = vmatmul.mubr.f32.gmra.mxu0 %v2397
      %v2636 = vpop.f32.mrf.mxu0
      %v2637 = vadd.f32 0.0, %v2636
      %v2638 = vpop.f32.mrf.mxu0
      %2639 = vmatprep.mubr.f32.mxu0 0.0
      %2640 = vmatmul.mubr.f32.gmra.mxu0 %v2400
      %v2641 = vpop.f32.mrf.mxu0
      %v2642 = vadd.f32 0.0, %v2641
      %v2643 = vpop.f32.mrf.mxu0
      %2644 = vmatprep.mubr.f32.mxu0 0.0
      %2645 = vmatmul.mubr.f32.gmra.mxu0 %v2403
      %v2646 = vpop.f32.mrf.mxu0
      %v2647 = vadd.f32 0.0, %v2646
      %v2648 = vpop.f32.mrf.mxu0
      %2649 = vmatprep.mubr.f32.mxu0 0.0
      %2650 = vmatmul.mubr.f32.gmra.mxu0 %v2406
      %v2651 = vpop.f32.mrf.mxu0
      %v2652 = vadd.f32 0.0, %v2651
      %v2653 = vpop.f32.mrf.mxu0
      %2654 = vmatprep.mubr.f32.mxu0 0.0
      %2655 = vmatmul.mubr.f32.gmra.mxu0 %v2409
      %v2656 = vpop.f32.mrf.mxu0
      %v2657 = vadd.f32 0.0, %v2656
      %v2658 = vpop.f32.mrf.mxu0
      %2659 = vmatprep.mubr.f32.mxu0 0.0
      %2660 = vmatmul.mubr.f32.gmra.mxu0 %v2412
      %v2661 = vpop.f32.mrf.mxu0
      %v2662 = vadd.f32 0.0, %v2661
      %v2663 = vpop.f32.mrf.mxu0
      %2664 = vmatprep.mubr.f32.mxu0 0.0
      %2665 = vmatmul.mubr.f32.gmra.mxu0 %v2415
      %v2666 = vpop.f32.mrf.mxu0
      %v2667 = vadd.f32 0.0, %v2666
      %v2668 = vpop.f32.mrf.mxu0
      %2669 = vmatprep.mubr.f32.mxu0 0.0
      %2670 = vmatmul.mubr.f32.gmra.mxu0 %v2418
      %v2671 = vpop.f32.mrf.mxu0
      %v2672 = vadd.f32 0.0, %v2671
      %v2673 = vpop.f32.mrf.mxu0
      %2674 = vmatprep.mubr.f32.mxu0 0.0
      %2675 = vmatmul.mubr.f32.gmra.mxu0 %v2421
      %v2676 = vpop.f32.mrf.mxu0
      %v2677 = vadd.f32 0.0, %v2676
      %v2678 = vpop.f32.mrf.mxu0
      %2679 = vmatprep.mubr.f32.mxu0 0.0
      %2680 = vmatmul.mubr.f32.gmra.mxu0 %v2424
      %v2681 = vpop.f32.mrf.mxu0
      %v2682 = vadd.f32 0.0, %v2681
      %v2683 = vpop.f32.mrf.mxu0
      %2684 = vmatprep.mubr.f32.mxu0 0.0
      %2685 = vmatmul.mubr.f32.gmra.mxu0 %v2427
      %v2686 = vpop.f32.mrf.mxu0
      %v2687 = vadd.f32 0.0, %v2686
      %v2688 = vpop.f32.mrf.mxu0
      %2689 = vmatprep.mubr.f32.mxu0 0.0
      %2690 = vmatmul.mubr.f32.gmra.mxu0 %v2430
      %v2691 = vpop.f32.mrf.mxu0
      %v2692 = vadd.f32 0.0, %v2691
      %v2693 = vpop.f32.mrf.mxu0
      %2694 = vmatprep.mubr.f32.mxu0 0.0
      %2695 = vmatmul.mubr.f32.gmra.mxu0 %v2433
      %v2696 = vpop.f32.mrf.mxu0
      %v2697 = vadd.f32 0.0, %v2696
      %v2698 = vpop.f32.mrf.mxu0
      %2699 = vmatprep.mubr.f32.mxu0 0.0
      %2700 = vmatmul.mubr.f32.gmra.mxu0 %v2436
      %v2701 = vpop.f32.mrf.mxu0
      %v2702 = vadd.f32 0.0, %v2701
      %v2703 = vpop.f32.mrf.mxu0
      %2704 = vmatprep.mubr.f32.mxu0 0.0
      %2705 = vmatmul.mubr.f32.gmra.mxu0 %v2439
      %v2706 = vpop.f32.mrf.mxu0
      %v2707 = vadd.f32 0.0, %v2706
      %v2708 = vpop.f32.mrf.mxu0
      %2709 = vmatprep.mubr.f32.mxu0 0.0
      %2710 = vmatmul.mubr.f32.gmra.mxu0 %v2442
      %v2711 = vpop.f32.mrf.mxu0
      %v2712 = vadd.f32 0.0, %v2711
      %v2713 = vpop.f32.mrf.mxu0
      %2714 = vmatprep.mubr.f32.mxu0 0.0
      %2715 = vmatmul.mubr.f32.gmra.mxu0 %v2445
      %v2716 = vpop.f32.mrf.mxu0
      %v2717 = vadd.f32 0.0, %v2716
      %v2718 = vpop.f32.mrf.mxu0
      %2719 = vmatprep.mubr.f32.mxu0 0.0
      %2720 = vmatmul.mubr.f32.gmra.mxu0 %v2448
      %v2721 = vpop.f32.mrf.mxu0
      %v2722 = vadd.f32 0.0, %v2721
      %v2723 = vpop.f32.mrf.mxu0
      %2724 = vmatprep.mubr.f32.mxu0 0.0
      %2725 = vmatmul.mubr.f32.gmra.mxu0 %v2451
      %v2726 = vpop.f32.mrf.mxu0
      %v2727 = vadd.f32 0.0, %v2726
      %v2728 = vpop.f32.mrf.mxu0
      %2729 = vmatprep.mubr.f32.mxu0 0.0
      %2730 = vmatmul.mubr.f32.gmra.mxu0 %v2454
      %v2731 = vpop.f32.mrf.mxu0
      %v2732 = vadd.f32 0.0, %v2731
      %v2733 = vpop.f32.mrf.mxu0
      %2734 = vmatprep.mubr.f32.mxu0 0.0
      %2735 = vmatmul.mubr.f32.gmra.mxu0 %v2457
      %v2736 = vpop.f32.mrf.mxu0
      %v2737 = vadd.f32 0.0, %v2736
      %v2738 = vpop.f32.mrf.mxu0
      %2739 = vmatprep.mubr.f32.mxu0 0.0
      %2740 = vmatmul.mubr.f32.gmra.mxu0 %v2460
      %v2741 = vpop.f32.mrf.mxu0
      %v2742 = vadd.f32 0.0, %v2741
      %v2743 = vpop.f32.mrf.mxu0
      %2744 = vmatprep.mubr.f32.mxu0 0.0
      %2745 = vmatmul.mubr.f32.gmra.mxu0 %v2463
      %v2746 = vpop.f32.mrf.mxu0
      %v2747 = vadd.f32 0.0, %v2746
      %v2748 = vpop.f32.mrf.mxu0
      %2749 = vmatprep.mubr.f32.mxu0 0.0
      %2750 = vmatmul.mubr.f32.gmra.mxu0 %v2466
      %v2751 = vpop.f32.mrf.mxu0
      %v2752 = vadd.f32 0.0, %v2751
      %v2753 = vpop.f32.mrf.mxu0
      %2754 = vmatprep.mubr.f32.mxu0 0.0
      %2755 = vmatmul.mubr.f32.gmra.mxu0 %v2469
      %v2756 = vpop.f32.mrf.mxu0
      %v2757 = vadd.f32 0.0, %v2756
      %v2758 = vpop.f32.mrf.mxu0
      %2759 = vmatprep.mubr.f32.mxu0 0.0
      %2760 = vmatmul.mubr.f32.gmra.mxu0 %v2472
      %v2761 = vpop.f32.mrf.mxu0
      %v2762 = vadd.f32 0.0, %v2761
      %v2763 = vpop.f32.mrf.mxu0
      %2764 = vmatprep.mubr.f32.mxu0 0.0
      %2765 = vmatmul.mubr.f32.gmra.mxu0 %v2475
      %v2766 = vpop.f32.mrf.mxu0
      %v2767 = vadd.f32 0.0, %v2766
      %v2768 = vpop.f32.mrf.mxu0
      %2769 = vmatprep.mubr.f32.mxu0 0.0
      %2770 = vmatmul.mubr.f32.gmra.mxu0 %v2478
      %v2771 = vpop.f32.mrf.mxu0
      %v2772 = vadd.f32 0.0, %v2771
      %v2773 = vpop.f32.mrf.mxu0
      %2774 = vmatprep.mubr.f32.mxu0 0.0
      %2775 = vmatmul.mubr.f32.gmra.mxu0 %v2481
      %v2776 = vpop.f32.mrf.mxu0
      %v2777 = vadd.f32 0.0, %v2776
      %v2778 = vpop.f32.mrf.mxu0
      %2779 = vmatprep.mubr.f32.mxu0 0.0
      %2780 = vmatmul.mubr.f32.gmra.mxu0 %v2484
      %v2781 = vpop.f32.mrf.mxu0
      %v2782 = vadd.f32 0.0, %v2781
      %v2783 = vpop.f32.mrf.mxu0
      %2784 = vmatprep.mubr.f32.mxu0 0.0
      %2785 = vmatmul.mubr.f32.gmra.mxu0 %v2487
      %v2786 = vpop.f32.mrf.mxu0
      %v2787 = vadd.f32 0.0, %v2786
      %v2788 = vpop.f32.mrf.mxu0
      %2789 = vmatprep.mubr.f32.mxu0 0.0
      %2790 = vmatmul.mubr.f32.gmra.mxu0 %v2490
      %v2791 = vpop.f32.mrf.mxu0
      %v2792 = vadd.f32 0.0, %v2791
      %v2793 = vpop.f32.mrf.mxu0
      %2794 = vmatprep.mubr.f32.mxu0 0.0
      %2795 = vmatmul.mubr.f32.gmra.mxu0 %v2493
      %v2796 = vpop.f32.mrf.mxu0
      %v2797 = vadd.f32 0.0, %v2796
      %v2798 = vpop.f32.mrf.mxu0
      %2799 = vmatprep.mubr.f32.mxu0 0.0
      %2800 = vmatmul.mubr.f32.gmra.mxu0 %v2496
      %v2801 = vpop.f32.mrf.mxu0
      %v2802 = vadd.f32 0.0, %v2801
      %v2803 = vpop.f32.mrf.mxu0
      %2804 = vmatprep.mubr.f32.mxu0 0.0
      %2805 = vmatmul.mubr.f32.gmra.mxu0 %v2499
      %v2806 = vpop.f32.mrf.mxu0
      %v2807 = vadd.f32 0.0, %v2806
      %v2808 = vpop.f32.mrf.mxu0
      %2809 = vdwg.mxu0
      %v2811 = vsel %vm1600, %v497, 0
      %v2814 = vsel %vm1600, %v502, 0
      %v2817 = vsel %vm1600, %v507, 0
      %v2820 = vsel %vm1600, %v512, 0
      %v2823 = vsel %vm1600, %v517, 0
      %v2826 = vsel %vm1600, %v522, 0
      %v2829 = vsel %vm1600, %v527, 0
      %v2832 = vsel %vm1600, %v532, 0
      %v2835 = vsel %vm1600, %v537, 0
      %v2838 = vsel %vm1600, %v542, 0
      %v2841 = vsel %vm1600, %v547, 0
      %v2844 = vsel %vm1600, %v552, 0
      %v2847 = vsel %vm1600, %v557, 0
      %v2850 = vsel %vm1600, %v562, 0
      %v2853 = vsel %vm1600, %v567, 0
      %v2856 = vsel %vm1600, %v572, 0
      %v2859 = vsel %vm1600, %v577, 0
      %v2862 = vsel %vm1600, %v582, 0
      %v2865 = vsel %vm1600, %v587, 0
      %v2868 = vsel %vm1600, %v592, 0
      %v2871 = vsel %vm1600, %v597, 0
      %v2874 = vsel %vm1600, %v602, 0
      %v2877 = vsel %vm1600, %v607, 0
      %v2880 = vsel %vm1600, %v612, 0
      %v2883 = vsel %vm1600, %v617, 0
      %v2886 = vsel %vm1600, %v622, 0
      %v2889 = vsel %vm1600, %v627, 0
      %v2892 = vsel %vm1600, %v632, 0
      %v2895 = vsel %vm1600, %v637, 0
      %v2898 = vsel %vm1600, %v642, 0
      %v2901 = vsel %vm1600, %v647, 0
      %v2904 = vsel %vm1600, %v652, 0
      %v2907 = vsel %vm1600, %v657, 0
      %v2910 = vsel %vm1600, %v662, 0
      %v2913 = vsel %vm1600, %v667, 0
      %v2916 = vsel %vm1600, %v672, 0
      %v2919 = vsel %vm1600, %v677, 0
      %v2922 = vsel %vm1600, %v682, 0
      %v2925 = vsel %vm1600, %v687, 0
      %v2928 = vsel %vm1600, %v692, 0
      %v2931 = vsel %vm1600, %v697, 0
      %v2934 = vsel %vm1600, %v702, 0
      %v2937 = vsel %vm1600, %v707, 0
      %v2940 = vsel %vm1600, %v712, 0
      %v2943 = vsel %vm1600, %v717, 0
      %v2946 = vsel %vm1600, %v722, 0
      %v2949 = vsel %vm1600, %v727, 0
      %v2952 = vsel %vm1600, %v732, 0
      %v2955 = vsel %vm2501, %v1613, 0
      %2957 = vmatprep.subr.mxu0 0.0
      %2958 = vmatpush1.msra.mxu0 0.0
      %2959 = vmatprep.subr.mxu0 0.0
      %2960 = vmatpush1.msra.mxu0 0.0
      %2961 = vmatprep.subr.mxu0 0.0
      %2962 = vmatpush1.msra.mxu0 0.0
      %2963 = vmatprep.subr.mxu0 0.0
      %2964 = vmatpush1.msra.mxu0 0.0
      %2965 = vmatprep.subr.mxu0 0.0
      %2966 = vmatpush1.msra.mxu0 0.0
      %2967 = vmatprep.subr.mxu0 0.0
      %2968 = vmatpush1.msra.mxu0 0.0
      %2969 = vmatprep.subr.mxu0 0.0
      %2970 = vmatpush1.msra.mxu0 0.0
      %2971 = vmatprep.subr.mxu0 0.0
      %2972 = vmatpush1.msra.mxu0 0.0
      %2973 = vmatprep.subr.mxu0 0.0
      %2974 = vmatpush1.msra.mxu0 0.0
      %2975 = vmatprep.subr.mxu0 0.0
      %2976 = vmatpush1.msra.mxu0 0.0
      %2977 = vmatprep.subr.mxu0 0.0
      %2978 = vmatpush1.msra.mxu0 0.0
      %2979 = vmatprep.subr.mxu0 0.0
      %2980 = vmatpush1.msra.mxu0 0.0
      %2981 = vmatprep.subr.mxu0 0.0
      %2982 = vmatpush1.msra.mxu0 0.0
      %2983 = vmatprep.subr.mxu0 0.0
      %2984 = vmatpush1.msra.mxu0 0.0
      %2985 = vmatprep.subr.mxu0 0.0
      %2986 = vmatpush1.msra.mxu0 0.0
      %2987 = vmatprep.subr.mxu0 0.0
      %2988 = vmatpush1.msra.mxu0 %v2955
      %2989 = vmatprep.subr.mxu0 0.0
      %2990 = vmatpush2.msra.mxu0 0.0
      %2991 = vmatprep.subr.mxu0 0.0
      %2992 = vmatpush2.msra.mxu0 0.0
      %2993 = vmatprep.subr.mxu0 0.0
      %2994 = vmatpush2.msra.mxu0 0.0
      %2995 = vmatprep.subr.mxu0 0.0
      %2996 = vmatpush2.msra.mxu0 0.0
      %2997 = vmatprep.subr.mxu0 0.0
      %2998 = vmatpush2.msra.mxu0 0.0
      %2999 = vmatprep.subr.mxu0 0.0
      %3000 = vmatpush2.msra.mxu0 0.0
      %3001 = vmatprep.subr.mxu0 0.0
      %3002 = vmatpush2.msra.mxu0 0.0
      %3003 = vmatprep.subr.mxu0 0.0
      %3004 = vmatpush2.msra.mxu0 0.0
      %3005 = vmatprep.subr.mxu0 0.0
      %3006 = vmatpush2.msra.mxu0 0.0
      %3007 = vmatprep.subr.mxu0 0.0
      %3008 = vmatpush2.msra.mxu0 0.0
      %3009 = vmatprep.subr.mxu0 0.0
      %3010 = vmatpush2.msra.mxu0 0.0
      %3011 = vmatprep.subr.mxu0 0.0
      %3012 = vmatpush2.msra.mxu0 0.0
      %3013 = vmatprep.subr.mxu0 0.0
      %3014 = vmatpush2.msra.mxu0 0.0
      %3015 = vmatprep.subr.mxu0 0.0
      %3016 = vmatpush2.msra.mxu0 0.0
      %3017 = vmatprep.subr.mxu0 0.0
      %3018 = vmatpush2.msra.mxu0 0.0
      %3019 = vmatprep.subr.mxu0 0.0
      %3020 = vmatpush2.msra.mxu0 0.0
      %3021 = vmatprep.mubr.f32.mxu0 0.0
      %3022 = vmatmul.mubr.f32.gmra.mxu0 %v2811
      %v3023 = vpop.f32.mrf.mxu0
      %v3024 = vadd.f32 %v2572, %v3023
      %v3025 = vpop.f32.mrf.mxu0
      %3026 = vmatprep.mubr.f32.mxu0 0.0
      %3027 = vmatmul.mubr.f32.gmra.mxu0 %v2814
      %v3028 = vpop.f32.mrf.mxu0
      %v3029 = vadd.f32 %v2577, %v3028
      %v3030 = vpop.f32.mrf.mxu0
      %3031 = vmatprep.mubr.f32.mxu0 0.0
      %3032 = vmatmul.mubr.f32.gmra.mxu0 %v2817
      %v3033 = vpop.f32.mrf.mxu0
      %v3034 = vadd.f32 %v2582, %v3033
      %v3035 = vpop.f32.mrf.mxu0
      %3036 = vmatprep.mubr.f32.mxu0 0.0
      %3037 = vmatmul.mubr.f32.gmra.mxu0 %v2820
      %v3038 = vpop.f32.mrf.mxu0
      %v3039 = vadd.f32 %v2587, %v3038
      %v3040 = vpop.f32.mrf.mxu0
      %3041 = vmatprep.mubr.f32.mxu0 0.0
      %3042 = vmatmul.mubr.f32.gmra.mxu0 %v2823
      %v3043 = vpop.f32.mrf.mxu0
      %v3044 = vadd.f32 %v2592, %v3043
      %v3045 = vpop.f32.mrf.mxu0
      %3046 = vmatprep.mubr.f32.mxu0 0.0
      %3047 = vmatmul.mubr.f32.gmra.mxu0 %v2826
      %v3048 = vpop.f32.mrf.mxu0
      %v3049 = vadd.f32 %v2597, %v3048
      %v3050 = vpop.f32.mrf.mxu0
      %3051 = vmatprep.mubr.f32.mxu0 0.0
      %3052 = vmatmul.mubr.f32.gmra.mxu0 %v2829
      %v3053 = vpop.f32.mrf.mxu0
      %v3054 = vadd.f32 %v2602, %v3053
      %v3055 = vpop.f32.mrf.mxu0
      %3056 = vmatprep.mubr.f32.mxu0 0.0
      %3057 = vmatmul.mubr.f32.gmra.mxu0 %v2832
      %v3058 = vpop.f32.mrf.mxu0
      %v3059 = vadd.f32 %v2607, %v3058
      %v3060 = vpop.f32.mrf.mxu0
      %3061 = vmatprep.mubr.f32.mxu0 0.0
      %3062 = vmatmul.mubr.f32.gmra.mxu0 %v2835
      %v3063 = vpop.f32.mrf.mxu0
      %v3064 = vadd.f32 %v2612, %v3063
      %v3065 = vpop.f32.mrf.mxu0
      %3066 = vmatprep.mubr.f32.mxu0 0.0
      %3067 = vmatmul.mubr.f32.gmra.mxu0 %v2838
      %v3068 = vpop.f32.mrf.mxu0
      %v3069 = vadd.f32 %v2617, %v3068
      %v3070 = vpop.f32.mrf.mxu0
      %3071 = vmatprep.mubr.f32.mxu0 0.0
      %3072 = vmatmul.mubr.f32.gmra.mxu0 %v2841
      %v3073 = vpop.f32.mrf.mxu0
      %v3074 = vadd.f32 %v2622, %v3073
      %v3075 = vpop.f32.mrf.mxu0
      %3076 = vmatprep.mubr.f32.mxu0 0.0
      %3077 = vmatmul.mubr.f32.gmra.mxu0 %v2844
      %v3078 = vpop.f32.mrf.mxu0
      %v3079 = vadd.f32 %v2627, %v3078
      %v3080 = vpop.f32.mrf.mxu0
      %3081 = vmatprep.mubr.f32.mxu0 0.0
      %3082 = vmatmul.mubr.f32.gmra.mxu0 %v2847
      %v3083 = vpop.f32.mrf.mxu0
      %v3084 = vadd.f32 %v2632, %v3083
      %v3085 = vpop.f32.mrf.mxu0
      %3086 = vmatprep.mubr.f32.mxu0 0.0
      %3087 = vmatmul.mubr.f32.gmra.mxu0 %v2850
      %v3088 = vpop.f32.mrf.mxu0
      %v3089 = vadd.f32 %v2637, %v3088
      %v3090 = vpop.f32.mrf.mxu0
      %3091 = vmatprep.mubr.f32.mxu0 0.0
      %3092 = vmatmul.mubr.f32.gmra.mxu0 %v2853
      %v3093 = vpop.f32.mrf.mxu0
      %v3094 = vadd.f32 %v2642, %v3093
      %v3095 = vpop.f32.mrf.mxu0
      %3096 = vmatprep.mubr.f32.mxu0 0.0
      %3097 = vmatmul.mubr.f32.gmra.mxu0 %v2856
      %v3098 = vpop.f32.mrf.mxu0
      %v3099 = vadd.f32 %v2647, %v3098
      %v3100 = vpop.f32.mrf.mxu0
      %3101 = vmatprep.mubr.f32.mxu0 0.0
      %3102 = vmatmul.mubr.f32.gmra.mxu0 %v2859
      %v3103 = vpop.f32.mrf.mxu0
      %v3104 = vadd.f32 %v2652, %v3103
      %v3105 = vpop.f32.mrf.mxu0
      %3106 = vmatprep.mubr.f32.mxu0 0.0
      %3107 = vmatmul.mubr.f32.gmra.mxu0 %v2862
      %v3108 = vpop.f32.mrf.mxu0
      %v3109 = vadd.f32 %v2657, %v3108
      %v3110 = vpop.f32.mrf.mxu0
      %3111 = vmatprep.mubr.f32.mxu0 0.0
      %3112 = vmatmul.mubr.f32.gmra.mxu0 %v2865
      %v3113 = vpop.f32.mrf.mxu0
      %v3114 = vadd.f32 %v2662, %v3113
      %v3115 = vpop.f32.mrf.mxu0
      %3116 = vmatprep.mubr.f32.mxu0 0.0
      %3117 = vmatmul.mubr.f32.gmra.mxu0 %v2868
      %v3118 = vpop.f32.mrf.mxu0
      %v3119 = vadd.f32 %v2667, %v3118
      %v3120 = vpop.f32.mrf.mxu0
      %3121 = vmatprep.mubr.f32.mxu0 0.0
      %3122 = vmatmul.mubr.f32.gmra.mxu0 %v2871
      %v3123 = vpop.f32.mrf.mxu0
      %v3124 = vadd.f32 %v2672, %v3123
      %v3125 = vpop.f32.mrf.mxu0
      %3126 = vmatprep.mubr.f32.mxu0 0.0
      %3127 = vmatmul.mubr.f32.gmra.mxu0 %v2874
      %v3128 = vpop.f32.mrf.mxu0
      %v3129 = vadd.f32 %v2677, %v3128
      %v3130 = vpop.f32.mrf.mxu0
      %3131 = vmatprep.mubr.f32.mxu0 0.0
      %3132 = vmatmul.mubr.f32.gmra.mxu0 %v2877
      %v3133 = vpop.f32.mrf.mxu0
      %v3134 = vadd.f32 %v2682, %v3133
      %v3135 = vpop.f32.mrf.mxu0
      %3136 = vmatprep.mubr.f32.mxu0 0.0
      %3137 = vmatmul.mubr.f32.gmra.mxu0 %v2880
      %v3138 = vpop.f32.mrf.mxu0
      %v3139 = vadd.f32 %v2687, %v3138
      %v3140 = vpop.f32.mrf.mxu0
      %3141 = vmatprep.mubr.f32.mxu0 0.0
      %3142 = vmatmul.mubr.f32.gmra.mxu0 %v2883
      %v3143 = vpop.f32.mrf.mxu0
      %v3144 = vadd.f32 %v2692, %v3143
      %v3145 = vpop.f32.mrf.mxu0
      %3146 = vmatprep.mubr.f32.mxu0 0.0
      %3147 = vmatmul.mubr.f32.gmra.mxu0 %v2886
      %v3148 = vpop.f32.mrf.mxu0
      %v3149 = vadd.f32 %v2697, %v3148
      %v3150 = vpop.f32.mrf.mxu0
      %3151 = vmatprep.mubr.f32.mxu0 0.0
      %3152 = vmatmul.mubr.f32.gmra.mxu0 %v2889
      %v3153 = vpop.f32.mrf.mxu0
      %v3154 = vadd.f32 %v2702, %v3153
      %v3155 = vpop.f32.mrf.mxu0
      %3156 = vmatprep.mubr.f32.mxu0 0.0
      %3157 = vmatmul.mubr.f32.gmra.mxu0 %v2892
      %v3158 = vpop.f32.mrf.mxu0
      %v3159 = vadd.f32 %v2707, %v3158
      %v3160 = vpop.f32.mrf.mxu0
      %3161 = vmatprep.mubr.f32.mxu0 0.0
      %3162 = vmatmul.mubr.f32.gmra.mxu0 %v2895
      %v3163 = vpop.f32.mrf.mxu0
      %v3164 = vadd.f32 %v2712, %v3163
      %v3165 = vpop.f32.mrf.mxu0
      %3166 = vmatprep.mubr.f32.mxu0 0.0
      %3167 = vmatmul.mubr.f32.gmra.mxu0 %v2898
      %v3168 = vpop.f32.mrf.mxu0
      %v3169 = vadd.f32 %v2717, %v3168
      %v3170 = vpop.f32.mrf.mxu0
      %3171 = vmatprep.mubr.f32.mxu0 0.0
      %3172 = vmatmul.mubr.f32.gmra.mxu0 %v2901
      %v3173 = vpop.f32.mrf.mxu0
      %v3174 = vadd.f32 %v2722, %v3173
      %v3175 = vpop.f32.mrf.mxu0
      %3176 = vmatprep.mubr.f32.mxu0 0.0
      %3177 = vmatmul.mubr.f32.gmra.mxu0 %v2904
      %v3178 = vpop.f32.mrf.mxu0
      %v3179 = vadd.f32 %v2727, %v3178
      %v3180 = vpop.f32.mrf.mxu0
      %3181 = vmatprep.mubr.f32.mxu0 0.0
      %3182 = vmatmul.mubr.f32.gmra.mxu0 %v2907
      %v3183 = vpop.f32.mrf.mxu0
      %v3184 = vadd.f32 %v2732, %v3183
      %v3185 = vpop.f32.mrf.mxu0
      %3186 = vmatprep.mubr.f32.mxu0 0.0
      %3187 = vmatmul.mubr.f32.gmra.mxu0 %v2910
      %v3188 = vpop.f32.mrf.mxu0
      %v3189 = vadd.f32 %v2737, %v3188
      %v3190 = vpop.f32.mrf.mxu0
      %3191 = vmatprep.mubr.f32.mxu0 0.0
      %3192 = vmatmul.mubr.f32.gmra.mxu0 %v2913
      %v3193 = vpop.f32.mrf.mxu0
      %v3194 = vadd.f32 %v2742, %v3193
      %v3195 = vpop.f32.mrf.mxu0
      %3196 = vmatprep.mubr.f32.mxu0 0.0
      %3197 = vmatmul.mubr.f32.gmra.mxu0 %v2916
      %v3198 = vpop.f32.mrf.mxu0
      %v3199 = vadd.f32 %v2747, %v3198
      %v3200 = vpop.f32.mrf.mxu0
      %3201 = vmatprep.mubr.f32.mxu0 0.0
      %3202 = vmatmul.mubr.f32.gmra.mxu0 %v2919
      %v3203 = vpop.f32.mrf.mxu0
      %v3204 = vadd.f32 %v2752, %v3203
      %v3205 = vpop.f32.mrf.mxu0
      %3206 = vmatprep.mubr.f32.mxu0 0.0
      %3207 = vmatmul.mubr.f32.gmra.mxu0 %v2922
      %v3208 = vpop.f32.mrf.mxu0
      %v3209 = vadd.f32 %v2757, %v3208
      %v3210 = vpop.f32.mrf.mxu0
      %3211 = vmatprep.mubr.f32.mxu0 0.0
      %3212 = vmatmul.mubr.f32.gmra.mxu0 %v2925
      %v3213 = vpop.f32.mrf.mxu0
      %v3214 = vadd.f32 %v2762, %v3213
      %v3215 = vpop.f32.mrf.mxu0
      %3216 = vmatprep.mubr.f32.mxu0 0.0
      %3217 = vmatmul.mubr.f32.gmra.mxu0 %v2928
      %v3218 = vpop.f32.mrf.mxu0
      %v3219 = vadd.f32 %v2767, %v3218
      %v3220 = vpop.f32.mrf.mxu0
      %3221 = vmatprep.mubr.f32.mxu0 0.0
      %3222 = vmatmul.mubr.f32.gmra.mxu0 %v2931
      %v3223 = vpop.f32.mrf.mxu0
      %v3224 = vadd.f32 %v2772, %v3223
      %v3225 = vpop.f32.mrf.mxu0
      %3226 = vmatprep.mubr.f32.mxu0 0.0
      %3227 = vmatmul.mubr.f32.gmra.mxu0 %v2934
      %v3228 = vpop.f32.mrf.mxu0
      %v3229 = vadd.f32 %v2777, %v3228
      %v3230 = vpop.f32.mrf.mxu0
      %3231 = vmatprep.mubr.f32.mxu0 0.0
      %3232 = vmatmul.mubr.f32.gmra.mxu0 %v2937
      %v3233 = vpop.f32.mrf.mxu0
      %v3234 = vadd.f32 %v2782, %v3233
      %v3235 = vpop.f32.mrf.mxu0
      %3236 = vmatprep.mubr.f32.mxu0 0.0
      %3237 = vmatmul.mubr.f32.gmra.mxu0 %v2940
      %v3238 = vpop.f32.mrf.mxu0
      %v3239 = vadd.f32 %v2787, %v3238
      %v3240 = vpop.f32.mrf.mxu0
      %3241 = vmatprep.mubr.f32.mxu0 0.0
      %3242 = vmatmul.mubr.f32.gmra.mxu0 %v2943
      %v3243 = vpop.f32.mrf.mxu0
      %v3244 = vadd.f32 %v2792, %v3243
      %v3245 = vpop.f32.mrf.mxu0
      %3246 = vmatprep.mubr.f32.mxu0 0.0
      %3247 = vmatmul.mubr.f32.gmra.mxu0 %v2946
      %v3248 = vpop.f32.mrf.mxu0
      %v3249 = vadd.f32 %v2797, %v3248
      %v3250 = vpop.f32.mrf.mxu0
      %3251 = vmatprep.mubr.f32.mxu0 0.0
      %3252 = vmatmul.mubr.f32.gmra.mxu0 %v2949
      %v3253 = vpop.f32.mrf.mxu0
      %v3254 = vadd.f32 %v2802, %v3253
      %v3255 = vpop.f32.mrf.mxu0
      %3256 = vmatprep.mubr.f32.mxu0 0.0
      %3257 = vmatmul.mubr.f32.gmra.mxu0 %v2952
      %v3258 = vpop.f32.mrf.mxu0
      %v3259 = vadd.f32 %v2807, %v3258
      %v3260 = vpop.f32.mrf.mxu0
      %3261 = vdwg.mxu0
      %v3262 = vsel %vm1552, %v2307, -inf
      %v3263 = vsel %vm1553, %v2308, -inf
      %v3264 = vsel %vm1554, %v2309, -inf
      %v3265 = vsel %vm1555, %v2310, -inf
      %v3266 = vsel %vm1556, %v2311, -inf
      %v3267 = vsel %vm1557, %v2312, -inf
      %v3268 = vsel %vm1558, %v2313, -inf
      %v3269 = vsel %vm1559, %v2314, -inf
      %v3270 = vsel %vm1560, %v2315, -inf
      %v3271 = vsel %vm1561, %v2316, -inf
      %v3272 = vsel %vm1562, %v2317, -inf
      %v3273 = vsel %vm1563, %v2318, -inf
      %v3274 = vsel %vm1564, %v2319, -inf
      %v3275 = vsel %vm1565, %v2320, -inf
      %v3276 = vsel %vm1566, %v2321, -inf
      %v3277 = vsel %vm1567, %v2322, -inf
      %v3278 = vsel %vm1568, %v2323, -inf
      %v3279 = vsel %vm1569, %v2324, -inf
      %v3280 = vsel %vm1570, %v2325, -inf
      %v3281 = vsel %vm1571, %v2326, -inf
      %v3282 = vsel %vm1572, %v2327, -inf
      %v3283 = vsel %vm1573, %v2328, -inf
      %v3284 = vsel %vm1574, %v2329, -inf
      %v3285 = vsel %vm1575, %v2330, -inf
      %v3286 = vsel %vm1576, %v2331, -inf
      %v3287 = vsel %vm1577, %v2332, -inf
      %v3288 = vsel %vm1578, %v2333, -inf
      %v3289 = vsel %vm1579, %v2334, -inf
      %v3290 = vsel %vm1580, %v2335, -inf
      %v3291 = vsel %vm1581, %v2336, -inf
      %v3292 = vsel %vm1582, %v2337, -inf
      %v3293 = vsel %vm1583, %v2338, -inf
      %v3294 = vsel %vm1584, %v2339, -inf
      %v3295 = vsel %vm1585, %v2340, -inf
      %v3296 = vsel %vm1586, %v2341, -inf
      %v3297 = vsel %vm1587, %v2342, -inf
      %v3298 = vsel %vm1588, %v2343, -inf
      %v3299 = vsel %vm1589, %v2344, -inf
      %v3300 = vsel %vm1590, %v2345, -inf
      %v3301 = vsel %vm1591, %v2346, -inf
      %v3302 = vsel %vm1592, %v2347, -inf
      %v3303 = vsel %vm1593, %v2348, -inf
      %v3304 = vsel %vm1594, %v2349, -inf
      %v3305 = vsel %vm1595, %v2350, -inf
      %v3306 = vsel %vm1596, %v2351, -inf
      %v3307 = vsel %vm1597, %v2352, -inf
      %v3308 = vsel %vm1598, %v2353, -inf
      %v3309 = vsel %vm1599, %v2354, -inf
      %v3310 = vrot.slane %v3262, 1
      %v3311 = vrot.slane %v3263, 1
      %v3312 = vrot.slane %v3264, 1
      %v3313 = vrot.slane %v3265, 1
      %v3314 = vrot.slane %v3266, 1
      %v3315 = vrot.slane %v3267, 1
      %v3316 = vrot.slane %v3268, 1
      %v3317 = vrot.slane %v3269, 1
      %v3318 = vrot.slane %v3270, 1
      %v3319 = vrot.slane %v3271, 1
      %v3320 = vrot.slane %v3272, 1
      %v3321 = vrot.slane %v3273, 1
      %v3322 = vrot.slane %v3274, 1
      %v3323 = vrot.slane %v3275, 1
      %v3324 = vrot.slane %v3276, 1
      %v3325 = vrot.slane %v3277, 1
      %v3326 = vrot.slane %v3278, 1
      %v3327 = vrot.slane %v3279, 1
      %v3328 = vrot.slane %v3280, 1
      %v3329 = vrot.slane %v3281, 1
      %v3330 = vrot.slane %v3282, 1
      %v3331 = vrot.slane %v3283, 1
      %v3332 = vrot.slane %v3284, 1
      %v3333 = vrot.slane %v3285, 1
      %v3334 = vrot.slane %v3286, 1
      %v3335 = vrot.slane %v3287, 1
      %v3336 = vrot.slane %v3288, 1
      %v3337 = vrot.slane %v3289, 1
      %v3338 = vrot.slane %v3290, 1
      %v3339 = vrot.slane %v3291, 1
      %v3340 = vrot.slane %v3292, 1
      %v3341 = vrot.slane %v3293, 1
      %v3342 = vrot.slane %v3294, 1
      %v3343 = vrot.slane %v3295, 1
      %v3344 = vrot.slane %v3296, 1
      %v3345 = vrot.slane %v3297, 1
      %v3346 = vrot.slane %v3298, 1
      %v3347 = vrot.slane %v3299, 1
      %v3348 = vrot.slane %v3300, 1
      %v3349 = vrot.slane %v3301, 1
      %v3350 = vrot.slane %v3302, 1
      %v3351 = vrot.slane %v3303, 1
      %v3352 = vrot.slane %v3304, 1
      %v3353 = vrot.slane %v3305, 1
      %v3354 = vrot.slane %v3306, 1
      %v3355 = vrot.slane %v3307, 1
      %v3356 = vrot.slane %v3308, 1
      %v3357 = vrot.slane %v3309, 1
      %v3358 = vsel %vm1710, %v3356, %v3357
      %v3359 = vsel %vm1710, %v3355, %v3356
      %v3360 = vsel %vm1710, %v3354, %v3355
      %v3361 = vsel %vm1710, %v3353, %v3354
      %v3362 = vsel %vm1710, %v3352, %v3353
      %v3363 = vsel %vm1710, %v3351, %v3352
      %v3364 = vsel %vm1710, %v3350, %v3351
      %v3365 = vsel %vm1710, %v3349, %v3350
      %v3366 = vsel %vm1710, %v3348, %v3349
      %v3367 = vsel %vm1710, %v3347, %v3348
      %v3368 = vsel %vm1710, %v3346, %v3347
      %v3369 = vsel %vm1710, %v3345, %v3346
      %v3370 = vsel %vm1710, %v3344, %v3345
      %v3371 = vsel %vm1710, %v3343, %v3344
      %v3372 = vsel %vm1710, %v3342, %v3343
      %v3373 = vsel %vm1710, %v3341, %v3342
      %v3374 = vsel %vm1710, %v3340, %v3341
      %v3375 = vsel %vm1710, %v3339, %v3340
      %v3376 = vsel %vm1710, %v3338, %v3339
      %v3377 = vsel %vm1710, %v3337, %v3338
      %v3378 = vsel %vm1710, %v3336, %v3337
      %v3379 = vsel %vm1710, %v3335, %v3336
      %v3380 = vsel %vm1710, %v3334, %v3335
      %v3381 = vsel %vm1710, %v3333, %v3334
      %v3382 = vsel %vm1710, %v3332, %v3333
      %v3383 = vsel %vm1710, %v3331, %v3332
      %v3384 = vsel %vm1710, %v3330, %v3331
      %v3385 = vsel %vm1710, %v3329, %v3330
      %v3386 = vsel %vm1710, %v3328, %v3329
      %v3387 = vsel %vm1710, %v3327, %v3328
      %v3388 = vsel %vm1710, %v3326, %v3327
      %v3389 = vsel %vm1710, %v3325, %v3326
      %v3390 = vsel %vm1710, %v3324, %v3325
      %v3391 = vsel %vm1710, %v3323, %v3324
      %v3392 = vsel %vm1710, %v3322, %v3323
      %v3393 = vsel %vm1710, %v3321, %v3322
      %v3394 = vsel %vm1710, %v3320, %v3321
      %v3395 = vsel %vm1710, %v3319, %v3320
      %v3396 = vsel %vm1710, %v3318, %v3319
      %v3397 = vsel %vm1710, %v3317, %v3318
      %v3398 = vsel %vm1710, %v3316, %v3317
      %v3399 = vsel %vm1710, %v3315, %v3316
      %v3400 = vsel %vm1710, %v3314, %v3315
      %v3401 = vsel %vm1710, %v3313, %v3314
      %v3402 = vsel %vm1710, %v3312, %v3313
      %v3403 = vsel %vm1710, %v3311, %v3312
      %v3404 = vsel %vm1710, %v3310, %v3311
      %v3405 = vsel %vm1710, %v3357, %v3310
      %v3406 = vmax.f32 %v3262, %v3404
      %v3407 = vmax.f32 %v3263, %v3403
      %v3408 = vmax.f32 %v3264, %v3402
      %v3409 = vmax.f32 %v3265, %v3401
      %v3410 = vmax.f32 %v3266, %v3400
      %v3411 = vmax.f32 %v3267, %v3399
      %v3412 = vmax.f32 %v3268, %v3398
      %v3413 = vmax.f32 %v3269, %v3397
      %v3414 = vmax.f32 %v3270, %v3396
      %v3415 = vmax.f32 %v3271, %v3395
      %v3416 = vmax.f32 %v3272, %v3394
      %v3417 = vmax.f32 %v3273, %v3393
      %v3418 = vmax.f32 %v3274, %v3392
      %v3419 = vmax.f32 %v3275, %v3391
      %v3420 = vmax.f32 %v3276, %v3390
      %v3421 = vmax.f32 %v3277, %v3389
      %v3422 = vmax.f32 %v3278, %v3388
      %v3423 = vmax.f32 %v3279, %v3387
      %v3424 = vmax.f32 %v3280, %v3386
      %v3425 = vmax.f32 %v3281, %v3385
      %v3426 = vmax.f32 %v3282, %v3384
      %v3427 = vmax.f32 %v3283, %v3383
      %v3428 = vmax.f32 %v3284, %v3382
      %v3429 = vmax.f32 %v3285, %v3381
      %v3430 = vmax.f32 %v3286, %v3380
      %v3431 = vmax.f32 %v3287, %v3379
      %v3432 = vmax.f32 %v3288, %v3378
      %v3433 = vmax.f32 %v3289, %v3377
      %v3434 = vmax.f32 %v3290, %v3376
      %v3435 = vmax.f32 %v3291, %v3375
      %v3436 = vmax.f32 %v3292, %v3374
      %v3437 = vmax.f32 %v3293, %v3373
      %v3438 = vmax.f32 %v3294, %v3372
      %v3439 = vmax.f32 %v3295, %v3371
      %v3440 = vmax.f32 %v3296, %v3370
      %v3441 = vmax.f32 %v3297, %v3369
      %v3442 = vmax.f32 %v3298, %v3368
      %v3443 = vmax.f32 %v3299, %v3367
      %v3444 = vmax.f32 %v3300, %v3366
      %v3445 = vmax.f32 %v3301, %v3365
      %v3446 = vmax.f32 %v3302, %v3364
      %v3447 = vmax.f32 %v3303, %v3363
      %v3448 = vmax.f32 %v3304, %v3362
      %v3449 = vmax.f32 %v3305, %v3361
      %v3450 = vmax.f32 %v3306, %v3360
      %v3451 = vmax.f32 %v3307, %v3359
      %v3452 = vmax.f32 %v3308, %v3358
      %v3453 = vmax.f32 %v3309, %v3405
      %v3454 = vrot.slane %v3406, 6
      %v3455 = vrot.slane %v3407, 6
      %v3456 = vrot.slane %v3408, 6
      %v3457 = vrot.slane %v3409, 6
      %v3458 = vrot.slane %v3410, 6
      %v3459 = vrot.slane %v3411, 6
      %v3460 = vrot.slane %v3412, 6
      %v3461 = vrot.slane %v3413, 6
      %v3462 = vrot.slane %v3414, 6
      %v3463 = vrot.slane %v3415, 6
      %v3464 = vrot.slane %v3416, 6
      %v3465 = vrot.slane %v3417, 6
      %v3466 = vrot.slane %v3418, 6
      %v3467 = vrot.slane %v3419, 6
      %v3468 = vrot.slane %v3420, 6
      %v3469 = vrot.slane %v3421, 6
      %v3470 = vrot.slane %v3422, 6
      %v3471 = vrot.slane %v3423, 6
      %v3472 = vrot.slane %v3424, 6
      %v3473 = vrot.slane %v3425, 6
      %v3474 = vrot.slane %v3426, 6
      %v3475 = vrot.slane %v3427, 6
      %v3476 = vrot.slane %v3428, 6
      %v3477 = vrot.slane %v3429, 6
      %v3478 = vrot.slane %v3430, 6
      %v3479 = vrot.slane %v3431, 6
      %v3480 = vrot.slane %v3432, 6
      %v3481 = vrot.slane %v3433, 6
      %v3482 = vrot.slane %v3434, 6
      %v3483 = vrot.slane %v3435, 6
      %v3484 = vrot.slane %v3436, 6
      %v3485 = vrot.slane %v3437, 6
      %v3486 = vrot.slane %v3438, 6
      %v3487 = vrot.slane %v3439, 6
      %v3488 = vrot.slane %v3440, 6
      %v3489 = vrot.slane %v3441, 6
      %v3490 = vrot.slane %v3442, 6
      %v3491 = vrot.slane %v3443, 6
      %v3492 = vrot.slane %v3444, 6
      %v3493 = vrot.slane %v3445, 6
      %v3494 = vrot.slane %v3446, 6
      %v3495 = vrot.slane %v3447, 6
      %v3496 = vrot.slane %v3448, 6
      %v3497 = vrot.slane %v3449, 6
      %v3498 = vrot.slane %v3450, 6
      %v3499 = vrot.slane %v3451, 6
      %v3500 = vrot.slane %v3452, 6
      %v3501 = vrot.slane %v3453, 6
      %v3502 = vsel %vm1855, %v3500, %v3501
      %v3503 = vsel %vm1855, %v3499, %v3500
      %v3504 = vsel %vm1855, %v3498, %v3499
      %v3505 = vsel %vm1855, %v3497, %v3498
      %v3506 = vsel %vm1855, %v3496, %v3497
      %v3507 = vsel %vm1855, %v3495, %v3496
      %v3508 = vsel %vm1855, %v3494, %v3495
      %v3509 = vsel %vm1855, %v3493, %v3494
      %v3510 = vsel %vm1855, %v3492, %v3493
      %v3511 = vsel %vm1855, %v3491, %v3492
      %v3512 = vsel %vm1855, %v3490, %v3491
      %v3513 = vsel %vm1855, %v3489, %v3490
      %v3514 = vsel %vm1855, %v3488, %v3489
      %v3515 = vsel %vm1855, %v3487, %v3488
      %v3516 = vsel %vm1855, %v3486, %v3487
      %v3517 = vsel %vm1855, %v3485, %v3486
      %v3518 = vsel %vm1855, %v3484, %v3485
      %v3519 = vsel %vm1855, %v3483, %v3484
      %v3520 = vsel %vm1855, %v3482, %v3483
      %v3521 = vsel %vm1855, %v3481, %v3482
      %v3522 = vsel %vm1855, %v3480, %v3481
      %v3523 = vsel %vm1855, %v3479, %v3480
      %v3524 = vsel %vm1855, %v3478, %v3479
      %v3525 = vsel %vm1855, %v3477, %v3478
      %v3526 = vsel %vm1855, %v3476, %v3477
      %v3527 = vsel %vm1855, %v3475, %v3476
      %v3528 = vsel %vm1855, %v3474, %v3475
      %v3529 = vsel %vm1855, %v3473, %v3474
      %v3530 = vsel %vm1855, %v3472, %v3473
      %v3531 = vsel %vm1855, %v3471, %v3472
      %v3532 = vsel %vm1855, %v3470, %v3471
      %v3533 = vsel %vm1855, %v3469, %v3470
      %v3534 = vsel %vm1855, %v3468, %v3469
      %v3535 = vsel %vm1855, %v3467, %v3468
      %v3536 = vsel %vm1855, %v3466, %v3467
      %v3537 = vsel %vm1855, %v3465, %v3466
      %v3538 = vsel %vm1855, %v3464, %v3465
      %v3539 = vsel %vm1855, %v3463, %v3464
      %v3540 = vsel %vm1855, %v3462, %v3463
      %v3541 = vsel %vm1855, %v3461, %v3462
      %v3542 = vsel %vm1855, %v3460, %v3461
      %v3543 = vsel %vm1855, %v3459, %v3460
      %v3544 = vsel %vm1855, %v3458, %v3459
      %v3545 = vsel %vm1855, %v3457, %v3458
      %v3546 = vsel %vm1855, %v3456, %v3457
      %v3547 = vsel %vm1855, %v3455, %v3456
      %v3548 = vsel %vm1855, %v3454, %v3455
      %v3549 = vsel %vm1855, %v3501, %v3454
      %v3550 = vmax.f32 %v3406, %v3549
      %v3551 = vmax.f32 %v3407, %v3548
      %v3552 = vmax.f32 %v3408, %v3547
      %v3553 = vmax.f32 %v3409, %v3546
      %v3554 = vmax.f32 %v3410, %v3545
      %v3555 = vmax.f32 %v3411, %v3544
      %v3556 = vmax.f32 %v3412, %v3543
      %v3557 = vmax.f32 %v3413, %v3542
      %v3558 = vmax.f32 %v3414, %v3541
      %v3559 = vmax.f32 %v3415, %v3540
      %v3560 = vmax.f32 %v3416, %v3539
      %v3561 = vmax.f32 %v3417, %v3538
      %v3562 = vmax.f32 %v3418, %v3537
      %v3563 = vmax.f32 %v3419, %v3536
      %v3564 = vmax.f32 %v3420, %v3535
      %v3565 = vmax.f32 %v3421, %v3534
      %v3566 = vmax.f32 %v3422, %v3533
      %v3567 = vmax.f32 %v3423, %v3532
      %v3568 = vmax.f32 %v3424, %v3531
      %v3569 = vmax.f32 %v3425, %v3530
      %v3570 = vmax.f32 %v3426, %v3529
      %v3571 = vmax.f32 %v3427, %v3528
      %v3572 = vmax.f32 %v3428, %v3527
      %v3573 = vmax.f32 %v3429, %v3526
      %v3574 = vmax.f32 %v3430, %v3525
      %v3575 = vmax.f32 %v3431, %v3524
      %v3576 = vmax.f32 %v3432, %v3523
      %v3577 = vmax.f32 %v3433, %v3522
      %v3578 = vmax.f32 %v3434, %v3521
      %v3579 = vmax.f32 %v3435, %v3520
      %v3580 = vmax.f32 %v3436, %v3519
      %v3581 = vmax.f32 %v3437, %v3518
      %v3582 = vmax.f32 %v3438, %v3517
      %v3583 = vmax.f32 %v3439, %v3516
      %v3584 = vmax.f32 %v3440, %v3515
      %v3585 = vmax.f32 %v3441, %v3514
      %v3586 = vmax.f32 %v3442, %v3513
      %v3587 = vmax.f32 %v3443, %v3512
      %v3588 = vmax.f32 %v3444, %v3511
      %v3589 = vmax.f32 %v3445, %v3510
      %v3590 = vmax.f32 %v3446, %v3509
      %v3591 = vmax.f32 %v3447, %v3508
      %v3592 = vmax.f32 %v3448, %v3507
      %v3593 = vmax.f32 %v3449, %v3506
      %v3594 = vmax.f32 %v3450, %v3505
      %v3595 = vmax.f32 %v3451, %v3504
      %v3596 = vmax.f32 %v3452, %v3503
      %v3597 = vmax.f32 %v3453, %v3502
      %v3598 = vrot.slane %v3262, 2
      %v3599 = vrot.slane %v3263, 2
      %v3600 = vrot.slane %v3264, 2
      %v3601 = vrot.slane %v3265, 2
      %v3602 = vrot.slane %v3266, 2
      %v3603 = vrot.slane %v3267, 2
      %v3604 = vrot.slane %v3268, 2
      %v3605 = vrot.slane %v3269, 2
      %v3606 = vrot.slane %v3270, 2
      %v3607 = vrot.slane %v3271, 2
      %v3608 = vrot.slane %v3272, 2
      %v3609 = vrot.slane %v3273, 2
      %v3610 = vrot.slane %v3274, 2
      %v3611 = vrot.slane %v3275, 2
      %v3612 = vrot.slane %v3276, 2
      %v3613 = vrot.slane %v3277, 2
      %v3614 = vrot.slane %v3278, 2
      %v3615 = vrot.slane %v3279, 2
      %v3616 = vrot.slane %v3280, 2
      %v3617 = vrot.slane %v3281, 2
      %v3618 = vrot.slane %v3282, 2
      %v3619 = vrot.slane %v3283, 2
      %v3620 = vrot.slane %v3284, 2
      %v3621 = vrot.slane %v3285, 2
      %v3622 = vrot.slane %v3286, 2
      %v3623 = vrot.slane %v3287, 2
      %v3624 = vrot.slane %v3288, 2
      %v3625 = vrot.slane %v3289, 2
      %v3626 = vrot.slane %v3290, 2
      %v3627 = vrot.slane %v3291, 2
      %v3628 = vrot.slane %v3292, 2
      %v3629 = vrot.slane %v3293, 2
      %v3630 = vrot.slane %v3294, 2
      %v3631 = vrot.slane %v3295, 2
      %v3632 = vrot.slane %v3296, 2
      %v3633 = vrot.slane %v3297, 2
      %v3634 = vrot.slane %v3298, 2
      %v3635 = vrot.slane %v3299, 2
      %v3636 = vrot.slane %v3300, 2
      %v3637 = vrot.slane %v3301, 2
      %v3638 = vrot.slane %v3302, 2
      %v3639 = vrot.slane %v3303, 2
      %v3640 = vrot.slane %v3304, 2
      %v3641 = vrot.slane %v3305, 2
      %v3642 = vrot.slane %v3306, 2
      %v3643 = vrot.slane %v3307, 2
      %v3644 = vrot.slane %v3308, 2
      %v3645 = vrot.slane %v3309, 2
      %v3646 = vsel %vm2000, %v3644, %v3645
      %v3647 = vsel %vm2000, %v3643, %v3644
      %v3648 = vsel %vm2000, %v3642, %v3643
      %v3649 = vsel %vm2000, %v3641, %v3642
      %v3650 = vsel %vm2000, %v3640, %v3641
      %v3651 = vsel %vm2000, %v3639, %v3640
      %v3652 = vsel %vm2000, %v3638, %v3639
      %v3653 = vsel %vm2000, %v3637, %v3638
      %v3654 = vsel %vm2000, %v3636, %v3637
      %v3655 = vsel %vm2000, %v3635, %v3636
      %v3656 = vsel %vm2000, %v3634, %v3635
      %v3657 = vsel %vm2000, %v3633, %v3634
      %v3658 = vsel %vm2000, %v3632, %v3633
      %v3659 = vsel %vm2000, %v3631, %v3632
      %v3660 = vsel %vm2000, %v3630, %v3631
      %v3661 = vsel %vm2000, %v3629, %v3630
      %v3662 = vsel %vm2000, %v3628, %v3629
      %v3663 = vsel %vm2000, %v3627, %v3628
      %v3664 = vsel %vm2000, %v3626, %v3627
      %v3665 = vsel %vm2000, %v3625, %v3626
      %v3666 = vsel %vm2000, %v3624, %v3625
      %v3667 = vsel %vm2000, %v3623, %v3624
      %v3668 = vsel %vm2000, %v3622, %v3623
      %v3669 = vsel %vm2000, %v3621, %v3622
      %v3670 = vsel %vm2000, %v3620, %v3621
      %v3671 = vsel %vm2000, %v3619, %v3620
      %v3672 = vsel %vm2000, %v3618, %v3619
      %v3673 = vsel %vm2000, %v3617, %v3618
      %v3674 = vsel %vm2000, %v3616, %v3617
      %v3675 = vsel %vm2000, %v3615, %v3616
      %v3676 = vsel %vm2000, %v3614, %v3615
      %v3677 = vsel %vm2000, %v3613, %v3614
      %v3678 = vsel %vm2000, %v3612, %v3613
      %v3679 = vsel %vm2000, %v3611, %v3612
      %v3680 = vsel %vm2000, %v3610, %v3611
      %v3681 = vsel %vm2000, %v3609, %v3610
      %v3682 = vsel %vm2000, %v3608, %v3609
      %v3683 = vsel %vm2000, %v3607, %v3608
      %v3684 = vsel %vm2000, %v3606, %v3607
      %v3685 = vsel %vm2000, %v3605, %v3606
      %v3686 = vsel %vm2000, %v3604, %v3605
      %v3687 = vsel %vm2000, %v3603, %v3604
      %v3688 = vsel %vm2000, %v3602, %v3603
      %v3689 = vsel %vm2000, %v3601, %v3602
      %v3690 = vsel %vm2000, %v3600, %v3601
      %v3691 = vsel %vm2000, %v3599, %v3600
      %v3692 = vsel %vm2000, %v3598, %v3599
      %v3693 = vsel %vm2000, %v3645, %v3598
      %v3694 = vmax.f32 %v3550, %v3692
      %v3695 = vmax.f32 %v3551, %v3691
      %v3696 = vmax.f32 %v3552, %v3690
      %v3697 = vmax.f32 %v3553, %v3689
      %v3698 = vmax.f32 %v3554, %v3688
      %v3699 = vmax.f32 %v3555, %v3687
      %v3700 = vmax.f32 %v3556, %v3686
      %v3701 = vmax.f32 %v3557, %v3685
      %v3702 = vmax.f32 %v3558, %v3684
      %v3703 = vmax.f32 %v3559, %v3683
      %v3704 = vmax.f32 %v3560, %v3682
      %v3705 = vmax.f32 %v3561, %v3681
      %v3706 = vmax.f32 %v3562, %v3680
      %v3707 = vmax.f32 %v3563, %v3679
      %v3708 = vmax.f32 %v3564, %v3678
      %v3709 = vmax.f32 %v3565, %v3677
      %v3710 = vmax.f32 %v3566, %v3676
      %v3711 = vmax.f32 %v3567, %v3675
      %v3712 = vmax.f32 %v3568, %v3674
      %v3713 = vmax.f32 %v3569, %v3673
      %v3714 = vmax.f32 %v3570, %v3672
      %v3715 = vmax.f32 %v3571, %v3671
      %v3716 = vmax.f32 %v3572, %v3670
      %v3717 = vmax.f32 %v3573, %v3669
      %v3718 = vmax.f32 %v3574, %v3668
      %v3719 = vmax.f32 %v3575, %v3667
      %v3720 = vmax.f32 %v3576, %v3666
      %v3721 = vmax.f32 %v3577, %v3665
      %v3722 = vmax.f32 %v3578, %v3664
      %v3723 = vmax.f32 %v3579, %v3663
      %v3724 = vmax.f32 %v3580, %v3662
      %v3725 = vmax.f32 %v3581, %v3661
      %v3726 = vmax.f32 %v3582, %v3660
      %v3727 = vmax.f32 %v3583, %v3659
      %v3728 = vmax.f32 %v3584, %v3658
      %v3729 = vmax.f32 %v3585, %v3657
      %v3730 = vmax.f32 %v3586, %v3656
      %v3731 = vmax.f32 %v3587, %v3655
      %v3732 = vmax.f32 %v3588, %v3654
      %v3733 = vmax.f32 %v3589, %v3653
      %v3734 = vmax.f32 %v3590, %v3652
      %v3735 = vmax.f32 %v3591, %v3651
      %v3736 = vmax.f32 %v3592, %v3650
      %v3737 = vmax.f32 %v3593, %v3649
      %v3738 = vmax.f32 %v3594, %v3648
      %v3739 = vmax.f32 %v3595, %v3647
      %v3740 = vmax.f32 %v3596, %v3646
      %v3741 = vmax.f32 %v3597, %v3693
      %3742 = vst.msk [vmem:[#allocation2 + $0x30] sm:$0xff] %vm1600, %v3694
      %3743 = vst.msk [vmem:[#allocation2 + $0x38] sm:$0xff] %vm1600, %v3695
      %3744 = vst.msk [vmem:[#allocation2 + $0x40] sm:$0xff] %vm1600, %v3696
      %3745 = vst.msk [vmem:[#allocation2 + $0x48] sm:$0xff] %vm1600, %v3697
      %3746 = vst.msk [vmem:[#allocation2 + $0x50] sm:$0xff] %vm1600, %v3698
      %3747 = vst.msk [vmem:[#allocation2 + $0x58] sm:$0xff] %vm1600, %v3699
      %3748 = vst.msk [vmem:[#allocation2 + $0x60] sm:$0xff] %vm1600, %v3700
      %3749 = vst.msk [vmem:[#allocation2 + $0x68] sm:$0xff] %vm1600, %v3701
      %3750 = vst.msk [vmem:[#allocation2 + $0x70] sm:$0xff] %vm1600, %v3702
      %3751 = vst.msk [vmem:[#allocation2 + $0x78] sm:$0xff] %vm1600, %v3703
      %3752 = vst.msk [vmem:[#allocation2 + $0x80] sm:$0xff] %vm1600, %v3704
      %3753 = vst.msk [vmem:[#allocation2 + $0x88] sm:$0xff] %vm1600, %v3705
      %3754 = vst.msk [vmem:[#allocation2 + $0x90] sm:$0xff] %vm1600, %v3706
      %3755 = vst.msk [vmem:[#allocation2 + $0x98] sm:$0xff] %vm1600, %v3707
      %3756 = vst.msk [vmem:[#allocation2 + $0xa0] sm:$0xff] %vm1600, %v3708
      %3757 = vst.msk [vmem:[#allocation2 + $0xa8] sm:$0xff] %vm1600, %v3709
      %3758 = vst.msk [vmem:[#allocation2 + $0xb0] sm:$0xff] %vm1600, %v3710
      %3759 = vst.msk [vmem:[#allocation2 + $0xb8] sm:$0xff] %vm1600, %v3711
      %3760 = vst.msk [vmem:[#allocation2 + $0xc0] sm:$0xff] %vm1600, %v3712
      %3761 = vst.msk [vmem:[#allocation2 + $0xc8] sm:$0xff] %vm1600, %v3713
      %3762 = vst.msk [vmem:[#allocation2 + $0xd0] sm:$0xff] %vm1600, %v3714
      %3763 = vst.msk [vmem:[#allocation2 + $0xd8] sm:$0xff] %vm1600, %v3715
      %3764 = vst.msk [vmem:[#allocation2 + $0xe0] sm:$0xff] %vm1600, %v3716
      %3765 = vst.msk [vmem:[#allocation2 + $0xe8] sm:$0xff] %vm1600, %v3717
      %3766 = vst.msk [vmem:[#allocation2 + $0xf0] sm:$0xff] %vm1600, %v3718
      %3767 = vst.msk [vmem:[#allocation2 + $0xf8] sm:$0xff] %vm1600, %v3719
      %3768 = vst.msk [vmem:[#allocation2 + $0x100] sm:$0xff] %vm1600, %v3720
      %3769 = vst.msk [vmem:[#allocation2 + $0x108] sm:$0xff] %vm1600, %v3721
      %3770 = vst.msk [vmem:[#allocation2 + $0x110] sm:$0xff] %vm1600, %v3722
      %3771 = vst.msk [vmem:[#allocation2 + $0x118] sm:$0xff] %vm1600, %v3723
      %3772 = vst.msk [vmem:[#allocation2 + $0x120] sm:$0xff] %vm1600, %v3724
      %3773 = vst.msk [vmem:[#allocation2 + $0x128] sm:$0xff] %vm1600, %v3725
      %3774 = vst.msk [vmem:[#allocation2 + $0x130] sm:$0xff] %vm1600, %v3726
      %3775 = vst.msk [vmem:[#allocation2 + $0x138] sm:$0xff] %vm1600, %v3727
      %3776 = vst.msk [vmem:[#allocation2 + $0x140] sm:$0xff] %vm1600, %v3728
      %3777 = vst.msk [vmem:[#allocation2 + $0x148] sm:$0xff] %vm1600, %v3729
      %3778 = vst.msk [vmem:[#allocation2 + $0x150] sm:$0xff] %vm1600, %v3730
      %3779 = vst.msk [vmem:[#allocation2 + $0x158] sm:$0xff] %vm1600, %v3731
      %3780 = vst.msk [vmem:[#allocation2 + $0x160] sm:$0xff] %vm1600, %v3732
      %3781 = vst.msk [vmem:[#allocation2 + $0x168] sm:$0xff] %vm1600, %v3733
      %3782 = vst.msk [vmem:[#allocation2 + $0x170] sm:$0xff] %vm1600, %v3734
      %3783 = vst.msk [vmem:[#allocation2 + $0x178] sm:$0xff] %vm1600, %v3735
      %3784 = vst.msk [vmem:[#allocation2 + $0x180] sm:$0xff] %vm1600, %v3736
      %3785 = vst.msk [vmem:[#allocation2 + $0x188] sm:$0xff] %vm1600, %v3737
      %3786 = vst.msk [vmem:[#allocation2 + $0x190] sm:$0xff] %vm1600, %v3738
      %3787 = vst.msk [vmem:[#allocation2 + $0x198] sm:$0xff] %vm1600, %v3739
      %3788 = vst.msk [vmem:[#allocation2 + $0x1a0] sm:$0xff] %vm1600, %v3740
      %3789 = vst.msk [vmem:[#allocation2 + $0x1a8] sm:$0xff] %vm1600, %v3741
      %v3790 = vld [vmem:[#allocation2] sm:$0xff]
      %v3791 = vld [vmem:[#allocation2 + $0x8] sm:$0xff]
      %v3792 = vld [vmem:[#allocation2 + $0x10] sm:$0xff]
      %v3793 = vld [vmem:[#allocation2 + $0x18] sm:$0xff]
      %v3794 = vld [vmem:[#allocation2 + $0x20] sm:$0xff]
      %v3795 = vld [vmem:[#allocation2 + $0x28] sm:$0xff]
      %v3796 = vld [vmem:[#allocation2 + $0x30] sm:$0xff]
      %v3797 = vld [vmem:[#allocation2 + $0x38] sm:$0xff]
      %v3798 = vld [vmem:[#allocation2 + $0x40] sm:$0xff]
      %v3799 = vld [vmem:[#allocation2 + $0x48] sm:$0xff]
      %v3800 = vld [vmem:[#allocation2 + $0x50] sm:$0xff]
      %v3801 = vld [vmem:[#allocation2 + $0x58] sm:$0xff]
      %v3802 = vld [vmem:[#allocation2 + $0x60] sm:$0xff]
      %v3803 = vld [vmem:[#allocation2 + $0x68] sm:$0xff]
      %v3804 = vld [vmem:[#allocation2 + $0x70] sm:$0xff]
      %v3805 = vld [vmem:[#allocation2 + $0x78] sm:$0xff]
      %v3806 = vld [vmem:[#allocation2 + $0x80] sm:$0xff]
      %v3807 = vld [vmem:[#allocation2 + $0x88] sm:$0xff]
      %v3808 = vld [vmem:[#allocation2 + $0x90] sm:$0xff]
      %v3809 = vld [vmem:[#allocation2 + $0x98] sm:$0xff]
      %v3810 = vld [vmem:[#allocation2 + $0xa0] sm:$0xff]
      %v3811 = vld [vmem:[#allocation2 + $0xa8] sm:$0xff]
      %v3812 = vld [vmem:[#allocation2 + $0xb0] sm:$0xff]
      %v3813 = vld [vmem:[#allocation2 + $0xb8] sm:$0xff]
      %v3814 = vld [vmem:[#allocation2 + $0xc0] sm:$0xff]
      %v3815 = vld [vmem:[#allocation2 + $0xc8] sm:$0xff]
      %v3816 = vld [vmem:[#allocation2 + $0xd0] sm:$0xff]
      %v3817 = vld [vmem:[#allocation2 + $0xd8] sm:$0xff]
      %v3818 = vld [vmem:[#allocation2 + $0xe0] sm:$0xff]
      %v3819 = vld [vmem:[#allocation2 + $0xe8] sm:$0xff]
      %v3820 = vld [vmem:[#allocation2 + $0xf0] sm:$0xff]
      %v3821 = vld [vmem:[#allocation2 + $0xf8] sm:$0xff]
      %v3822 = vld [vmem:[#allocation2 + $0x100] sm:$0xff]
      %v3823 = vld [vmem:[#allocation2 + $0x108] sm:$0xff]
      %v3824 = vld [vmem:[#allocation2 + $0x110] sm:$0xff]
      %v3825 = vld [vmem:[#allocation2 + $0x118] sm:$0xff]
      %v3826 = vld [vmem:[#allocation2 + $0x120] sm:$0xff]
      %v3827 = vld [vmem:[#allocation2 + $0x128] sm:$0xff]
      %v3828 = vld [vmem:[#allocation2 + $0x130] sm:$0xff]
      %v3829 = vld [vmem:[#allocation2 + $0x138] sm:$0xff]
      %v3830 = vld [vmem:[#allocation2 + $0x140] sm:$0xff]
      %v3831 = vld [vmem:[#allocation2 + $0x148] sm:$0xff]
      %v3832 = vld [vmem:[#allocation2 + $0x150] sm:$0xff]
      %v3833 = vld [vmem:[#allocation2 + $0x158] sm:$0xff]
      %v3834 = vld [vmem:[#allocation2 + $0x160] sm:$0xff]
      %v3835 = vld [vmem:[#allocation2 + $0x168] sm:$0xff]
      %v3836 = vld [vmem:[#allocation2 + $0x170] sm:$0xff]
      %v3837 = vld [vmem:[#allocation2 + $0x178] sm:$0xff]
      %v3838 = vld [vmem:[#allocation2 + $0x180] sm:$0xff]
      %v3839 = vld [vmem:[#allocation2 + $0x188] sm:$0xff]
      %v3840 = vld [vmem:[#allocation2 + $0x190] sm:$0xff]
      %v3841 = vld [vmem:[#allocation2 + $0x198] sm:$0xff]
      %v3842 = vld [vmem:[#allocation2 + $0x1a0] sm:$0xff]
      %v3843 = vld [vmem:[#allocation2 + $0x1a8] sm:$0xff]
      %v3844 = vld [vmem:[#allocation2 + $0x1b0] sm:$0xff]
      %v3845 = vld [vmem:[#allocation2 + $0x1b8] sm:$0xff]
      %v3846 = vld [vmem:[#allocation2 + $0x1c0] sm:$0xff]
      %v3847 = vmax.f32 %v3790, %v3793
      %v3848 = vmax.f32 %v3791, %v3794
      %v3849 = vmax.f32 %v3792, %v3795
      %v3850 = vmax.f32 %v3793, %v3796
      %v3851 = vmax.f32 %v3794, %v3797
      %v3852 = vmax.f32 %v3795, %v3798
      %v3853 = vmax.f32 %v3796, %v3799
      %v3854 = vmax.f32 %v3797, %v3800
      %v3855 = vmax.f32 %v3798, %v3801
      %v3856 = vmax.f32 %v3799, %v3802
      %v3857 = vmax.f32 %v3800, %v3803
      %v3858 = vmax.f32 %v3801, %v3804
      %v3859 = vmax.f32 %v3802, %v3805
      %v3860 = vmax.f32 %v3803, %v3806
      %v3861 = vmax.f32 %v3804, %v3807
      %v3862 = vmax.f32 %v3805, %v3808
      %v3863 = vmax.f32 %v3806, %v3809
      %v3864 = vmax.f32 %v3807, %v3810
      %v3865 = vmax.f32 %v3808, %v3811
      %v3866 = vmax.f32 %v3809, %v3812
      %v3867 = vmax.f32 %v3810, %v3813
      %v3868 = vmax.f32 %v3811, %v3814
      %v3869 = vmax.f32 %v3812, %v3815
      %v3870 = vmax.f32 %v3813, %v3816
      %v3871 = vmax.f32 %v3814, %v3817
      %v3872 = vmax.f32 %v3815, %v3818
      %v3873 = vmax.f32 %v3816, %v3819
      %v3874 = vmax.f32 %v3817, %v3820
      %v3875 = vmax.f32 %v3818, %v3821
      %v3876 = vmax.f32 %v3819, %v3822
      %v3877 = vmax.f32 %v3820, %v3823
      %v3878 = vmax.f32 %v3821, %v3824
      %v3879 = vmax.f32 %v3822, %v3825
      %v3880 = vmax.f32 %v3823, %v3826
      %v3881 = vmax.f32 %v3824, %v3827
      %v3882 = vmax.f32 %v3825, %v3828
      %v3883 = vmax.f32 %v3826, %v3829
      %v3884 = vmax.f32 %v3827, %v3830
      %v3885 = vmax.f32 %v3828, %v3831
      %v3886 = vmax.f32 %v3829, %v3832
      %v3887 = vmax.f32 %v3830, %v3833
      %v3888 = vmax.f32 %v3831, %v3834
      %v3889 = vmax.f32 %v3832, %v3835
      %v3890 = vmax.f32 %v3833, %v3836
      %v3891 = vmax.f32 %v3834, %v3837
      %v3892 = vmax.f32 %v3835, %v3838
      %v3893 = vmax.f32 %v3836, %v3839
      %v3894 = vmax.f32 %v3837, %v3840
      %v3895 = vmax.f32 %v3838, %v3841
      %v3896 = vmax.f32 %v3839, %v3842
      %v3897 = vmax.f32 %v3840, %v3843
      %v3898 = vmax.f32 %v3841, %v3844
      %v3899 = vmax.f32 %v3842, %v3845
      %v3900 = vmax.f32 %v3843, %v3846
      %v3901 = vmax.f32 %v3853, %v3847
      %v3902 = vmax.f32 %v3854, %v3848
      %v3903 = vmax.f32 %v3855, %v3849
      %v3904 = vmax.f32 %v3856, %v3850
      %v3905 = vmax.f32 %v3857, %v3851
      %v3906 = vmax.f32 %v3858, %v3852
      %v3907 = vmax.f32 %v3859, %v3853
      %v3908 = vmax.f32 %v3860, %v3854
      %v3909 = vmax.f32 %v3861, %v3855
      %v3910 = vmax.f32 %v3862, %v3856
      %v3911 = vmax.f32 %v3863, %v3857
      %v3912 = vmax.f32 %v3864, %v3858
      %v3913 = vmax.f32 %v3865, %v3859
      %v3914 = vmax.f32 %v3866, %v3860
      %v3915 = vmax.f32 %v3867, %v3861
      %v3916 = vmax.f32 %v3868, %v3862
      %v3917 = vmax.f32 %v3869, %v3863
      %v3918 = vmax.f32 %v3870, %v3864
      %v3919 = vmax.f32 %v3871, %v3865
      %v3920 = vmax.f32 %v3872, %v3866
      %v3921 = vmax.f32 %v3873, %v3867
      %v3922 = vmax.f32 %v3874, %v3868
      %v3923 = vmax.f32 %v3875, %v3869
      %v3924 = vmax.f32 %v3876, %v3870
      %v3925 = vmax.f32 %v3877, %v3871
      %v3926 = vmax.f32 %v3878, %v3872
      %v3927 = vmax.f32 %v3879, %v3873
      %v3928 = vmax.f32 %v3880, %v3874
      %v3929 = vmax.f32 %v3881, %v3875
      %v3930 = vmax.f32 %v3882, %v3876
      %v3931 = vmax.f32 %v3883, %v3877
      %v3932 = vmax.f32 %v3884, %v3878
      %v3933 = vmax.f32 %v3885, %v3879
      %v3934 = vmax.f32 %v3886, %v3880
      %v3935 = vmax.f32 %v3887, %v3881
      %v3936 = vmax.f32 %v3888, %v3882
      %v3937 = vmax.f32 %v3889, %v3883
      %v3938 = vmax.f32 %v3890, %v3884
      %v3939 = vmax.f32 %v3891, %v3885
      %v3940 = vmax.f32 %v3892, %v3886
      %v3941 = vmax.f32 %v3893, %v3887
      %v3942 = vmax.f32 %v3894, %v3888
      %v3943 = vmax.f32 %v3895, %v3889
      %v3944 = vmax.f32 %v3896, %v3890
      %v3945 = vmax.f32 %v3897, %v3891
      %v3946 = vmax.f32 %v3898, %v3892
      %v3947 = vmax.f32 %v3899, %v3893
      %v3948 = vmax.f32 %v3900, %v3894
      %v3949 = vld [vmem:[#allocation2 + $0x1c8] sm:$0xff]
      %v3950 = vld [vmem:[#allocation2 + $0x1d0] sm:$0xff]
      %v3951 = vld [vmem:[#allocation2 + $0x1d8] sm:$0xff]
      %v3952 = vmax.f32 %v3901, %v3802
      %v3953 = vmax.f32 %v3902, %v3803
      %v3954 = vmax.f32 %v3903, %v3804
      %v3955 = vmax.f32 %v3904, %v3805
      %v3956 = vmax.f32 %v3905, %v3806
      %v3957 = vmax.f32 %v3906, %v3807
      %v3958 = vmax.f32 %v3907, %v3808
      %v3959 = vmax.f32 %v3908, %v3809
      %v3960 = vmax.f32 %v3909, %v3810
      %v3961 = vmax.f32 %v3910, %v3811
      %v3962 = vmax.f32 %v3911, %v3812
      %v3963 = vmax.f32 %v3912, %v3813
      %v3964 = vmax.f32 %v3913, %v3814
      %v3965 = vmax.f32 %v3914, %v3815
      %v3966 = vmax.f32 %v3915, %v3816
      %v3967 = vmax.f32 %v3916, %v3817
      %v3968 = vmax.f32 %v3917, %v3818
      %v3969 = vmax.f32 %v3918, %v3819
      %v3970 = vmax.f32 %v3919, %v3820
      %v3971 = vmax.f32 %v3920, %v3821
      %v3972 = vmax.f32 %v3921, %v3822
      %v3973 = vmax.f32 %v3922, %v3823
      %v3974 = vmax.f32 %v3923, %v3824
      %v3975 = vmax.f32 %v3924, %v3825
      %v3976 = vmax.f32 %v3925, %v3826
      %v3977 = vmax.f32 %v3926, %v3827
      %v3978 = vmax.f32 %v3927, %v3828
      %v3979 = vmax.f32 %v3928, %v3829
      %v3980 = vmax.f32 %v3929, %v3830
      %v3981 = vmax.f32 %v3930, %v3831
      %v3982 = vmax.f32 %v3931, %v3832
      %v3983 = vmax.f32 %v3932, %v3833
      %v3984 = vmax.f32 %v3933, %v3834
      %v3985 = vmax.f32 %v3934, %v3835
      %v3986 = vmax.f32 %v3935, %v3836
      %v3987 = vmax.f32 %v3936, %v3837
      %v3988 = vmax.f32 %v3937, %v3838
      %v3989 = vmax.f32 %v3938, %v3839
      %v3990 = vmax.f32 %v3939, %v3840
      %v3991 = vmax.f32 %v3940, %v3841
      %v3992 = vmax.f32 %v3941, %v3842
      %v3993 = vmax.f32 %v3942, %v3843
      %v3994 = vmax.f32 %v3943, %v3844
      %v3995 = vmax.f32 %v3944, %v3845
      %v3996 = vmax.f32 %v3945, %v3846
      %v3997 = vmax.f32 %v3946, %v3949
      %v3998 = vmax.f32 %v3947, %v3950
      %v3999 = vmax.f32 %v3948, %v3951
      %s4000 = scalar_lea.vmem %s3, 4
      %v4001 = vld [vmem:[%s4000] sm:$0x3]
      %v4003 = vsel %vm1600, %v3952, 0
      %v4006 = vsel %vm1600, %v3953, 0
      %v4009 = vsel %vm1600, %v3954, 0
      %v4012 = vsel %vm1600, %v3955, 0
      %v4015 = vsel %vm1600, %v3956, 0
      %v4018 = vsel %vm1600, %v3957, 0
      %v4021 = vsel %vm1600, %v3958, 0
      %v4024 = vsel %vm1600, %v3959, 0
      %v4027 = vsel %vm1600, %v3960, 0
      %v4030 = vsel %vm1600, %v3961, 0
      %v4033 = vsel %vm1600, %v3962, 0
      %v4036 = vsel %vm1600, %v3963, 0
      %v4039 = vsel %vm1600, %v3964, 0
      %v4042 = vsel %vm1600, %v3965, 0
      %v4045 = vsel %vm1600, %v3966, 0
      %v4048 = vsel %vm1600, %v3967, 0
      %v4051 = vsel %vm1600, %v3968, 0
      %v4054 = vsel %vm1600, %v3969, 0
      %v4057 = vsel %vm1600, %v3970, 0
      %v4060 = vsel %vm1600, %v3971, 0
      %v4063 = vsel %vm1600, %v3972, 0
      %v4066 = vsel %vm1600, %v3973, 0
      %v4069 = vsel %vm1600, %v3974, 0
      %v4072 = vsel %vm1600, %v3975, 0
      %v4075 = vsel %vm1600, %v3976, 0
      %v4078 = vsel %vm1600, %v3977, 0
      %v4081 = vsel %vm1600, %v3978, 0
      %v4084 = vsel %vm1600, %v3979, 0
      %v4087 = vsel %vm1600, %v3980, 0
      %v4090 = vsel %vm1600, %v3981, 0
      %v4093 = vsel %vm1600, %v3982, 0
      %v4096 = vsel %vm1600, %v3983, 0
      %v4099 = vsel %vm1600, %v3984, 0
      %v4102 = vsel %vm1600, %v3985, 0
      %v4105 = vsel %vm1600, %v3986, 0
      %v4108 = vsel %vm1600, %v3987, 0
      %v4111 = vsel %vm1600, %v3988, 0
      %v4114 = vsel %vm1600, %v3989, 0
      %v4117 = vsel %vm1600, %v3990, 0
      %v4120 = vsel %vm1600, %v3991, 0
      %v4123 = vsel %vm1600, %v3992, 0
      %v4126 = vsel %vm1600, %v3993, 0
      %v4129 = vsel %vm1600, %v3994, 0
      %v4132 = vsel %vm1600, %v3995, 0
      %v4135 = vsel %vm1600, %v3996, 0
      %v4138 = vsel %vm1600, %v3997, 0
      %v4141 = vsel %vm1600, %v3998, 0
      %v4144 = vsel %vm1600, %v3999, 0
      %v4147 = vsel %vm2501, %v4001, 0
      %4149 = vmatprep.subr.mxu0 0.0
      %4150 = vmatpush1.msra.mxu0 0.0
      %4151 = vmatprep.subr.mxu0 0.0
      %4152 = vmatpush1.msra.mxu0 0.0
      %4153 = vmatprep.subr.mxu0 0.0
      %4154 = vmatpush1.msra.mxu0 0.0
      %4155 = vmatprep.subr.mxu0 0.0
      %4156 = vmatpush1.msra.mxu0 0.0
      %4157 = vmatprep.subr.mxu0 0.0
      %4158 = vmatpush1.msra.mxu0 0.0
      %4159 = vmatprep.subr.mxu0 0.0
      %4160 = vmatpush1.msra.mxu0 0.0
      %4161 = vmatprep.subr.mxu0 0.0
      %4162 = vmatpush1.msra.mxu0 0.0
      %4163 = vmatprep.subr.mxu0 0.0
      %4164 = vmatpush1.msra.mxu0 0.0
      %4165 = vmatprep.subr.mxu0 0.0
      %4166 = vmatpush1.msra.mxu0 0.0
      %4167 = vmatprep.subr.mxu0 0.0
      %4168 = vmatpush1.msra.mxu0 0.0
      %4169 = vmatprep.subr.mxu0 0.0
      %4170 = vmatpush1.msra.mxu0 0.0
      %4171 = vmatprep.subr.mxu0 0.0
      %4172 = vmatpush1.msra.mxu0 0.0
      %4173 = vmatprep.subr.mxu0 0.0
      %4174 = vmatpush1.msra.mxu0 0.0
      %4175 = vmatprep.subr.mxu0 0.0
      %4176 = vmatpush1.msra.mxu0 0.0
      %4177 = vmatprep.subr.mxu0 0.0
      %4178 = vmatpush1.msra.mxu0 0.0
      %4179 = vmatprep.subr.mxu0 0.0
      %4180 = vmatpush1.msra.mxu0 %v4147
      %4181 = vmatprep.subr.mxu0 0.0
      %4182 = vmatpush2.msra.mxu0 0.0
      %4183 = vmatprep.subr.mxu0 0.0
      %4184 = vmatpush2.msra.mxu0 0.0
      %4185 = vmatprep.subr.mxu0 0.0
      %4186 = vmatpush2.msra.mxu0 0.0
      %4187 = vmatprep.subr.mxu0 0.0
      %4188 = vmatpush2.msra.mxu0 0.0
      %4189 = vmatprep.subr.mxu0 0.0
      %4190 = vmatpush2.msra.mxu0 0.0
      %4191 = vmatprep.subr.mxu0 0.0
      %4192 = vmatpush2.msra.mxu0 0.0
      %4193 = vmatprep.subr.mxu0 0.0
      %4194 = vmatpush2.msra.mxu0 0.0
      %4195 = vmatprep.subr.mxu0 0.0
      %4196 = vmatpush2.msra.mxu0 0.0
      %4197 = vmatprep.subr.mxu0 0.0
      %4198 = vmatpush2.msra.mxu0 0.0
      %4199 = vmatprep.subr.mxu0 0.0
      %4200 = vmatpush2.msra.mxu0 0.0
      %4201 = vmatprep.subr.mxu0 0.0
      %4202 = vmatpush2.msra.mxu0 0.0
      %4203 = vmatprep.subr.mxu0 0.0
      %4204 = vmatpush2.msra.mxu0 0.0
      %4205 = vmatprep.subr.mxu0 0.0
      %4206 = vmatpush2.msra.mxu0 0.0
      %4207 = vmatprep.subr.mxu0 0.0
      %4208 = vmatpush2.msra.mxu0 0.0
      %4209 = vmatprep.subr.mxu0 0.0
      %4210 = vmatpush2.msra.mxu0 0.0
      %4211 = vmatprep.subr.mxu0 0.0
      %4212 = vmatpush2.msra.mxu0 0.0
      %4213 = vmatprep.mubr.f32.mxu0 0.0
      %4214 = vmatmul.mubr.f32.gmra.mxu0 %v4003
      %v4215 = vpop.f32.mrf.mxu0
      %v4216 = vadd.f32 0.0, %v4215
      %v4217 = vpop.f32.mrf.mxu0
      %4218 = vmatprep.mubr.f32.mxu0 0.0
      %4219 = vmatmul.mubr.f32.gmra.mxu0 %v4006
      %v4220 = vpop.f32.mrf.mxu0
      %v4221 = vadd.f32 0.0, %v4220
      %v4222 = vpop.f32.mrf.mxu0
      %4223 = vmatprep.mubr.f32.mxu0 0.0
      %4224 = vmatmul.mubr.f32.gmra.mxu0 %v4009
      %v4225 = vpop.f32.mrf.mxu0
      %v4226 = vadd.f32 0.0, %v4225
      %v4227 = vpop.f32.mrf.mxu0
      %4228 = vmatprep.mubr.f32.mxu0 0.0
      %4229 = vmatmul.mubr.f32.gmra.mxu0 %v4012
      %v4230 = vpop.f32.mrf.mxu0
      %v4231 = vadd.f32 0.0, %v4230
      %v4232 = vpop.f32.mrf.mxu0
      %4233 = vmatprep.mubr.f32.mxu0 0.0
      %4234 = vmatmul.mubr.f32.gmra.mxu0 %v4015
      %v4235 = vpop.f32.mrf.mxu0
      %v4236 = vadd.f32 0.0, %v4235
      %v4237 = vpop.f32.mrf.mxu0
      %4238 = vmatprep.mubr.f32.mxu0 0.0
      %4239 = vmatmul.mubr.f32.gmra.mxu0 %v4018
      %v4240 = vpop.f32.mrf.mxu0
      %v4241 = vadd.f32 0.0, %v4240
      %v4242 = vpop.f32.mrf.mxu0
      %4243 = vmatprep.mubr.f32.mxu0 0.0
      %4244 = vmatmul.mubr.f32.gmra.mxu0 %v4021
      %v4245 = vpop.f32.mrf.mxu0
      %v4246 = vadd.f32 0.0, %v4245
      %v4247 = vpop.f32.mrf.mxu0
      %4248 = vmatprep.mubr.f32.mxu0 0.0
      %4249 = vmatmul.mubr.f32.gmra.mxu0 %v4024
      %v4250 = vpop.f32.mrf.mxu0
      %v4251 = vadd.f32 0.0, %v4250
      %v4252 = vpop.f32.mrf.mxu0
      %4253 = vmatprep.mubr.f32.mxu0 0.0
      %4254 = vmatmul.mubr.f32.gmra.mxu0 %v4027
      %v4255 = vpop.f32.mrf.mxu0
      %v4256 = vadd.f32 0.0, %v4255
      %v4257 = vpop.f32.mrf.mxu0
      %4258 = vmatprep.mubr.f32.mxu0 0.0
      %4259 = vmatmul.mubr.f32.gmra.mxu0 %v4030
      %v4260 = vpop.f32.mrf.mxu0
      %v4261 = vadd.f32 0.0, %v4260
      %v4262 = vpop.f32.mrf.mxu0
      %4263 = vmatprep.mubr.f32.mxu0 0.0
      %4264 = vmatmul.mubr.f32.gmra.mxu0 %v4033
      %v4265 = vpop.f32.mrf.mxu0
      %v4266 = vadd.f32 0.0, %v4265
      %v4267 = vpop.f32.mrf.mxu0
      %4268 = vmatprep.mubr.f32.mxu0 0.0
      %4269 = vmatmul.mubr.f32.gmra.mxu0 %v4036
      %v4270 = vpop.f32.mrf.mxu0
      %v4271 = vadd.f32 0.0, %v4270
      %v4272 = vpop.f32.mrf.mxu0
      %4273 = vmatprep.mubr.f32.mxu0 0.0
      %4274 = vmatmul.mubr.f32.gmra.mxu0 %v4039
      %v4275 = vpop.f32.mrf.mxu0
      %v4276 = vadd.f32 0.0, %v4275
      %v4277 = vpop.f32.mrf.mxu0
      %4278 = vmatprep.mubr.f32.mxu0 0.0
      %4279 = vmatmul.mubr.f32.gmra.mxu0 %v4042
      %v4280 = vpop.f32.mrf.mxu0
      %v4281 = vadd.f32 0.0, %v4280
      %v4282 = vpop.f32.mrf.mxu0
      %4283 = vmatprep.mubr.f32.mxu0 0.0
      %4284 = vmatmul.mubr.f32.gmra.mxu0 %v4045
      %v4285 = vpop.f32.mrf.mxu0
      %v4286 = vadd.f32 0.0, %v4285
      %v4287 = vpop.f32.mrf.mxu0
      %4288 = vmatprep.mubr.f32.mxu0 0.0
      %4289 = vmatmul.mubr.f32.gmra.mxu0 %v4048
      %v4290 = vpop.f32.mrf.mxu0
      %v4291 = vadd.f32 0.0, %v4290
      %v4292 = vpop.f32.mrf.mxu0
      %4293 = vmatprep.mubr.f32.mxu0 0.0
      %4294 = vmatmul.mubr.f32.gmra.mxu0 %v4051
      %v4295 = vpop.f32.mrf.mxu0
      %v4296 = vadd.f32 0.0, %v4295
      %v4297 = vpop.f32.mrf.mxu0
      %4298 = vmatprep.mubr.f32.mxu0 0.0
      %4299 = vmatmul.mubr.f32.gmra.mxu0 %v4054
      %v4300 = vpop.f32.mrf.mxu0
      %v4301 = vadd.f32 0.0, %v4300
      %v4302 = vpop.f32.mrf.mxu0
      %4303 = vmatprep.mubr.f32.mxu0 0.0
      %4304 = vmatmul.mubr.f32.gmra.mxu0 %v4057
      %v4305 = vpop.f32.mrf.mxu0
      %v4306 = vadd.f32 0.0, %v4305
      %v4307 = vpop.f32.mrf.mxu0
      %4308 = vmatprep.mubr.f32.mxu0 0.0
      %4309 = vmatmul.mubr.f32.gmra.mxu0 %v4060
      %v4310 = vpop.f32.mrf.mxu0
      %v4311 = vadd.f32 0.0, %v4310
      %v4312 = vpop.f32.mrf.mxu0
      %4313 = vmatprep.mubr.f32.mxu0 0.0
      %4314 = vmatmul.mubr.f32.gmra.mxu0 %v4063
      %v4315 = vpop.f32.mrf.mxu0
      %v4316 = vadd.f32 0.0, %v4315
      %v4317 = vpop.f32.mrf.mxu0
      %4318 = vmatprep.mubr.f32.mxu0 0.0
      %4319 = vmatmul.mubr.f32.gmra.mxu0 %v4066
      %v4320 = vpop.f32.mrf.mxu0
      %v4321 = vadd.f32 0.0, %v4320
      %v4322 = vpop.f32.mrf.mxu0
      %4323 = vmatprep.mubr.f32.mxu0 0.0
      %4324 = vmatmul.mubr.f32.gmra.mxu0 %v4069
      %v4325 = vpop.f32.mrf.mxu0
      %v4326 = vadd.f32 0.0, %v4325
      %v4327 = vpop.f32.mrf.mxu0
      %4328 = vmatprep.mubr.f32.mxu0 0.0
      %4329 = vmatmul.mubr.f32.gmra.mxu0 %v4072
      %v4330 = vpop.f32.mrf.mxu0
      %v4331 = vadd.f32 0.0, %v4330
      %v4332 = vpop.f32.mrf.mxu0
      %4333 = vmatprep.mubr.f32.mxu0 0.0
      %4334 = vmatmul.mubr.f32.gmra.mxu0 %v4075
      %v4335 = vpop.f32.mrf.mxu0
      %v4336 = vadd.f32 0.0, %v4335
      %v4337 = vpop.f32.mrf.mxu0
      %4338 = vmatprep.mubr.f32.mxu0 0.0
      %4339 = vmatmul.mubr.f32.gmra.mxu0 %v4078
      %v4340 = vpop.f32.mrf.mxu0
      %v4341 = vadd.f32 0.0, %v4340
      %v4342 = vpop.f32.mrf.mxu0
      %4343 = vmatprep.mubr.f32.mxu0 0.0
      %4344 = vmatmul.mubr.f32.gmra.mxu0 %v4081
      %v4345 = vpop.f32.mrf.mxu0
      %v4346 = vadd.f32 0.0, %v4345
      %v4347 = vpop.f32.mrf.mxu0
      %4348 = vmatprep.mubr.f32.mxu0 0.0
      %4349 = vmatmul.mubr.f32.gmra.mxu0 %v4084
      %v4350 = vpop.f32.mrf.mxu0
      %v4351 = vadd.f32 0.0, %v4350
      %v4352 = vpop.f32.mrf.mxu0
      %4353 = vmatprep.mubr.f32.mxu0 0.0
      %4354 = vmatmul.mubr.f32.gmra.mxu0 %v4087
      %v4355 = vpop.f32.mrf.mxu0
      %v4356 = vadd.f32 0.0, %v4355
      %v4357 = vpop.f32.mrf.mxu0
      %4358 = vmatprep.mubr.f32.mxu0 0.0
      %4359 = vmatmul.mubr.f32.gmra.mxu0 %v4090
      %v4360 = vpop.f32.mrf.mxu0
      %v4361 = vadd.f32 0.0, %v4360
      %v4362 = vpop.f32.mrf.mxu0
      %4363 = vmatprep.mubr.f32.mxu0 0.0
      %4364 = vmatmul.mubr.f32.gmra.mxu0 %v4093
      %v4365 = vpop.f32.mrf.mxu0
      %v4366 = vadd.f32 0.0, %v4365
      %v4367 = vpop.f32.mrf.mxu0
      %4368 = vmatprep.mubr.f32.mxu0 0.0
      %4369 = vmatmul.mubr.f32.gmra.mxu0 %v4096
      %v4370 = vpop.f32.mrf.mxu0
      %v4371 = vadd.f32 0.0, %v4370
      %v4372 = vpop.f32.mrf.mxu0
      %4373 = vmatprep.mubr.f32.mxu0 0.0
      %4374 = vmatmul.mubr.f32.gmra.mxu0 %v4099
      %v4375 = vpop.f32.mrf.mxu0
      %v4376 = vadd.f32 0.0, %v4375
      %v4377 = vpop.f32.mrf.mxu0
      %4378 = vmatprep.mubr.f32.mxu0 0.0
      %4379 = vmatmul.mubr.f32.gmra.mxu0 %v4102
      %v4380 = vpop.f32.mrf.mxu0
      %v4381 = vadd.f32 0.0, %v4380
      %v4382 = vpop.f32.mrf.mxu0
      %4383 = vmatprep.mubr.f32.mxu0 0.0
      %4384 = vmatmul.mubr.f32.gmra.mxu0 %v4105
      %v4385 = vpop.f32.mrf.mxu0
      %v4386 = vadd.f32 0.0, %v4385
      %v4387 = vpop.f32.mrf.mxu0
      %4388 = vmatprep.mubr.f32.mxu0 0.0
      %4389 = vmatmul.mubr.f32.gmra.mxu0 %v4108
      %v4390 = vpop.f32.mrf.mxu0
      %v4391 = vadd.f32 0.0, %v4390
      %v4392 = vpop.f32.mrf.mxu0
      %4393 = vmatprep.mubr.f32.mxu0 0.0
      %4394 = vmatmul.mubr.f32.gmra.mxu0 %v4111
      %v4395 = vpop.f32.mrf.mxu0
      %v4396 = vadd.f32 0.0, %v4395
      %v4397 = vpop.f32.mrf.mxu0
      %4398 = vmatprep.mubr.f32.mxu0 0.0
      %4399 = vmatmul.mubr.f32.gmra.mxu0 %v4114
      %v4400 = vpop.f32.mrf.mxu0
      %v4401 = vadd.f32 0.0, %v4400
      %v4402 = vpop.f32.mrf.mxu0
      %4403 = vmatprep.mubr.f32.mxu0 0.0
      %4404 = vmatmul.mubr.f32.gmra.mxu0 %v4117
      %v4405 = vpop.f32.mrf.mxu0
      %v4406 = vadd.f32 0.0, %v4405
      %v4407 = vpop.f32.mrf.mxu0
      %4408 = vmatprep.mubr.f32.mxu0 0.0
      %4409 = vmatmul.mubr.f32.gmra.mxu0 %v4120
      %v4410 = vpop.f32.mrf.mxu0
      %v4411 = vadd.f32 0.0, %v4410
      %v4412 = vpop.f32.mrf.mxu0
      %4413 = vmatprep.mubr.f32.mxu0 0.0
      %4414 = vmatmul.mubr.f32.gmra.mxu0 %v4123
      %v4415 = vpop.f32.mrf.mxu0
      %v4416 = vadd.f32 0.0, %v4415
      %v4417 = vpop.f32.mrf.mxu0
      %4418 = vmatprep.mubr.f32.mxu0 0.0
      %4419 = vmatmul.mubr.f32.gmra.mxu0 %v4126
      %v4420 = vpop.f32.mrf.mxu0
      %v4421 = vadd.f32 0.0, %v4420
      %v4422 = vpop.f32.mrf.mxu0
      %4423 = vmatprep.mubr.f32.mxu0 0.0
      %4424 = vmatmul.mubr.f32.gmra.mxu0 %v4129
      %v4425 = vpop.f32.mrf.mxu0
      %v4426 = vadd.f32 0.0, %v4425
      %v4427 = vpop.f32.mrf.mxu0
      %4428 = vmatprep.mubr.f32.mxu0 0.0
      %4429 = vmatmul.mubr.f32.gmra.mxu0 %v4132
      %v4430 = vpop.f32.mrf.mxu0
      %v4431 = vadd.f32 0.0, %v4430
      %v4432 = vpop.f32.mrf.mxu0
      %4433 = vmatprep.mubr.f32.mxu0 0.0
      %4434 = vmatmul.mubr.f32.gmra.mxu0 %v4135
      %v4435 = vpop.f32.mrf.mxu0
      %v4436 = vadd.f32 0.0, %v4435
      %v4437 = vpop.f32.mrf.mxu0
      %4438 = vmatprep.mubr.f32.mxu0 0.0
      %4439 = vmatmul.mubr.f32.gmra.mxu0 %v4138
      %v4440 = vpop.f32.mrf.mxu0
      %v4441 = vadd.f32 0.0, %v4440
      %v4442 = vpop.f32.mrf.mxu0
      %4443 = vmatprep.mubr.f32.mxu0 0.0
      %4444 = vmatmul.mubr.f32.gmra.mxu0 %v4141
      %v4445 = vpop.f32.mrf.mxu0
      %v4446 = vadd.f32 0.0, %v4445
      %v4447 = vpop.f32.mrf.mxu0
      %4448 = vmatprep.mubr.f32.mxu0 0.0
      %4449 = vmatmul.mubr.f32.gmra.mxu0 %v4144
      %v4450 = vpop.f32.mrf.mxu0
      %v4451 = vadd.f32 0.0, %v4450
      %v4452 = vpop.f32.mrf.mxu0
      %4453 = vdwg.mxu0
      %v4454 = vadd.f32 %v3024, %v4216
      %v4455 = vadd.f32 %v3029, %v4221
      %v4456 = vadd.f32 %v3034, %v4226
      %v4457 = vadd.f32 %v3039, %v4231
      %v4458 = vadd.f32 %v3044, %v4236
      %v4459 = vadd.f32 %v3049, %v4241
      %v4460 = vadd.f32 %v3054, %v4246
      %v4461 = vadd.f32 %v3059, %v4251
      %v4462 = vadd.f32 %v3064, %v4256
      %v4463 = vadd.f32 %v3069, %v4261
      %v4464 = vadd.f32 %v3074, %v4266
      %v4465 = vadd.f32 %v3079, %v4271
      %v4466 = vadd.f32 %v3084, %v4276
      %v4467 = vadd.f32 %v3089, %v4281
      %v4468 = vadd.f32 %v3094, %v4286
      %v4469 = vadd.f32 %v3099, %v4291
      %v4470 = vadd.f32 %v3104, %v4296
      %v4471 = vadd.f32 %v3109, %v4301
      %v4472 = vadd.f32 %v3114, %v4306
      %v4473 = vadd.f32 %v3119, %v4311
      %v4474 = vadd.f32 %v3124, %v4316
      %v4475 = vadd.f32 %v3129, %v4321
      %v4476 = vadd.f32 %v3134, %v4326
      %v4477 = vadd.f32 %v3139, %v4331
      %v4478 = vadd.f32 %v3144, %v4336
      %v4479 = vadd.f32 %v3149, %v4341
      %v4480 = vadd.f32 %v3154, %v4346
      %v4481 = vadd.f32 %v3159, %v4351
      %v4482 = vadd.f32 %v3164, %v4356
      %v4483 = vadd.f32 %v3169, %v4361
      %v4484 = vadd.f32 %v3174, %v4366
      %v4485 = vadd.f32 %v3179, %v4371
      %v4486 = vadd.f32 %v3184, %v4376
      %v4487 = vadd.f32 %v3189, %v4381
      %v4488 = vadd.f32 %v3194, %v4386
      %v4489 = vadd.f32 %v3199, %v4391
      %v4490 = vadd.f32 %v3204, %v4396
      %v4491 = vadd.f32 %v3209, %v4401
      %v4492 = vadd.f32 %v3214, %v4406
      %v4493 = vadd.f32 %v3219, %v4411
      %v4494 = vadd.f32 %v3224, %v4416
      %v4495 = vadd.f32 %v3229, %v4421
      %v4496 = vadd.f32 %v3234, %v4426
      %v4497 = vadd.f32 %v3239, %v4431
      %v4498 = vadd.f32 %v3244, %v4436
      %v4499 = vadd.f32 %v3249, %v4441
      %v4500 = vadd.f32 %v3254, %v4446
      %v4501 = vadd.f32 %v3259, %v4451
      %v4502 = vsel %vm1552, %v3952, -inf
      %v4503 = vsel %vm1553, %v3953, -inf
      %v4504 = vsel %vm1554, %v3954, -inf
      %v4505 = vsel %vm1555, %v3955, -inf
      %v4506 = vsel %vm1556, %v3956, -inf
      %v4507 = vsel %vm1557, %v3957, -inf
      %v4508 = vsel %vm1558, %v3958, -inf
      %v4509 = vsel %vm1559, %v3959, -inf
      %v4510 = vsel %vm1560, %v3960, -inf
      %v4511 = vsel %vm1561, %v3961, -inf
      %v4512 = vsel %vm1562, %v3962, -inf
      %v4513 = vsel %vm1563, %v3963, -inf
      %v4514 = vsel %vm1564, %v3964, -inf
      %v4515 = vsel %vm1565, %v3965, -inf
      %v4516 = vsel %vm1566, %v3966, -inf
      %v4517 = vsel %vm1567, %v3967, -inf
      %v4518 = vsel %vm1568, %v3968, -inf
      %v4519 = vsel %vm1569, %v3969, -inf
      %v4520 = vsel %vm1570, %v3970, -inf
      %v4521 = vsel %vm1571, %v3971, -inf
      %v4522 = vsel %vm1572, %v3972, -inf
      %v4523 = vsel %vm1573, %v3973, -inf
      %v4524 = vsel %vm1574, %v3974, -inf
      %v4525 = vsel %vm1575, %v3975, -inf
      %v4526 = vsel %vm1576, %v3976, -inf
      %v4527 = vsel %vm1577, %v3977, -inf
      %v4528 = vsel %vm1578, %v3978, -inf
      %v4529 = vsel %vm1579, %v3979, -inf
      %v4530 = vsel %vm1580, %v3980, -inf
      %v4531 = vsel %vm1581, %v3981, -inf
      %v4532 = vsel %vm1582, %v3982, -inf
      %v4533 = vsel %vm1583, %v3983, -inf
      %v4534 = vsel %vm1584, %v3984, -inf
      %v4535 = vsel %vm1585, %v3985, -inf
      %v4536 = vsel %vm1586, %v3986, -inf
      %v4537 = vsel %vm1587, %v3987, -inf
      %v4538 = vsel %vm1588, %v3988, -inf
      %v4539 = vsel %vm1589, %v3989, -inf
      %v4540 = vsel %vm1590, %v3990, -inf
      %v4541 = vsel %vm1591, %v3991, -inf
      %v4542 = vsel %vm1592, %v3992, -inf
      %v4543 = vsel %vm1593, %v3993, -inf
      %v4544 = vsel %vm1594, %v3994, -inf
      %v4545 = vsel %vm1595, %v3995, -inf
      %v4546 = vsel %vm1596, %v3996, -inf
      %v4547 = vsel %vm1597, %v3997, -inf
      %v4548 = vsel %vm1598, %v3998, -inf
      %v4549 = vsel %vm1599, %v3999, -inf
      %v4550 = vrot.slane %v4502, 1
      %v4551 = vrot.slane %v4503, 1
      %v4552 = vrot.slane %v4504, 1
      %v4553 = vrot.slane %v4505, 1
      %v4554 = vrot.slane %v4506, 1
      %v4555 = vrot.slane %v4507, 1
      %v4556 = vrot.slane %v4508, 1
      %v4557 = vrot.slane %v4509, 1
      %v4558 = vrot.slane %v4510, 1
      %v4559 = vrot.slane %v4511, 1
      %v4560 = vrot.slane %v4512, 1
      %v4561 = vrot.slane %v4513, 1
      %v4562 = vrot.slane %v4514, 1
      %v4563 = vrot.slane %v4515, 1
      %v4564 = vrot.slane %v4516, 1
      %v4565 = vrot.slane %v4517, 1
      %v4566 = vrot.slane %v4518, 1
      %v4567 = vrot.slane %v4519, 1
      %v4568 = vrot.slane %v4520, 1
      %v4569 = vrot.slane %v4521, 1
      %v4570 = vrot.slane %v4522, 1
      %v4571 = vrot.slane %v4523, 1
      %v4572 = vrot.slane %v4524, 1
      %v4573 = vrot.slane %v4525, 1
      %v4574 = vrot.slane %v4526, 1
      %v4575 = vrot.slane %v4527, 1
      %v4576 = vrot.slane %v4528, 1
      %v4577 = vrot.slane %v4529, 1
      %v4578 = vrot.slane %v4530, 1
      %v4579 = vrot.slane %v4531, 1
      %v4580 = vrot.slane %v4532, 1
      %v4581 = vrot.slane %v4533, 1
      %v4582 = vrot.slane %v4534, 1
      %v4583 = vrot.slane %v4535, 1
      %v4584 = vrot.slane %v4536, 1
      %v4585 = vrot.slane %v4537, 1
      %v4586 = vrot.slane %v4538, 1
      %v4587 = vrot.slane %v4539, 1
      %v4588 = vrot.slane %v4540, 1
      %v4589 = vrot.slane %v4541, 1
      %v4590 = vrot.slane %v4542, 1
      %v4591 = vrot.slane %v4543, 1
      %v4592 = vrot.slane %v4544, 1
      %v4593 = vrot.slane %v4545, 1
      %v4594 = vrot.slane %v4546, 1
      %v4595 = vrot.slane %v4547, 1
      %v4596 = vrot.slane %v4548, 1
      %v4597 = vrot.slane %v4549, 1
      %v4598 = vsel %vm1710, %v4596, %v4597
      %v4599 = vsel %vm1710, %v4595, %v4596
      %v4600 = vsel %vm1710, %v4594, %v4595
      %v4601 = vsel %vm1710, %v4593, %v4594
      %v4602 = vsel %vm1710, %v4592, %v4593
      %v4603 = vsel %vm1710, %v4591, %v4592
      %v4604 = vsel %vm1710, %v4590, %v4591
      %v4605 = vsel %vm1710, %v4589, %v4590
      %v4606 = vsel %vm1710, %v4588, %v4589
      %v4607 = vsel %vm1710, %v4587, %v4588
      %v4608 = vsel %vm1710, %v4586, %v4587
      %v4609 = vsel %vm1710, %v4585, %v4586
      %v4610 = vsel %vm1710, %v4584, %v4585
      %v4611 = vsel %vm1710, %v4583, %v4584
      %v4612 = vsel %vm1710, %v4582, %v4583
      %v4613 = vsel %vm1710, %v4581, %v4582
      %v4614 = vsel %vm1710, %v4580, %v4581
      %v4615 = vsel %vm1710, %v4579, %v4580
      %v4616 = vsel %vm1710, %v4578, %v4579
      %v4617 = vsel %vm1710, %v4577, %v4578
      %v4618 = vsel %vm1710, %v4576, %v4577
      %v4619 = vsel %vm1710, %v4575, %v4576
      %v4620 = vsel %vm1710, %v4574, %v4575
      %v4621 = vsel %vm1710, %v4573, %v4574
      %v4622 = vsel %vm1710, %v4572, %v4573
      %v4623 = vsel %vm1710, %v4571, %v4572
      %v4624 = vsel %vm1710, %v4570, %v4571
      %v4625 = vsel %vm1710, %v4569, %v4570
      %v4626 = vsel %vm1710, %v4568, %v4569
      %v4627 = vsel %vm1710, %v4567, %v4568
      %v4628 = vsel %vm1710, %v4566, %v4567
      %v4629 = vsel %vm1710, %v4565, %v4566
      %v4630 = vsel %vm1710, %v4564, %v4565
      %v4631 = vsel %vm1710, %v4563, %v4564
      %v4632 = vsel %vm1710, %v4562, %v4563
      %v4633 = vsel %vm1710, %v4561, %v4562
      %v4634 = vsel %vm1710, %v4560, %v4561
      %v4635 = vsel %vm1710, %v4559, %v4560
      %v4636 = vsel %vm1710, %v4558, %v4559
      %v4637 = vsel %vm1710, %v4557, %v4558
      %v4638 = vsel %vm1710, %v4556, %v4557
      %v4639 = vsel %vm1710, %v4555, %v4556
      %v4640 = vsel %vm1710, %v4554, %v4555
      %v4641 = vsel %vm1710, %v4553, %v4554
      %v4642 = vsel %vm1710, %v4552, %v4553
      %v4643 = vsel %vm1710, %v4551, %v4552
      %v4644 = vsel %vm1710, %v4550, %v4551
      %v4645 = vsel %vm1710, %v4597, %v4550
      %v4646 = vmax.f32 %v4502, %v4644
      %v4647 = vmax.f32 %v4503, %v4643
      %v4648 = vmax.f32 %v4504, %v4642
      %v4649 = vmax.f32 %v4505, %v4641
      %v4650 = vmax.f32 %v4506, %v4640
      %v4651 = vmax.f32 %v4507, %v4639
      %v4652 = vmax.f32 %v4508, %v4638
      %v4653 = vmax.f32 %v4509, %v4637
      %v4654 = vmax.f32 %v4510, %v4636
      %v4655 = vmax.f32 %v4511, %v4635
      %v4656 = vmax.f32 %v4512, %v4634
      %v4657 = vmax.f32 %v4513, %v4633
      %v4658 = vmax.f32 %v4514, %v4632
      %v4659 = vmax.f32 %v4515, %v4631
      %v4660 = vmax.f32 %v4516, %v4630
      %v4661 = vmax.f32 %v4517, %v4629
      %v4662 = vmax.f32 %v4518, %v4628
      %v4663 = vmax.f32 %v4519, %v4627
      %v4664 = vmax.f32 %v4520, %v4626
      %v4665 = vmax.f32 %v4521, %v4625
      %v4666 = vmax.f32 %v4522, %v4624
      %v4667 = vmax.f32 %v4523, %v4623
      %v4668 = vmax.f32 %v4524, %v4622
      %v4669 = vmax.f32 %v4525, %v4621
      %v4670 = vmax.f32 %v4526, %v4620
      %v4671 = vmax.f32 %v4527, %v4619
      %v4672 = vmax.f32 %v4528, %v4618
      %v4673 = vmax.f32 %v4529, %v4617
      %v4674 = vmax.f32 %v4530, %v4616
      %v4675 = vmax.f32 %v4531, %v4615
      %v4676 = vmax.f32 %v4532, %v4614
      %v4677 = vmax.f32 %v4533, %v4613
      %v4678 = vmax.f32 %v4534, %v4612
      %v4679 = vmax.f32 %v4535, %v4611
      %v4680 = vmax.f32 %v4536, %v4610
      %v4681 = vmax.f32 %v4537, %v4609
      %v4682 = vmax.f32 %v4538, %v4608
      %v4683 = vmax.f32 %v4539, %v4607
      %v4684 = vmax.f32 %v4540, %v4606
      %v4685 = vmax.f32 %v4541, %v4605
      %v4686 = vmax.f32 %v4542, %v4604
      %v4687 = vmax.f32 %v4543, %v4603
      %v4688 = vmax.f32 %v4544, %v4602
      %v4689 = vmax.f32 %v4545, %v4601
      %v4690 = vmax.f32 %v4546, %v4600
      %v4691 = vmax.f32 %v4547, %v4599
      %v4692 = vmax.f32 %v4548, %v4598
      %v4693 = vmax.f32 %v4549, %v4645
      %v4694 = vrot.slane %v4646, 6
      %v4695 = vrot.slane %v4647, 6
      %v4696 = vrot.slane %v4648, 6
      %v4697 = vrot.slane %v4649, 6
      %v4698 = vrot.slane %v4650, 6
      %v4699 = vrot.slane %v4651, 6
      %v4700 = vrot.slane %v4652, 6
      %v4701 = vrot.slane %v4653, 6
      %v4702 = vrot.slane %v4654, 6
      %v4703 = vrot.slane %v4655, 6
      %v4704 = vrot.slane %v4656, 6
      %v4705 = vrot.slane %v4657, 6
      %v4706 = vrot.slane %v4658, 6
      %v4707 = vrot.slane %v4659, 6
      %v4708 = vrot.slane %v4660, 6
      %v4709 = vrot.slane %v4661, 6
      %v4710 = vrot.slane %v4662, 6
      %v4711 = vrot.slane %v4663, 6
      %v4712 = vrot.slane %v4664, 6
      %v4713 = vrot.slane %v4665, 6
      %v4714 = vrot.slane %v4666, 6
      %v4715 = vrot.slane %v4667, 6
      %v4716 = vrot.slane %v4668, 6
      %v4717 = vrot.slane %v4669, 6
      %v4718 = vrot.slane %v4670, 6
      %v4719 = vrot.slane %v4671, 6
      %v4720 = vrot.slane %v4672, 6
      %v4721 = vrot.slane %v4673, 6
      %v4722 = vrot.slane %v4674, 6
      %v4723 = vrot.slane %v4675, 6
      %v4724 = vrot.slane %v4676, 6
      %v4725 = vrot.slane %v4677, 6
      %v4726 = vrot.slane %v4678, 6
      %v4727 = vrot.slane %v4679, 6
      %v4728 = vrot.slane %v4680, 6
      %v4729 = vrot.slane %v4681, 6
      %v4730 = vrot.slane %v4682, 6
      %v4731 = vrot.slane %v4683, 6
      %v4732 = vrot.slane %v4684, 6
      %v4733 = vrot.slane %v4685, 6
      %v4734 = vrot.slane %v4686, 6
      %v4735 = vrot.slane %v4687, 6
      %v4736 = vrot.slane %v4688, 6
      %v4737 = vrot.slane %v4689, 6
      %v4738 = vrot.slane %v4690, 6
      %v4739 = vrot.slane %v4691, 6
      %v4740 = vrot.slane %v4692, 6
      %v4741 = vrot.slane %v4693, 6
      %v4742 = vsel %vm1855, %v4740, %v4741
      %v4743 = vsel %vm1855, %v4739, %v4740
      %v4744 = vsel %vm1855, %v4738, %v4739
      %v4745 = vsel %vm1855, %v4737, %v4738
      %v4746 = vsel %vm1855, %v4736, %v4737
      %v4747 = vsel %vm1855, %v4735, %v4736
      %v4748 = vsel %vm1855, %v4734, %v4735
      %v4749 = vsel %vm1855, %v4733, %v4734
      %v4750 = vsel %vm1855, %v4732, %v4733
      %v4751 = vsel %vm1855, %v4731, %v4732
      %v4752 = vsel %vm1855, %v4730, %v4731
      %v4753 = vsel %vm1855, %v4729, %v4730
      %v4754 = vsel %vm1855, %v4728, %v4729
      %v4755 = vsel %vm1855, %v4727, %v4728
      %v4756 = vsel %vm1855, %v4726, %v4727
      %v4757 = vsel %vm1855, %v4725, %v4726
      %v4758 = vsel %vm1855, %v4724, %v4725
      %v4759 = vsel %vm1855, %v4723, %v4724
      %v4760 = vsel %vm1855, %v4722, %v4723
      %v4761 = vsel %vm1855, %v4721, %v4722
      %v4762 = vsel %vm1855, %v4720, %v4721
      %v4763 = vsel %vm1855, %v4719, %v4720
      %v4764 = vsel %vm1855, %v4718, %v4719
      %v4765 = vsel %vm1855, %v4717, %v4718
      %v4766 = vsel %vm1855, %v4716, %v4717
      %v4767 = vsel %vm1855, %v4715, %v4716
      %v4768 = vsel %vm1855, %v4714, %v4715
      %v4769 = vsel %vm1855, %v4713, %v4714
      %v4770 = vsel %vm1855, %v4712, %v4713
      %v4771 = vsel %vm1855, %v4711, %v4712
      %v4772 = vsel %vm1855, %v4710, %v4711
      %v4773 = vsel %vm1855, %v4709, %v4710
      %v4774 = vsel %vm1855, %v4708, %v4709
      %v4775 = vsel %vm1855, %v4707, %v4708
      %v4776 = vsel %vm1855, %v4706, %v4707
      %v4777 = vsel %vm1855, %v4705, %v4706
      %v4778 = vsel %vm1855, %v4704, %v4705
      %v4779 = vsel %vm1855, %v4703, %v4704
      %v4780 = vsel %vm1855, %v4702, %v4703
      %v4781 = vsel %vm1855, %v4701, %v4702
      %v4782 = vsel %vm1855, %v4700, %v4701
      %v4783 = vsel %vm1855, %v4699, %v4700
      %v4784 = vsel %vm1855, %v4698, %v4699
      %v4785 = vsel %vm1855, %v4697, %v4698
      %v4786 = vsel %vm1855, %v4696, %v4697
      %v4787 = vsel %vm1855, %v4695, %v4696
      %v4788 = vsel %vm1855, %v4694, %v4695
      %v4789 = vsel %vm1855, %v4741, %v4694
      %v4790 = vmax.f32 %v4646, %v4789
      %v4791 = vmax.f32 %v4647, %v4788
      %v4792 = vmax.f32 %v4648, %v4787
      %v4793 = vmax.f32 %v4649, %v4786
      %v4794 = vmax.f32 %v4650, %v4785
      %v4795 = vmax.f32 %v4651, %v4784
      %v4796 = vmax.f32 %v4652, %v4783
      %v4797 = vmax.f32 %v4653, %v4782
      %v4798 = vmax.f32 %v4654, %v4781
      %v4799 = vmax.f32 %v4655, %v4780
      %v4800 = vmax.f32 %v4656, %v4779
      %v4801 = vmax.f32 %v4657, %v4778
      %v4802 = vmax.f32 %v4658, %v4777
      %v4803 = vmax.f32 %v4659, %v4776
      %v4804 = vmax.f32 %v4660, %v4775
      %v4805 = vmax.f32 %v4661, %v4774
      %v4806 = vmax.f32 %v4662, %v4773
      %v4807 = vmax.f32 %v4663, %v4772
      %v4808 = vmax.f32 %v4664, %v4771
      %v4809 = vmax.f32 %v4665, %v4770
      %v4810 = vmax.f32 %v4666, %v4769
      %v4811 = vmax.f32 %v4667, %v4768
      %v4812 = vmax.f32 %v4668, %v4767
      %v4813 = vmax.f32 %v4669, %v4766
      %v4814 = vmax.f32 %v4670, %v4765
      %v4815 = vmax.f32 %v4671, %v4764
      %v4816 = vmax.f32 %v4672, %v4763
      %v4817 = vmax.f32 %v4673, %v4762
      %v4818 = vmax.f32 %v4674, %v4761
      %v4819 = vmax.f32 %v4675, %v4760
      %v4820 = vmax.f32 %v4676, %v4759
      %v4821 = vmax.f32 %v4677, %v4758
      %v4822 = vmax.f32 %v4678, %v4757
      %v4823 = vmax.f32 %v4679, %v4756
      %v4824 = vmax.f32 %v4680, %v4755
      %v4825 = vmax.f32 %v4681, %v4754
      %v4826 = vmax.f32 %v4682, %v4753
      %v4827 = vmax.f32 %v4683, %v4752
      %v4828 = vmax.f32 %v4684, %v4751
      %v4829 = vmax.f32 %v4685, %v4750
      %v4830 = vmax.f32 %v4686, %v4749
      %v4831 = vmax.f32 %v4687, %v4748
      %v4832 = vmax.f32 %v4688, %v4747
      %v4833 = vmax.f32 %v4689, %v4746
      %v4834 = vmax.f32 %v4690, %v4745
      %v4835 = vmax.f32 %v4691, %v4744
      %v4836 = vmax.f32 %v4692, %v4743
      %v4837 = vmax.f32 %v4693, %v4742
      %v4838 = vrot.slane %v4502, 2
      %v4839 = vrot.slane %v4503, 2
      %v4840 = vrot.slane %v4504, 2
      %v4841 = vrot.slane %v4505, 2
      %v4842 = vrot.slane %v4506, 2
      %v4843 = vrot.slane %v4507, 2
      %v4844 = vrot.slane %v4508, 2
      %v4845 = vrot.slane %v4509, 2
      %v4846 = vrot.slane %v4510, 2
      %v4847 = vrot.slane %v4511, 2
      %v4848 = vrot.slane %v4512, 2
      %v4849 = vrot.slane %v4513, 2
      %v4850 = vrot.slane %v4514, 2
      %v4851 = vrot.slane %v4515, 2
      %v4852 = vrot.slane %v4516, 2
      %v4853 = vrot.slane %v4517, 2
      %v4854 = vrot.slane %v4518, 2
      %v4855 = vrot.slane %v4519, 2
      %v4856 = vrot.slane %v4520, 2
      %v4857 = vrot.slane %v4521, 2
      %v4858 = vrot.slane %v4522, 2
      %v4859 = vrot.slane %v4523, 2
      %v4860 = vrot.slane %v4524, 2
      %v4861 = vrot.slane %v4525, 2
      %v4862 = vrot.slane %v4526, 2
      %v4863 = vrot.slane %v4527, 2
      %v4864 = vrot.slane %v4528, 2
      %v4865 = vrot.slane %v4529, 2
      %v4866 = vrot.slane %v4530, 2
      %v4867 = vrot.slane %v4531, 2
      %v4868 = vrot.slane %v4532, 2
      %v4869 = vrot.slane %v4533, 2
      %v4870 = vrot.slane %v4534, 2
      %v4871 = vrot.slane %v4535, 2
      %v4872 = vrot.slane %v4536, 2
      %v4873 = vrot.slane %v4537, 2
      %v4874 = vrot.slane %v4538, 2
      %v4875 = vrot.slane %v4539, 2
      %v4876 = vrot.slane %v4540, 2
      %v4877 = vrot.slane %v4541, 2
      %v4878 = vrot.slane %v4542, 2
      %v4879 = vrot.slane %v4543, 2
      %v4880 = vrot.slane %v4544, 2
      %v4881 = vrot.slane %v4545, 2
      %v4882 = vrot.slane %v4546, 2
      %v4883 = vrot.slane %v4547, 2
      %v4884 = vrot.slane %v4548, 2
      %v4885 = vrot.slane %v4549, 2
      %v4886 = vsel %vm2000, %v4884, %v4885
      %v4887 = vsel %vm2000, %v4883, %v4884
      %v4888 = vsel %vm2000, %v4882, %v4883
      %v4889 = vsel %vm2000, %v4881, %v4882
      %v4890 = vsel %vm2000, %v4880, %v4881
      %v4891 = vsel %vm2000, %v4879, %v4880
      %v4892 = vsel %vm2000, %v4878, %v4879
      %v4893 = vsel %vm2000, %v4877, %v4878
      %v4894 = vsel %vm2000, %v4876, %v4877
      %v4895 = vsel %vm2000, %v4875, %v4876
      %v4896 = vsel %vm2000, %v4874, %v4875
      %v4897 = vsel %vm2000, %v4873, %v4874
      %v4898 = vsel %vm2000, %v4872, %v4873
      %v4899 = vsel %vm2000, %v4871, %v4872
      %v4900 = vsel %vm2000, %v4870, %v4871
      %v4901 = vsel %vm2000, %v4869, %v4870
      %v4902 = vsel %vm2000, %v4868, %v4869
      %v4903 = vsel %vm2000, %v4867, %v4868
      %v4904 = vsel %vm2000, %v4866, %v4867
      %v4905 = vsel %vm2000, %v4865, %v4866
      %v4906 = vsel %vm2000, %v4864, %v4865
      %v4907 = vsel %vm2000, %v4863, %v4864
      %v4908 = vsel %vm2000, %v4862, %v4863
      %v4909 = vsel %vm2000, %v4861, %v4862
      %v4910 = vsel %vm2000, %v4860, %v4861
      %v4911 = vsel %vm2000, %v4859, %v4860
      %v4912 = vsel %vm2000, %v4858, %v4859
      %v4913 = vsel %vm2000, %v4857, %v4858
      %v4914 = vsel %vm2000, %v4856, %v4857
      %v4915 = vsel %vm2000, %v4855, %v4856
      %v4916 = vsel %vm2000, %v4854, %v4855
      %v4917 = vsel %vm2000, %v4853, %v4854
      %v4918 = vsel %vm2000, %v4852, %v4853
      %v4919 = vsel %vm2000, %v4851, %v4852
      %v4920 = vsel %vm2000, %v4850, %v4851
      %v4921 = vsel %vm2000, %v4849, %v4850
      %v4922 = vsel %vm2000, %v4848, %v4849
      %v4923 = vsel %vm2000, %v4847, %v4848
      %v4924 = vsel %vm2000, %v4846, %v4847
      %v4925 = vsel %vm2000, %v4845, %v4846
      %v4926 = vsel %vm2000, %v4844, %v4845
      %v4927 = vsel %vm2000, %v4843, %v4844
      %v4928 = vsel %vm2000, %v4842, %v4843
      %v4929 = vsel %vm2000, %v4841, %v4842
      %v4930 = vsel %vm2000, %v4840, %v4841
      %v4931 = vsel %vm2000, %v4839, %v4840
      %v4932 = vsel %vm2000, %v4838, %v4839
      %v4933 = vsel %vm2000, %v4885, %v4838
      %v4934 = vmax.f32 %v4790, %v4932
      %v4935 = vmax.f32 %v4791, %v4931
      %v4936 = vmax.f32 %v4792, %v4930
      %v4937 = vmax.f32 %v4793, %v4929
      %v4938 = vmax.f32 %v4794, %v4928
      %v4939 = vmax.f32 %v4795, %v4927
      %v4940 = vmax.f32 %v4796, %v4926
      %v4941 = vmax.f32 %v4797, %v4925
      %v4942 = vmax.f32 %v4798, %v4924
      %v4943 = vmax.f32 %v4799, %v4923
      %v4944 = vmax.f32 %v4800, %v4922
      %v4945 = vmax.f32 %v4801, %v4921
      %v4946 = vmax.f32 %v4802, %v4920
      %v4947 = vmax.f32 %v4803, %v4919
      %v4948 = vmax.f32 %v4804, %v4918
      %v4949 = vmax.f32 %v4805, %v4917
      %v4950 = vmax.f32 %v4806, %v4916
      %v4951 = vmax.f32 %v4807, %v4915
      %v4952 = vmax.f32 %v4808, %v4914
      %v4953 = vmax.f32 %v4809, %v4913
      %v4954 = vmax.f32 %v4810, %v4912
      %v4955 = vmax.f32 %v4811, %v4911
      %v4956 = vmax.f32 %v4812, %v4910
      %v4957 = vmax.f32 %v4813, %v4909
      %v4958 = vmax.f32 %v4814, %v4908
      %v4959 = vmax.f32 %v4815, %v4907
      %v4960 = vmax.f32 %v4816, %v4906
      %v4961 = vmax.f32 %v4817, %v4905
      %v4962 = vmax.f32 %v4818, %v4904
      %v4963 = vmax.f32 %v4819, %v4903
      %v4964 = vmax.f32 %v4820, %v4902
      %v4965 = vmax.f32 %v4821, %v4901
      %v4966 = vmax.f32 %v4822, %v4900
      %v4967 = vmax.f32 %v4823, %v4899
      %v4968 = vmax.f32 %v4824, %v4898
      %v4969 = vmax.f32 %v4825, %v4897
      %v4970 = vmax.f32 %v4826, %v4896
      %v4971 = vmax.f32 %v4827, %v4895
      %v4972 = vmax.f32 %v4828, %v4894
      %v4973 = vmax.f32 %v4829, %v4893
      %v4974 = vmax.f32 %v4830, %v4892
      %v4975 = vmax.f32 %v4831, %v4891
      %v4976 = vmax.f32 %v4832, %v4890
      %v4977 = vmax.f32 %v4833, %v4889
      %v4978 = vmax.f32 %v4834, %v4888
      %v4979 = vmax.f32 %v4835, %v4887
      %v4980 = vmax.f32 %v4836, %v4886
      %v4981 = vmax.f32 %v4837, %v4933
      %4982 = vst.msk [vmem:[#allocation2 + $0x30] sm:$0xff] %vm1600, %v4934
      %4983 = vst.msk [vmem:[#allocation2 + $0x38] sm:$0xff] %vm1600, %v4935
      %4984 = vst.msk [vmem:[#allocation2 + $0x40] sm:$0xff] %vm1600, %v4936
      %4985 = vst.msk [vmem:[#allocation2 + $0x48] sm:$0xff] %vm1600, %v4937
      %4986 = vst.msk [vmem:[#allocation2 + $0x50] sm:$0xff] %vm1600, %v4938
      %4987 = vst.msk [vmem:[#allocation2 + $0x58] sm:$0xff] %vm1600, %v4939
      %4988 = vst.msk [vmem:[#allocation2 + $0x60] sm:$0xff] %vm1600, %v4940
      %4989 = vst.msk [vmem:[#allocation2 + $0x68] sm:$0xff] %vm1600, %v4941
      %4990 = vst.msk [vmem:[#allocation2 + $0x70] sm:$0xff] %vm1600, %v4942
      %4991 = vst.msk [vmem:[#allocation2 + $0x78] sm:$0xff] %vm1600, %v4943
      %4992 = vst.msk [vmem:[#allocation2 + $0x80] sm:$0xff] %vm1600, %v4944
      %4993 = vst.msk [vmem:[#allocation2 + $0x88] sm:$0xff] %vm1600, %v4945
      %4994 = vst.msk [vmem:[#allocation2 + $0x90] sm:$0xff] %vm1600, %v4946
      %4995 = vst.msk [vmem:[#allocation2 + $0x98] sm:$0xff] %vm1600, %v4947
      %4996 = vst.msk [vmem:[#allocation2 + $0xa0] sm:$0xff] %vm1600, %v4948
      %4997 = vst.msk [vmem:[#allocation2 + $0xa8] sm:$0xff] %vm1600, %v4949
      %4998 = vst.msk [vmem:[#allocation2 + $0xb0] sm:$0xff] %vm1600, %v4950
      %4999 = vst.msk [vmem:[#allocation2 + $0xb8] sm:$0xff] %vm1600, %v4951
      %5000 = vst.msk [vmem:[#allocation2 + $0xc0] sm:$0xff] %vm1600, %v4952
      %5001 = vst.msk [vmem:[#allocation2 + $0xc8] sm:$0xff] %vm1600, %v4953
      %5002 = vst.msk [vmem:[#allocation2 + $0xd0] sm:$0xff] %vm1600, %v4954
      %5003 = vst.msk [vmem:[#allocation2 + $0xd8] sm:$0xff] %vm1600, %v4955
      %5004 = vst.msk [vmem:[#allocation2 + $0xe0] sm:$0xff] %vm1600, %v4956
      %5005 = vst.msk [vmem:[#allocation2 + $0xe8] sm:$0xff] %vm1600, %v4957
      %5006 = vst.msk [vmem:[#allocation2 + $0xf0] sm:$0xff] %vm1600, %v4958
      %5007 = vst.msk [vmem:[#allocation2 + $0xf8] sm:$0xff] %vm1600, %v4959
      %5008 = vst.msk [vmem:[#allocation2 + $0x100] sm:$0xff] %vm1600, %v4960
      %5009 = vst.msk [vmem:[#allocation2 + $0x108] sm:$0xff] %vm1600, %v4961
      %5010 = vst.msk [vmem:[#allocation2 + $0x110] sm:$0xff] %vm1600, %v4962
      %5011 = vst.msk [vmem:[#allocation2 + $0x118] sm:$0xff] %vm1600, %v4963
      %5012 = vst.msk [vmem:[#allocation2 + $0x120] sm:$0xff] %vm1600, %v4964
      %5013 = vst.msk [vmem:[#allocation2 + $0x128] sm:$0xff] %vm1600, %v4965
      %5014 = vst.msk [vmem:[#allocation2 + $0x130] sm:$0xff] %vm1600, %v4966
      %5015 = vst.msk [vmem:[#allocation2 + $0x138] sm:$0xff] %vm1600, %v4967
      %5016 = vst.msk [vmem:[#allocation2 + $0x140] sm:$0xff] %vm1600, %v4968
      %5017 = vst.msk [vmem:[#allocation2 + $0x148] sm:$0xff] %vm1600, %v4969
      %5018 = vst.msk [vmem:[#allocation2 + $0x150] sm:$0xff] %vm1600, %v4970
      %5019 = vst.msk [vmem:[#allocation2 + $0x158] sm:$0xff] %vm1600, %v4971
      %5020 = vst.msk [vmem:[#allocation2 + $0x160] sm:$0xff] %vm1600, %v4972
      %5021 = vst.msk [vmem:[#allocation2 + $0x168] sm:$0xff] %vm1600, %v4973
      %5022 = vst.msk [vmem:[#allocation2 + $0x170] sm:$0xff] %vm1600, %v4974
      %5023 = vst.msk [vmem:[#allocation2 + $0x178] sm:$0xff] %vm1600, %v4975
      %5024 = vst.msk [vmem:[#allocation2 + $0x180] sm:$0xff] %vm1600, %v4976
      %5025 = vst.msk [vmem:[#allocation2 + $0x188] sm:$0xff] %vm1600, %v4977
      %5026 = vst.msk [vmem:[#allocation2 + $0x190] sm:$0xff] %vm1600, %v4978
      %5027 = vst.msk [vmem:[#allocation2 + $0x198] sm:$0xff] %vm1600, %v4979
      %5028 = vst.msk [vmem:[#allocation2 + $0x1a0] sm:$0xff] %vm1600, %v4980
      %5029 = vst.msk [vmem:[#allocation2 + $0x1a8] sm:$0xff] %vm1600, %v4981
      %v5030 = vld [vmem:[#allocation2] sm:$0xff]
      %v5031 = vld [vmem:[#allocation2 + $0x8] sm:$0xff]
      %v5032 = vld [vmem:[#allocation2 + $0x10] sm:$0xff]
      %v5033 = vld [vmem:[#allocation2 + $0x18] sm:$0xff]
      %v5034 = vld [vmem:[#allocation2 + $0x20] sm:$0xff]
      %v5035 = vld [vmem:[#allocation2 + $0x28] sm:$0xff]
      %v5036 = vld [vmem:[#allocation2 + $0x30] sm:$0xff]
      %v5037 = vld [vmem:[#allocation2 + $0x38] sm:$0xff]
      %v5038 = vld [vmem:[#allocation2 + $0x40] sm:$0xff]
      %v5039 = vld [vmem:[#allocation2 + $0x48] sm:$0xff]
      %v5040 = vld [vmem:[#allocation2 + $0x50] sm:$0xff]
      %v5041 = vld [vmem:[#allocation2 + $0x58] sm:$0xff]
      %v5042 = vld [vmem:[#allocation2 + $0x60] sm:$0xff]
      %v5043 = vld [vmem:[#allocation2 + $0x68] sm:$0xff]
      %v5044 = vld [vmem:[#allocation2 + $0x70] sm:$0xff]
      %v5045 = vld [vmem:[#allocation2 + $0x78] sm:$0xff]
      %v5046 = vld [vmem:[#allocation2 + $0x80] sm:$0xff]
      %v5047 = vld [vmem:[#allocation2 + $0x88] sm:$0xff]
      %v5048 = vld [vmem:[#allocation2 + $0x90] sm:$0xff]
      %v5049 = vld [vmem:[#allocation2 + $0x98] sm:$0xff]
      %v5050 = vld [vmem:[#allocation2 + $0xa0] sm:$0xff]
      %v5051 = vld [vmem:[#allocation2 + $0xa8] sm:$0xff]
      %v5052 = vld [vmem:[#allocation2 + $0xb0] sm:$0xff]
      %v5053 = vld [vmem:[#allocation2 + $0xb8] sm:$0xff]
      %v5054 = vld [vmem:[#allocation2 + $0xc0] sm:$0xff]
      %v5055 = vld [vmem:[#allocation2 + $0xc8] sm:$0xff]
      %v5056 = vld [vmem:[#allocation2 + $0xd0] sm:$0xff]
      %v5057 = vld [vmem:[#allocation2 + $0xd8] sm:$0xff]
      %v5058 = vld [vmem:[#allocation2 + $0xe0] sm:$0xff]
      %v5059 = vld [vmem:[#allocation2 + $0xe8] sm:$0xff]
      %v5060 = vld [vmem:[#allocation2 + $0xf0] sm:$0xff]
      %v5061 = vld [vmem:[#allocation2 + $0xf8] sm:$0xff]
      %v5062 = vld [vmem:[#allocation2 + $0x100] sm:$0xff]
      %v5063 = vld [vmem:[#allocation2 + $0x108] sm:$0xff]
      %v5064 = vld [vmem:[#allocation2 + $0x110] sm:$0xff]
      %v5065 = vld [vmem:[#allocation2 + $0x118] sm:$0xff]
      %v5066 = vld [vmem:[#allocation2 + $0x120] sm:$0xff]
      %v5067 = vld [vmem:[#allocation2 + $0x128] sm:$0xff]
      %v5068 = vld [vmem:[#allocation2 + $0x130] sm:$0xff]
      %v5069 = vld [vmem:[#allocation2 + $0x138] sm:$0xff]
      %v5070 = vld [vmem:[#allocation2 + $0x140] sm:$0xff]
      %v5071 = vld [vmem:[#allocation2 + $0x148] sm:$0xff]
      %v5072 = vld [vmem:[#allocation2 + $0x150] sm:$0xff]
      %v5073 = vld [vmem:[#allocation2 + $0x158] sm:$0xff]
      %v5074 = vld [vmem:[#allocation2 + $0x160] sm:$0xff]
      %v5075 = vld [vmem:[#allocation2 + $0x168] sm:$0xff]
      %v5076 = vld [vmem:[#allocation2 + $0x170] sm:$0xff]
      %v5077 = vld [vmem:[#allocation2 + $0x178] sm:$0xff]
      %v5078 = vld [vmem:[#allocation2 + $0x180] sm:$0xff]
      %v5079 = vld [vmem:[#allocation2 + $0x188] sm:$0xff]
      %v5080 = vld [vmem:[#allocation2 + $0x190] sm:$0xff]
      %v5081 = vld [vmem:[#allocation2 + $0x198] sm:$0xff]
      %v5082 = vld [vmem:[#allocation2 + $0x1a0] sm:$0xff]
      %v5083 = vld [vmem:[#allocation2 + $0x1a8] sm:$0xff]
      %v5084 = vld [vmem:[#allocation2 + $0x1b0] sm:$0xff]
      %v5085 = vld [vmem:[#allocation2 + $0x1b8] sm:$0xff]
      %v5086 = vld [vmem:[#allocation2 + $0x1c0] sm:$0xff]
      %v5087 = vmax.f32 %v5030, %v5033
      %v5088 = vmax.f32 %v5031, %v5034
      %v5089 = vmax.f32 %v5032, %v5035
      %v5090 = vmax.f32 %v5033, %v5036
      %v5091 = vmax.f32 %v5034, %v5037
      %v5092 = vmax.f32 %v5035, %v5038
      %v5093 = vmax.f32 %v5036, %v5039
      %v5094 = vmax.f32 %v5037, %v5040
      %v5095 = vmax.f32 %v5038, %v5041
      %v5096 = vmax.f32 %v5039, %v5042
      %v5097 = vmax.f32 %v5040, %v5043
      %v5098 = vmax.f32 %v5041, %v5044
      %v5099 = vmax.f32 %v5042, %v5045
      %v5100 = vmax.f32 %v5043, %v5046
      %v5101 = vmax.f32 %v5044, %v5047
      %v5102 = vmax.f32 %v5045, %v5048
      %v5103 = vmax.f32 %v5046, %v5049
      %v5104 = vmax.f32 %v5047, %v5050
      %v5105 = vmax.f32 %v5048, %v5051
      %v5106 = vmax.f32 %v5049, %v5052
      %v5107 = vmax.f32 %v5050, %v5053
      %v5108 = vmax.f32 %v5051, %v5054
      %v5109 = vmax.f32 %v5052, %v5055
      %v5110 = vmax.f32 %v5053, %v5056
      %v5111 = vmax.f32 %v5054, %v5057
      %v5112 = vmax.f32 %v5055, %v5058
      %v5113 = vmax.f32 %v5056, %v5059
      %v5114 = vmax.f32 %v5057, %v5060
      %v5115 = vmax.f32 %v5058, %v5061
      %v5116 = vmax.f32 %v5059, %v5062
      %v5117 = vmax.f32 %v5060, %v5063
      %v5118 = vmax.f32 %v5061, %v5064
      %v5119 = vmax.f32 %v5062, %v5065
      %v5120 = vmax.f32 %v5063, %v5066
      %v5121 = vmax.f32 %v5064, %v5067
      %v5122 = vmax.f32 %v5065, %v5068
      %v5123 = vmax.f32 %v5066, %v5069
      %v5124 = vmax.f32 %v5067, %v5070
      %v5125 = vmax.f32 %v5068, %v5071
      %v5126 = vmax.f32 %v5069, %v5072
      %v5127 = vmax.f32 %v5070, %v5073
      %v5128 = vmax.f32 %v5071, %v5074
      %v5129 = vmax.f32 %v5072, %v5075
      %v5130 = vmax.f32 %v5073, %v5076
      %v5131 = vmax.f32 %v5074, %v5077
      %v5132 = vmax.f32 %v5075, %v5078
      %v5133 = vmax.f32 %v5076, %v5079
      %v5134 = vmax.f32 %v5077, %v5080
      %v5135 = vmax.f32 %v5078, %v5081
      %v5136 = vmax.f32 %v5079, %v5082
      %v5137 = vmax.f32 %v5080, %v5083
      %v5138 = vmax.f32 %v5081, %v5084
      %v5139 = vmax.f32 %v5082, %v5085
      %v5140 = vmax.f32 %v5083, %v5086
      %v5141 = vmax.f32 %v5093, %v5087
      %v5142 = vmax.f32 %v5094, %v5088
      %v5143 = vmax.f32 %v5095, %v5089
      %v5144 = vmax.f32 %v5096, %v5090
      %v5145 = vmax.f32 %v5097, %v5091
      %v5146 = vmax.f32 %v5098, %v5092
      %v5147 = vmax.f32 %v5099, %v5093
      %v5148 = vmax.f32 %v5100, %v5094
      %v5149 = vmax.f32 %v5101, %v5095
      %v5150 = vmax.f32 %v5102, %v5096
      %v5151 = vmax.f32 %v5103, %v5097
      %v5152 = vmax.f32 %v5104, %v5098
      %v5153 = vmax.f32 %v5105, %v5099
      %v5154 = vmax.f32 %v5106, %v5100
      %v5155 = vmax.f32 %v5107, %v5101
      %v5156 = vmax.f32 %v5108, %v5102
      %v5157 = vmax.f32 %v5109, %v5103
      %v5158 = vmax.f32 %v5110, %v5104
      %v5159 = vmax.f32 %v5111, %v5105
      %v5160 = vmax.f32 %v5112, %v5106
      %v5161 = vmax.f32 %v5113, %v5107
      %v5162 = vmax.f32 %v5114, %v5108
      %v5163 = vmax.f32 %v5115, %v5109
      %v5164 = vmax.f32 %v5116, %v5110
      %v5165 = vmax.f32 %v5117, %v5111
      %v5166 = vmax.f32 %v5118, %v5112
      %v5167 = vmax.f32 %v5119, %v5113
      %v5168 = vmax.f32 %v5120, %v5114
      %v5169 = vmax.f32 %v5121, %v5115
      %v5170 = vmax.f32 %v5122, %v5116
      %v5171 = vmax.f32 %v5123, %v5117
      %v5172 = vmax.f32 %v5124, %v5118
      %v5173 = vmax.f32 %v5125, %v5119
      %v5174 = vmax.f32 %v5126, %v5120
      %v5175 = vmax.f32 %v5127, %v5121
      %v5176 = vmax.f32 %v5128, %v5122
      %v5177 = vmax.f32 %v5129, %v5123
      %v5178 = vmax.f32 %v5130, %v5124
      %v5179 = vmax.f32 %v5131, %v5125
      %v5180 = vmax.f32 %v5132, %v5126
      %v5181 = vmax.f32 %v5133, %v5127
      %v5182 = vmax.f32 %v5134, %v5128
      %v5183 = vmax.f32 %v5135, %v5129
      %v5184 = vmax.f32 %v5136, %v5130
      %v5185 = vmax.f32 %v5137, %v5131
      %v5186 = vmax.f32 %v5138, %v5132
      %v5187 = vmax.f32 %v5139, %v5133
      %v5188 = vmax.f32 %v5140, %v5134
      %v5189 = vld [vmem:[#allocation2 + $0x1c8] sm:$0xff]
      %v5190 = vld [vmem:[#allocation2 + $0x1d0] sm:$0xff]
      %v5191 = vld [vmem:[#allocation2 + $0x1d8] sm:$0xff]
      %v5192 = vmax.f32 %v5141, %v5042
      %v5193 = vmax.f32 %v5142, %v5043
      %v5194 = vmax.f32 %v5143, %v5044
      %v5195 = vmax.f32 %v5144, %v5045
      %v5196 = vmax.f32 %v5145, %v5046
      %v5197 = vmax.f32 %v5146, %v5047
      %v5198 = vmax.f32 %v5147, %v5048
      %v5199 = vmax.f32 %v5148, %v5049
      %v5200 = vmax.f32 %v5149, %v5050
      %v5201 = vmax.f32 %v5150, %v5051
      %v5202 = vmax.f32 %v5151, %v5052
      %v5203 = vmax.f32 %v5152, %v5053
      %v5204 = vmax.f32 %v5153, %v5054
      %v5205 = vmax.f32 %v5154, %v5055
      %v5206 = vmax.f32 %v5155, %v5056
      %v5207 = vmax.f32 %v5156, %v5057
      %v5208 = vmax.f32 %v5157, %v5058
      %v5209 = vmax.f32 %v5158, %v5059
      %v5210 = vmax.f32 %v5159, %v5060
      %v5211 = vmax.f32 %v5160, %v5061
      %v5212 = vmax.f32 %v5161, %v5062
      %v5213 = vmax.f32 %v5162, %v5063
      %v5214 = vmax.f32 %v5163, %v5064
      %v5215 = vmax.f32 %v5164, %v5065
      %v5216 = vmax.f32 %v5165, %v5066
      %v5217 = vmax.f32 %v5166, %v5067
      %v5218 = vmax.f32 %v5167, %v5068
      %v5219 = vmax.f32 %v5168, %v5069
      %v5220 = vmax.f32 %v5169, %v5070
      %v5221 = vmax.f32 %v5170, %v5071
      %v5222 = vmax.f32 %v5171, %v5072
      %v5223 = vmax.f32 %v5172, %v5073
      %v5224 = vmax.f32 %v5173, %v5074
      %v5225 = vmax.f32 %v5174, %v5075
      %v5226 = vmax.f32 %v5175, %v5076
      %v5227 = vmax.f32 %v5176, %v5077
      %v5228 = vmax.f32 %v5177, %v5078
      %v5229 = vmax.f32 %v5178, %v5079
      %v5230 = vmax.f32 %v5179, %v5080
      %v5231 = vmax.f32 %v5180, %v5081
      %v5232 = vmax.f32 %v5181, %v5082
      %v5233 = vmax.f32 %v5182, %v5083
      %v5234 = vmax.f32 %v5183, %v5084
      %v5235 = vmax.f32 %v5184, %v5085
      %v5236 = vmax.f32 %v5185, %v5086
      %v5237 = vmax.f32 %v5186, %v5189
      %v5238 = vmax.f32 %v5187, %v5190
      %v5239 = vmax.f32 %v5188, %v5191
      %s5240 = scalar_lea.vmem %s3, 6
      %v5241 = vld [vmem:[%s5240] sm:$0x3]
      %v5243 = vsel %vm1600, %v5192, 0
      %v5246 = vsel %vm1600, %v5193, 0
      %v5249 = vsel %vm1600, %v5194, 0
      %v5252 = vsel %vm1600, %v5195, 0
      %v5255 = vsel %vm1600, %v5196, 0
      %v5258 = vsel %vm1600, %v5197, 0
      %v5261 = vsel %vm1600, %v5198, 0
      %v5264 = vsel %vm1600, %v5199, 0
      %v5267 = vsel %vm1600, %v5200, 0
      %v5270 = vsel %vm1600, %v5201, 0
      %v5273 = vsel %vm1600, %v5202, 0
      %v5276 = vsel %vm1600, %v5203, 0
      %v5279 = vsel %vm1600, %v5204, 0
      %v5282 = vsel %vm1600, %v5205, 0
      %v5285 = vsel %vm1600, %v5206, 0
      %v5288 = vsel %vm1600, %v5207, 0
      %v5291 = vsel %vm1600, %v5208, 0
      %v5294 = vsel %vm1600, %v5209, 0
      %v5297 = vsel %vm1600, %v5210, 0
      %v5300 = vsel %vm1600, %v5211, 0
      %v5303 = vsel %vm1600, %v5212, 0
      %v5306 = vsel %vm1600, %v5213, 0
      %v5309 = vsel %vm1600, %v5214, 0
      %v5312 = vsel %vm1600, %v5215, 0
      %v5315 = vsel %vm1600, %v5216, 0
      %v5318 = vsel %vm1600, %v5217, 0
      %v5321 = vsel %vm1600, %v5218, 0
      %v5324 = vsel %vm1600, %v5219, 0
      %v5327 = vsel %vm1600, %v5220, 0
      %v5330 = vsel %vm1600, %v5221, 0
      %v5333 = vsel %vm1600, %v5222, 0
      %v5336 = vsel %vm1600, %v5223, 0
      %v5339 = vsel %vm1600, %v5224, 0
      %v5342 = vsel %vm1600, %v5225, 0
      %v5345 = vsel %vm1600, %v5226, 0
      %v5348 = vsel %vm1600, %v5227, 0
      %v5351 = vsel %vm1600, %v5228, 0
      %v5354 = vsel %vm1600, %v5229, 0
      %v5357 = vsel %vm1600, %v5230, 0
      %v5360 = vsel %vm1600, %v5231, 0
      %v5363 = vsel %vm1600, %v5232, 0
      %v5366 = vsel %vm1600, %v5233, 0
      %v5369 = vsel %vm1600, %v5234, 0
      %v5372 = vsel %vm1600, %v5235, 0
      %v5375 = vsel %vm1600, %v5236, 0
      %v5378 = vsel %vm1600, %v5237, 0
      %v5381 = vsel %vm1600, %v5238, 0
      %v5384 = vsel %vm1600, %v5239, 0
      %v5387 = vsel %vm2501, %v5241, 0
      %5389 = vmatprep.subr.mxu0 0.0
      %5390 = vmatpush1.msra.mxu0 0.0
      %5391 = vmatprep.subr.mxu0 0.0
      %5392 = vmatpush1.msra.mxu0 0.0
      %5393 = vmatprep.subr.mxu0 0.0
      %5394 = vmatpush1.msra.mxu0 0.0
      %5395 = vmatprep.subr.mxu0 0.0
      %5396 = vmatpush1.msra.mxu0 0.0
      %5397 = vmatprep.subr.mxu0 0.0
      %5398 = vmatpush1.msra.mxu0 0.0
      %5399 = vmatprep.subr.mxu0 0.0
      %5400 = vmatpush1.msra.mxu0 0.0
      %5401 = vmatprep.subr.mxu0 0.0
      %5402 = vmatpush1.msra.mxu0 0.0
      %5403 = vmatprep.subr.mxu0 0.0
      %5404 = vmatpush1.msra.mxu0 0.0
      %5405 = vmatprep.subr.mxu0 0.0
      %5406 = vmatpush1.msra.mxu0 0.0
      %5407 = vmatprep.subr.mxu0 0.0
      %5408 = vmatpush1.msra.mxu0 0.0
      %5409 = vmatprep.subr.mxu0 0.0
      %5410 = vmatpush1.msra.mxu0 0.0
      %5411 = vmatprep.subr.mxu0 0.0
      %5412 = vmatpush1.msra.mxu0 0.0
      %5413 = vmatprep.subr.mxu0 0.0
      %5414 = vmatpush1.msra.mxu0 0.0
      %5415 = vmatprep.subr.mxu0 0.0
      %5416 = vmatpush1.msra.mxu0 0.0
      %5417 = vmatprep.subr.mxu0 0.0
      %5418 = vmatpush1.msra.mxu0 0.0
      %5419 = vmatprep.subr.mxu0 0.0
      %5420 = vmatpush1.msra.mxu0 %v5387
      %5421 = vmatprep.subr.mxu0 0.0
      %5422 = vmatpush2.msra.mxu0 0.0
      %5423 = vmatprep.subr.mxu0 0.0
      %5424 = vmatpush2.msra.mxu0 0.0
      %5425 = vmatprep.subr.mxu0 0.0
      %5426 = vmatpush2.msra.mxu0 0.0
      %5427 = vmatprep.subr.mxu0 0.0
      %5428 = vmatpush2.msra.mxu0 0.0
      %5429 = vmatprep.subr.mxu0 0.0
      %5430 = vmatpush2.msra.mxu0 0.0
      %5431 = vmatprep.subr.mxu0 0.0
      %5432 = vmatpush2.msra.mxu0 0.0
      %5433 = vmatprep.subr.mxu0 0.0
      %5434 = vmatpush2.msra.mxu0 0.0
      %5435 = vmatprep.subr.mxu0 0.0
      %5436 = vmatpush2.msra.mxu0 0.0
      %5437 = vmatprep.subr.mxu0 0.0
      %5438 = vmatpush2.msra.mxu0 0.0
      %5439 = vmatprep.subr.mxu0 0.0
      %5440 = vmatpush2.msra.mxu0 0.0
      %5441 = vmatprep.subr.mxu0 0.0
      %5442 = vmatpush2.msra.mxu0 0.0
      %5443 = vmatprep.subr.mxu0 0.0
      %5444 = vmatpush2.msra.mxu0 0.0
      %5445 = vmatprep.subr.mxu0 0.0
      %5446 = vmatpush2.msra.mxu0 0.0
      %5447 = vmatprep.subr.mxu0 0.0
      %5448 = vmatpush2.msra.mxu0 0.0
      %5449 = vmatprep.subr.mxu0 0.0
      %5450 = vmatpush2.msra.mxu0 0.0
      %5451 = vmatprep.subr.mxu0 0.0
      %5452 = vmatpush2.msra.mxu0 0.0
      %5453 = vmatprep.mubr.f32.mxu0 0.0
      %5454 = vmatmul.mubr.f32.gmra.mxu0 %v5243
      %v5455 = vpop.f32.mrf.mxu0
      %v5456 = vadd.f32 0.0, %v5455
      %v5457 = vpop.f32.mrf.mxu0
      %5458 = vmatprep.mubr.f32.mxu0 0.0
      %5459 = vmatmul.mubr.f32.gmra.mxu0 %v5246
      %v5460 = vpop.f32.mrf.mxu0
      %v5461 = vadd.f32 0.0, %v5460
      %v5462 = vpop.f32.mrf.mxu0
      %5463 = vmatprep.mubr.f32.mxu0 0.0
      %5464 = vmatmul.mubr.f32.gmra.mxu0 %v5249
      %v5465 = vpop.f32.mrf.mxu0
      %v5466 = vadd.f32 0.0, %v5465
      %v5467 = vpop.f32.mrf.mxu0
      %5468 = vmatprep.mubr.f32.mxu0 0.0
      %5469 = vmatmul.mubr.f32.gmra.mxu0 %v5252
      %v5470 = vpop.f32.mrf.mxu0
      %v5471 = vadd.f32 0.0, %v5470
      %v5472 = vpop.f32.mrf.mxu0
      %5473 = vmatprep.mubr.f32.mxu0 0.0
      %5474 = vmatmul.mubr.f32.gmra.mxu0 %v5255
      %v5475 = vpop.f32.mrf.mxu0
      %v5476 = vadd.f32 0.0, %v5475
      %v5477 = vpop.f32.mrf.mxu0
      %5478 = vmatprep.mubr.f32.mxu0 0.0
      %5479 = vmatmul.mubr.f32.gmra.mxu0 %v5258
      %v5480 = vpop.f32.mrf.mxu0
      %v5481 = vadd.f32 0.0, %v5480
      %v5482 = vpop.f32.mrf.mxu0
      %5483 = vmatprep.mubr.f32.mxu0 0.0
      %5484 = vmatmul.mubr.f32.gmra.mxu0 %v5261
      %v5485 = vpop.f32.mrf.mxu0
      %v5486 = vadd.f32 0.0, %v5485
      %v5487 = vpop.f32.mrf.mxu0
      %5488 = vmatprep.mubr.f32.mxu0 0.0
      %5489 = vmatmul.mubr.f32.gmra.mxu0 %v5264
      %v5490 = vpop.f32.mrf.mxu0
      %v5491 = vadd.f32 0.0, %v5490
      %v5492 = vpop.f32.mrf.mxu0
      %5493 = vmatprep.mubr.f32.mxu0 0.0
      %5494 = vmatmul.mubr.f32.gmra.mxu0 %v5267
      %v5495 = vpop.f32.mrf.mxu0
      %v5496 = vadd.f32 0.0, %v5495
      %v5497 = vpop.f32.mrf.mxu0
      %5498 = vmatprep.mubr.f32.mxu0 0.0
      %5499 = vmatmul.mubr.f32.gmra.mxu0 %v5270
      %v5500 = vpop.f32.mrf.mxu0
      %v5501 = vadd.f32 0.0, %v5500
      %v5502 = vpop.f32.mrf.mxu0
      %5503 = vmatprep.mubr.f32.mxu0 0.0
      %5504 = vmatmul.mubr.f32.gmra.mxu0 %v5273
      %v5505 = vpop.f32.mrf.mxu0
      %v5506 = vadd.f32 0.0, %v5505
      %v5507 = vpop.f32.mrf.mxu0
      %5508 = vmatprep.mubr.f32.mxu0 0.0
      %5509 = vmatmul.mubr.f32.gmra.mxu0 %v5276
      %v5510 = vpop.f32.mrf.mxu0
      %v5511 = vadd.f32 0.0, %v5510
      %v5512 = vpop.f32.mrf.mxu0
      %5513 = vmatprep.mubr.f32.mxu0 0.0
      %5514 = vmatmul.mubr.f32.gmra.mxu0 %v5279
      %v5515 = vpop.f32.mrf.mxu0
      %v5516 = vadd.f32 0.0, %v5515
      %v5517 = vpop.f32.mrf.mxu0
      %5518 = vmatprep.mubr.f32.mxu0 0.0
      %5519 = vmatmul.mubr.f32.gmra.mxu0 %v5282
      %v5520 = vpop.f32.mrf.mxu0
      %v5521 = vadd.f32 0.0, %v5520
      %v5522 = vpop.f32.mrf.mxu0
      %5523 = vmatprep.mubr.f32.mxu0 0.0
      %5524 = vmatmul.mubr.f32.gmra.mxu0 %v5285
      %v5525 = vpop.f32.mrf.mxu0
      %v5526 = vadd.f32 0.0, %v5525
      %v5527 = vpop.f32.mrf.mxu0
      %5528 = vmatprep.mubr.f32.mxu0 0.0
      %5529 = vmatmul.mubr.f32.gmra.mxu0 %v5288
      %v5530 = vpop.f32.mrf.mxu0
      %v5531 = vadd.f32 0.0, %v5530
      %v5532 = vpop.f32.mrf.mxu0
      %5533 = vmatprep.mubr.f32.mxu0 0.0
      %5534 = vmatmul.mubr.f32.gmra.mxu0 %v5291
      %v5535 = vpop.f32.mrf.mxu0
      %v5536 = vadd.f32 0.0, %v5535
      %v5537 = vpop.f32.mrf.mxu0
      %5538 = vmatprep.mubr.f32.mxu0 0.0
      %5539 = vmatmul.mubr.f32.gmra.mxu0 %v5294
      %v5540 = vpop.f32.mrf.mxu0
      %v5541 = vadd.f32 0.0, %v5540
      %v5542 = vpop.f32.mrf.mxu0
      %5543 = vmatprep.mubr.f32.mxu0 0.0
      %5544 = vmatmul.mubr.f32.gmra.mxu0 %v5297
      %v5545 = vpop.f32.mrf.mxu0
      %v5546 = vadd.f32 0.0, %v5545
      %v5547 = vpop.f32.mrf.mxu0
      %5548 = vmatprep.mubr.f32.mxu0 0.0
      %5549 = vmatmul.mubr.f32.gmra.mxu0 %v5300
      %v5550 = vpop.f32.mrf.mxu0
      %v5551 = vadd.f32 0.0, %v5550
      %v5552 = vpop.f32.mrf.mxu0
      %5553 = vmatprep.mubr.f32.mxu0 0.0
      %5554 = vmatmul.mubr.f32.gmra.mxu0 %v5303
      %v5555 = vpop.f32.mrf.mxu0
      %v5556 = vadd.f32 0.0, %v5555
      %v5557 = vpop.f32.mrf.mxu0
      %5558 = vmatprep.mubr.f32.mxu0 0.0
      %5559 = vmatmul.mubr.f32.gmra.mxu0 %v5306
      %v5560 = vpop.f32.mrf.mxu0
      %v5561 = vadd.f32 0.0, %v5560
      %v5562 = vpop.f32.mrf.mxu0
      %5563 = vmatprep.mubr.f32.mxu0 0.0
      %5564 = vmatmul.mubr.f32.gmra.mxu0 %v5309
      %v5565 = vpop.f32.mrf.mxu0
      %v5566 = vadd.f32 0.0, %v5565
      %v5567 = vpop.f32.mrf.mxu0
      %5568 = vmatprep.mubr.f32.mxu0 0.0
      %5569 = vmatmul.mubr.f32.gmra.mxu0 %v5312
      %v5570 = vpop.f32.mrf.mxu0
      %v5571 = vadd.f32 0.0, %v5570
      %v5572 = vpop.f32.mrf.mxu0
      %5573 = vmatprep.mubr.f32.mxu0 0.0
      %5574 = vmatmul.mubr.f32.gmra.mxu0 %v5315
      %v5575 = vpop.f32.mrf.mxu0
      %v5576 = vadd.f32 0.0, %v5575
      %v5577 = vpop.f32.mrf.mxu0
      %5578 = vmatprep.mubr.f32.mxu0 0.0
      %5579 = vmatmul.mubr.f32.gmra.mxu0 %v5318
      %v5580 = vpop.f32.mrf.mxu0
      %v5581 = vadd.f32 0.0, %v5580
      %v5582 = vpop.f32.mrf.mxu0
      %5583 = vmatprep.mubr.f32.mxu0 0.0
      %5584 = vmatmul.mubr.f32.gmra.mxu0 %v5321
      %v5585 = vpop.f32.mrf.mxu0
      %v5586 = vadd.f32 0.0, %v5585
      %v5587 = vpop.f32.mrf.mxu0
      %5588 = vmatprep.mubr.f32.mxu0 0.0
      %5589 = vmatmul.mubr.f32.gmra.mxu0 %v5324
      %v5590 = vpop.f32.mrf.mxu0
      %v5591 = vadd.f32 0.0, %v5590
      %v5592 = vpop.f32.mrf.mxu0
      %5593 = vmatprep.mubr.f32.mxu0 0.0
      %5594 = vmatmul.mubr.f32.gmra.mxu0 %v5327
      %v5595 = vpop.f32.mrf.mxu0
      %v5596 = vadd.f32 0.0, %v5595
      %v5597 = vpop.f32.mrf.mxu0
      %5598 = vmatprep.mubr.f32.mxu0 0.0
      %5599 = vmatmul.mubr.f32.gmra.mxu0 %v5330
      %v5600 = vpop.f32.mrf.mxu0
      %v5601 = vadd.f32 0.0, %v5600
      %v5602 = vpop.f32.mrf.mxu0
      %5603 = vmatprep.mubr.f32.mxu0 0.0
      %5604 = vmatmul.mubr.f32.gmra.mxu0 %v5333
      %v5605 = vpop.f32.mrf.mxu0
      %v5606 = vadd.f32 0.0, %v5605
      %v5607 = vpop.f32.mrf.mxu0
      %5608 = vmatprep.mubr.f32.mxu0 0.0
      %5609 = vmatmul.mubr.f32.gmra.mxu0 %v5336
      %v5610 = vpop.f32.mrf.mxu0
      %v5611 = vadd.f32 0.0, %v5610
      %v5612 = vpop.f32.mrf.mxu0
      %5613 = vmatprep.mubr.f32.mxu0 0.0
      %5614 = vmatmul.mubr.f32.gmra.mxu0 %v5339
      %v5615 = vpop.f32.mrf.mxu0
      %v5616 = vadd.f32 0.0, %v5615
      %v5617 = vpop.f32.mrf.mxu0
      %5618 = vmatprep.mubr.f32.mxu0 0.0
      %5619 = vmatmul.mubr.f32.gmra.mxu0 %v5342
      %v5620 = vpop.f32.mrf.mxu0
      %v5621 = vadd.f32 0.0, %v5620
      %v5622 = vpop.f32.mrf.mxu0
      %5623 = vmatprep.mubr.f32.mxu0 0.0
      %5624 = vmatmul.mubr.f32.gmra.mxu0 %v5345
      %v5625 = vpop.f32.mrf.mxu0
      %v5626 = vadd.f32 0.0, %v5625
      %v5627 = vpop.f32.mrf.mxu0
      %5628 = vmatprep.mubr.f32.mxu0 0.0
      %5629 = vmatmul.mubr.f32.gmra.mxu0 %v5348
      %v5630 = vpop.f32.mrf.mxu0
      %v5631 = vadd.f32 0.0, %v5630
      %v5632 = vpop.f32.mrf.mxu0
      %5633 = vmatprep.mubr.f32.mxu0 0.0
      %5634 = vmatmul.mubr.f32.gmra.mxu0 %v5351
      %v5635 = vpop.f32.mrf.mxu0
      %v5636 = vadd.f32 0.0, %v5635
      %v5637 = vpop.f32.mrf.mxu0
      %5638 = vmatprep.mubr.f32.mxu0 0.0
      %5639 = vmatmul.mubr.f32.gmra.mxu0 %v5354
      %v5640 = vpop.f32.mrf.mxu0
      %v5641 = vadd.f32 0.0, %v5640
      %v5642 = vpop.f32.mrf.mxu0
      %5643 = vmatprep.mubr.f32.mxu0 0.0
      %5644 = vmatmul.mubr.f32.gmra.mxu0 %v5357
      %v5645 = vpop.f32.mrf.mxu0
      %v5646 = vadd.f32 0.0, %v5645
      %v5647 = vpop.f32.mrf.mxu0
      %5648 = vmatprep.mubr.f32.mxu0 0.0
      %5649 = vmatmul.mubr.f32.gmra.mxu0 %v5360
      %v5650 = vpop.f32.mrf.mxu0
      %v5651 = vadd.f32 0.0, %v5650
      %v5652 = vpop.f32.mrf.mxu0
      %5653 = vmatprep.mubr.f32.mxu0 0.0
      %5654 = vmatmul.mubr.f32.gmra.mxu0 %v5363
      %v5655 = vpop.f32.mrf.mxu0
      %v5656 = vadd.f32 0.0, %v5655
      %v5657 = vpop.f32.mrf.mxu0
      %5658 = vmatprep.mubr.f32.mxu0 0.0
      %5659 = vmatmul.mubr.f32.gmra.mxu0 %v5366
      %v5660 = vpop.f32.mrf.mxu0
      %v5661 = vadd.f32 0.0, %v5660
      %v5662 = vpop.f32.mrf.mxu0
      %5663 = vmatprep.mubr.f32.mxu0 0.0
      %5664 = vmatmul.mubr.f32.gmra.mxu0 %v5369
      %v5665 = vpop.f32.mrf.mxu0
      %v5666 = vadd.f32 0.0, %v5665
      %v5667 = vpop.f32.mrf.mxu0
      %5668 = vmatprep.mubr.f32.mxu0 0.0
      %5669 = vmatmul.mubr.f32.gmra.mxu0 %v5372
      %v5670 = vpop.f32.mrf.mxu0
      %v5671 = vadd.f32 0.0, %v5670
      %v5672 = vpop.f32.mrf.mxu0
      %5673 = vmatprep.mubr.f32.mxu0 0.0
      %5674 = vmatmul.mubr.f32.gmra.mxu0 %v5375
      %v5675 = vpop.f32.mrf.mxu0
      %v5676 = vadd.f32 0.0, %v5675
      %v5677 = vpop.f32.mrf.mxu0
      %5678 = vmatprep.mubr.f32.mxu0 0.0
      %5679 = vmatmul.mubr.f32.gmra.mxu0 %v5378
      %v5680 = vpop.f32.mrf.mxu0
      %v5681 = vadd.f32 0.0, %v5680
      %v5682 = vpop.f32.mrf.mxu0
      %5683 = vmatprep.mubr.f32.mxu0 0.0
      %5684 = vmatmul.mubr.f32.gmra.mxu0 %v5381
      %v5685 = vpop.f32.mrf.mxu0
      %v5686 = vadd.f32 0.0, %v5685
      %v5687 = vpop.f32.mrf.mxu0
      %5688 = vmatprep.mubr.f32.mxu0 0.0
      %5689 = vmatmul.mubr.f32.gmra.mxu0 %v5384
      %v5690 = vpop.f32.mrf.mxu0
      %v5691 = vadd.f32 0.0, %v5690
      %v5692 = vpop.f32.mrf.mxu0
      %5693 = vdwg.mxu0
      %v5694 = vadd.f32 %v4454, %v5456
      %v5695 = vadd.f32 %v4455, %v5461
      %v5696 = vadd.f32 %v4456, %v5466
      %v5697 = vadd.f32 %v4457, %v5471
      %v5698 = vadd.f32 %v4458, %v5476
      %v5699 = vadd.f32 %v4459, %v5481
      %v5700 = vadd.f32 %v4460, %v5486
      %v5701 = vadd.f32 %v4461, %v5491
      %v5702 = vadd.f32 %v4462, %v5496
      %v5703 = vadd.f32 %v4463, %v5501
      %v5704 = vadd.f32 %v4464, %v5506
      %v5705 = vadd.f32 %v4465, %v5511
      %v5706 = vadd.f32 %v4466, %v5516
      %v5707 = vadd.f32 %v4467, %v5521
      %v5708 = vadd.f32 %v4468, %v5526
      %v5709 = vadd.f32 %v4469, %v5531
      %v5710 = vadd.f32 %v4470, %v5536
      %v5711 = vadd.f32 %v4471, %v5541
      %v5712 = vadd.f32 %v4472, %v5546
      %v5713 = vadd.f32 %v4473, %v5551
      %v5714 = vadd.f32 %v4474, %v5556
      %v5715 = vadd.f32 %v4475, %v5561
      %v5716 = vadd.f32 %v4476, %v5566
      %v5717 = vadd.f32 %v4477, %v5571
      %v5718 = vadd.f32 %v4478, %v5576
      %v5719 = vadd.f32 %v4479, %v5581
      %v5720 = vadd.f32 %v4480, %v5586
      %v5721 = vadd.f32 %v4481, %v5591
      %v5722 = vadd.f32 %v4482, %v5596
      %v5723 = vadd.f32 %v4483, %v5601
      %v5724 = vadd.f32 %v4484, %v5606
      %v5725 = vadd.f32 %v4485, %v5611
      %v5726 = vadd.f32 %v4486, %v5616
      %v5727 = vadd.f32 %v4487, %v5621
      %v5728 = vadd.f32 %v4488, %v5626
      %v5729 = vadd.f32 %v4489, %v5631
      %v5730 = vadd.f32 %v4490, %v5636
      %v5731 = vadd.f32 %v4491, %v5641
      %v5732 = vadd.f32 %v4492, %v5646
      %v5733 = vadd.f32 %v4493, %v5651
      %v5734 = vadd.f32 %v4494, %v5656
      %v5735 = vadd.f32 %v4495, %v5661
      %v5736 = vadd.f32 %v4496, %v5666
      %v5737 = vadd.f32 %v4497, %v5671
      %v5738 = vadd.f32 %v4498, %v5676
      %v5739 = vadd.f32 %v4499, %v5681
      %v5740 = vadd.f32 %v4500, %v5686
      %v5741 = vadd.f32 %v4501, %v5691
      %v5742 = vld [vmem:[%s4] sm:$0x1]
      %v5744 = vlaneseq
      %v5745 = vshrl.u32 %v5744, 7
      %v5746 = vsub.s32 0, %v5745
      %v5747 = vrot.slane %v5742, %v5746
      %v5749 = vadd.f32 %v5694, %v5747
      %v5750 = vadd.f32 %v5695, %v5747
      %v5751 = vadd.f32 %v5696, %v5747
      %v5752 = vadd.f32 %v5697, %v5747
      %v5753 = vadd.f32 %v5698, %v5747
      %v5754 = vadd.f32 %v5699, %v5747
      %v5755 = vadd.f32 %v5700, %v5747
      %v5756 = vadd.f32 %v5701, %v5747
      %v5757 = vadd.f32 %v5702, %v5747
      %v5758 = vadd.f32 %v5703, %v5747
      %v5759 = vadd.f32 %v5704, %v5747
      %v5760 = vadd.f32 %v5705, %v5747
      %v5761 = vadd.f32 %v5706, %v5747
      %v5762 = vadd.f32 %v5707, %v5747
      %v5763 = vadd.f32 %v5708, %v5747
      %v5764 = vadd.f32 %v5709, %v5747
      %v5765 = vadd.f32 %v5710, %v5747
      %v5766 = vadd.f32 %v5711, %v5747
      %v5767 = vadd.f32 %v5712, %v5747
      %v5768 = vadd.f32 %v5713, %v5747
      %v5769 = vadd.f32 %v5714, %v5747
      %v5770 = vadd.f32 %v5715, %v5747
      %v5771 = vadd.f32 %v5716, %v5747
      %v5772 = vadd.f32 %v5717, %v5747
      %v5773 = vadd.f32 %v5718, %v5747
      %v5774 = vadd.f32 %v5719, %v5747
      %v5775 = vadd.f32 %v5720, %v5747
      %v5776 = vadd.f32 %v5721, %v5747
      %v5777 = vadd.f32 %v5722, %v5747
      %v5778 = vadd.f32 %v5723, %v5747
      %v5779 = vadd.f32 %v5724, %v5747
      %v5780 = vadd.f32 %v5725, %v5747
      %v5781 = vadd.f32 %v5726, %v5747
      %v5782 = vadd.f32 %v5727, %v5747
      %v5783 = vadd.f32 %v5728, %v5747
      %v5784 = vadd.f32 %v5729, %v5747
      %v5785 = vadd.f32 %v5730, %v5747
      %v5786 = vadd.f32 %v5731, %v5747
      %v5787 = vadd.f32 %v5732, %v5747
      %v5788 = vadd.f32 %v5733, %v5747
      %v5789 = vadd.f32 %v5734, %v5747
      %v5790 = vadd.f32 %v5735, %v5747
      %v5791 = vadd.f32 %v5736, %v5747
      %v5792 = vadd.f32 %v5737, %v5747
      %v5793 = vadd.f32 %v5738, %v5747
      %v5794 = vadd.f32 %v5739, %v5747
      %v5795 = vadd.f32 %v5740, %v5747
      %v5796 = vadd.f32 %v5741, %v5747
      %vm5797 = vcmask 64512
      %5798 = vst.msk [vmem:[%s224] sm:$0xff] %vm5797, %v5749
      %5799 = vst.msk [vmem:[%s224 + $0x8] sm:$0xff] %vm5797, %v5750
      %5800 = vst.msk [vmem:[%s224 + $0x10] sm:$0xff] %vm5797, %v5751
      %5801 = vst.msk [vmem:[%s224 + $0x18] sm:$0xff] %vm5797, %v5752
      %5802 = vst.msk [vmem:[%s224 + $0x20] sm:$0xff] %vm5797, %v5753
      %5803 = vst.msk [vmem:[%s224 + $0x28] sm:$0xff] %vm5797, %v5754
      %5804 = vst.msk [vmem:[%s224 + $0x30] sm:$0xff] %vm5797, %v5755
      %5805 = vst.msk [vmem:[%s224 + $0x38] sm:$0xff] %vm5797, %v5756
      %5806 = vst.msk [vmem:[%s224 + $0x40] sm:$0xff] %vm5797, %v5757
      %5807 = vst.msk [vmem:[%s224 + $0x48] sm:$0xff] %vm5797, %v5758
      %5808 = vst.msk [vmem:[%s224 + $0x50] sm:$0xff] %vm5797, %v5759
      %5809 = vst.msk [vmem:[%s224 + $0x58] sm:$0xff] %vm5797, %v5760
      %5810 = vst.msk [vmem:[%s224 + $0x60] sm:$0xff] %vm5797, %v5761
      %5811 = vst.msk [vmem:[%s224 + $0x68] sm:$0xff] %vm5797, %v5762
      %5812 = vst.msk [vmem:[%s224 + $0x70] sm:$0xff] %vm5797, %v5763
      %5813 = vst.msk [vmem:[%s224 + $0x78] sm:$0xff] %vm5797, %v5764
      %5814 = vst.msk [vmem:[%s224 + $0x80] sm:$0xff] %vm5797, %v5765
      %5815 = vst.msk [vmem:[%s224 + $0x88] sm:$0xff] %vm5797, %v5766
      %5816 = vst.msk [vmem:[%s224 + $0x90] sm:$0xff] %vm5797, %v5767
      %5817 = vst.msk [vmem:[%s224 + $0x98] sm:$0xff] %vm5797, %v5768
      %5818 = vst.msk [vmem:[%s224 + $0xa0] sm:$0xff] %vm5797, %v5769
      %5819 = vst.msk [vmem:[%s224 + $0xa8] sm:$0xff] %vm5797, %v5770
      %5820 = vst.msk [vmem:[%s224 + $0xb0] sm:$0xff] %vm5797, %v5771
      %5821 = vst.msk [vmem:[%s224 + $0xb8] sm:$0xff] %vm5797, %v5772
      %5822 = vst.msk [vmem:[%s224 + $0xc0] sm:$0xff] %vm5797, %v5773
      %5823 = vst.msk [vmem:[%s224 + $0xc8] sm:$0xff] %vm5797, %v5774
      %5824 = vst.msk [vmem:[%s224 + $0xd0] sm:$0xff] %vm5797, %v5775
      %5825 = vst.msk [vmem:[%s224 + $0xd8] sm:$0xff] %vm5797, %v5776
      %5826 = vst.msk [vmem:[%s224 + $0xe0] sm:$0xff] %vm5797, %v5777
      %5827 = vst.msk [vmem:[%s224 + $0xe8] sm:$0xff] %vm5797, %v5778
      %5828 = vst.msk [vmem:[%s224 + $0xf0] sm:$0xff] %vm5797, %v5779
      %5829 = vst.msk [vmem:[%s224 + $0xf8] sm:$0xff] %vm5797, %v5780
      %5830 = vst.msk [vmem:[%s224 + $0x100] sm:$0xff] %vm5797, %v5781
      %5831 = vst.msk [vmem:[%s224 + $0x108] sm:$0xff] %vm5797, %v5782
      %5832 = vst.msk [vmem:[%s224 + $0x110] sm:$0xff] %vm5797, %v5783
      %5833 = vst.msk [vmem:[%s224 + $0x118] sm:$0xff] %vm5797, %v5784
      %5834 = vst.msk [vmem:[%s224 + $0x120] sm:$0xff] %vm5797, %v5785
      %5835 = vst.msk [vmem:[%s224 + $0x128] sm:$0xff] %vm5797, %v5786
      %5836 = vst.msk [vmem:[%s224 + $0x130] sm:$0xff] %vm5797, %v5787
      %5837 = vst.msk [vmem:[%s224 + $0x138] sm:$0xff] %vm5797, %v5788
      %5838 = vst.msk [vmem:[%s224 + $0x140] sm:$0xff] %vm5797, %v5789
      %5839 = vst.msk [vmem:[%s224 + $0x148] sm:$0xff] %vm5797, %v5790
      %5840 = vst.msk [vmem:[%s224 + $0x150] sm:$0xff] %vm5797, %v5791
      %5841 = vst.msk [vmem:[%s224 + $0x158] sm:$0xff] %vm5797, %v5792
      %5842 = vst.msk [vmem:[%s224 + $0x160] sm:$0xff] %vm5797, %v5793
      %5843 = vst.msk [vmem:[%s224 + $0x168] sm:$0xff] %vm5797, %v5794
      %5844 = vst.msk [vmem:[%s224 + $0x170] sm:$0xff] %vm5797, %v5795
      %5845 = vst.msk [vmem:[%s224 + $0x178] sm:$0xff] %vm5797, %v5796
      %p5846 = scmp.lt.s32.totalorder %s16, 1
      %s5847 = scalar_select %p5846, %s16, 1
      %s5848 = smul.addr %s5847, 48
      %s5849 = smul.addr %s5848, 8
      %s5850 = scalar_lea.vmem %s5, %s5849
      // Predicated region
      $region41: #{sppf_pallas.1} parent=39 // pred_check
        %p5851 = pneg %p144
      $region42: #{sppf_pallas.1} parent=39 // pred_check_branch
        %5853 = sbr.rel (%p5851) target = $region44
      $region43: #{sppf_pallas.1} parent=39 // pred_region
        _
      $region44: #{sppf_pallas.1} parent=39 // pred_fallthru
        _
    $region40: #{sppf_pallas.1} parent=5 // pred_fallthru
      _
    %p5854 = scmp.le.s32.totalorder 2, %s11
    // Predicated region
    $region45: #{sppf_pallas.1} parent=5 // pred_check
      %p5855 = pneg %p5854
    $region46: #{sppf_pallas.1} parent=5 // pred_check_branch
      %5857 = sbr.rel (%p5855) target = $region48
    $region47: #{sppf_pallas.1} parent=5 // pred_region
      %s5858 = ssub.s32 %s11, 2
      // Predicated region
      $region49: #{sppf_pallas.1} parent=47 // pred_check
        %p5859 = pneg %p150
      $region50: #{sppf_pallas.1} parent=47 // pred_check_branch
        %5861 = sbr.rel (%p5859) target = $region52
      $region51: #{sppf_pallas.1} parent=47 // pred_region
        %p5862 = scmp.lt.s32.totalorder %s17, 1
        %s5863 = scalar_select %p5862, %s17, 1
        %s5864 = smul.addr %s5863, 48
        %s5865 = smul.addr %s5864, 8
        %s5866 = scalar_lea.vmem %s5, %s5865
      $region52: #{sppf_pallas.1} parent=47 // pred_fallthru
        _
    $region48: #{sppf_pallas.1} parent=5 // pred_fallthru
      _
  $region6: #{sppf_pallas.1} parent=0 // loop_footer
    %s15 = sadd.s32 1, %s11
  $region7: #{sppf_pallas.1} parent=0 // loop_footer_branch
    %10 = sbr.rel target = $region3
  $region8: #{sppf_pallas.1} parent=0 // loop_exit
    _

</llo_original>
